<compile_context>
chip_gen: v7x
topology: tpu7x:2x2x1
jax: 0.10.0
libtpu: 0.0.40
codegen_flags: <defaults>
</compile_context>

<pallas_src>
import functools

import numpy as np
import jax
import jax.numpy as jnp
from jax import lax
from jax.experimental import pallas as pl
from jax.experimental.pallas import tpu as pltpu

VOCAB = 64        # nn.Embedding(num_embeddings=64, ...)
EMBED_DIM = 64
NUM_HEADS = 4
NUM_LAYERS = 2
FF_DIM = 256
OUTPUT_DIM = 6
SEQ_LEN = 8       # == input_dim of the PyTorch module
BATCH = 2
LN_EPS = 1e-5     # PyTorch LayerNorm default
OUT_PAD = 128     # lane-dense padded output width


def _layernorm(x, w, b):
    mu = jnp.mean(x, axis=-1, keepdims=True)
    var = jnp.mean(jnp.square(x - mu), axis=-1, keepdims=True)
    return (x - mu) * lax.rsqrt(var + LN_EPS) * w + b


def transformer_kernel(num_layers, num_heads,
                       ids_ref, emb_ref, pos_ref,
                       wq_ref, bq_ref, wk_ref, bk_ref, wv_ref, bv_ref,
                       wo_ref, bo_ref,
                       w1_ref, b1_ref, w2_ref, b2_ref,
                       n1w_ref, n1b_ref, n2w_ref, n2b_ref,
                       fcw_ref, fcb_ref, out_ref):
    bf16 = jnp.bfloat16
    ids = ids_ref[0]                                    # (S, 1) int32, this batch elem
    S = ids.shape[0]
    V, D = emb_ref.shape
    hd = D // num_heads
    scale = 1.0 / float(np.sqrt(hd))

    # Embedding gather as a one-hot matmul (MXU, bf16 in / f32 accum), + positional.
    onehot = (ids == lax.broadcasted_iota(jnp.int32, (S, V), 1)).astype(bf16)
    x = jnp.dot(onehot, emb_ref[...], preferred_element_type=jnp.float32) + pos_ref[...]

    # Per-head lane masks, hoisted out of both loops.  Multiplying by a (1, D) mask
    # replaces the 16-wide (non-lane-aligned) column slices of q / v.
    lane = lax.broadcasted_iota(jnp.int32, (1, D), 1)
    head_mask = [((lane >= h * hd) & (lane < (h + 1) * hd)).astype(bf16)
                 for h in range(num_heads)]

    for l in range(num_layers):                          # static unrolled layer loop
        # ---- self-attention block (post-norm; dropout is identity in eval) ----
        xb = x.astype(bf16)
        q = (jnp.dot(xb, wq_ref[l], preferred_element_type=jnp.float32) + bq_ref[l]) * scale
        k = jnp.dot(xb, wk_ref[l], preferred_element_type=jnp.float32) + bk_ref[l]
        v = jnp.dot(xb, wv_ref[l], preferred_element_type=jnp.float32) + bv_ref[l]
        qb, kb, vb = q.astype(bf16), k.astype(bf16), v.astype(bf16)

        ctx = jnp.zeros((S, D), jnp.float32)             # full-width concat-of-heads context
        for h in range(num_heads):
            m = head_mask[h]
            # (q*mask_h) . k over all D == q_h . k_h  (other heads' lanes are zeroed)
            s = jnp.einsum('qd,kd->qk', qb * m, kb,
                           preferred_element_type=jnp.float32)          # (S, S) f32
            s = s - jnp.max(s, axis=-1, keepdims=True)
            p = jnp.exp(s)
            p = p * pl.reciprocal(jnp.sum(p, axis=-1, keepdims=True), approx=True)
            # p_h @ (v*mask_h) lands head h's context in its own lanes of ctx.
            ctx = ctx + jnp.dot(p.astype(bf16), vb * m,
                                preferred_element_type=jnp.float32)

        # single full-width output projection (was 4 partial (S,16)@(16,64) matmuls)
        attn = jnp.dot(ctx.astype(bf16), wo_ref[l],
                       preferred_element_type=jnp.float32) + bo_ref[l]
        x = _layernorm(x + attn, n1w_ref[l], n1b_ref[l])

        # ---- feed-forward block (Linear -> ReLU -> Linear) ----
        h1 = jnp.dot(x.astype(bf16), w1_ref[l], preferred_element_type=jnp.float32) + b1_ref[l]
        h1 = jnp.maximum(h1, 0.0)
        ff = jnp.dot(h1.astype(bf16), w2_ref[l], preferred_element_type=jnp.float32) + b2_ref[l]
        x = _layernorm(x + ff, n2w_ref[l], n2b_ref[l])

    pooled = jnp.mean(x, axis=0, keepdims=True)          # (1, D)  == torch.mean(x, dim=1)
    # Lane-dense (1, 128) store; padded fc columns are zero.
    out_ref[0] = (jnp.dot(pooled.astype(bf16), fcw_ref[...],
                          preferred_element_type=jnp.float32) + fcb_ref[...])


def integrated_transformer_forward(ids, params,
                                   num_layers=NUM_LAYERS, num_heads=NUM_HEADS):
    B, S = ids.shape
    V, D = params['emb'].shape
    FF = params['l1w'].shape[-1]
    O = params['fcw'].shape[-1]
    OP = OUT_PAD
    L = num_layers

    bf = lambda a: a.astype(jnp.bfloat16)
    # Lane-dense padded fc (zeros in the extra columns -> extra outputs are ignored).
    fcw_p = bf(jnp.zeros((D, OP), jnp.float32).at[:, :O].set(params['fcw']))
    fcb_p = jnp.zeros((1, OP), jnp.float32).at[:, :O].set(params['fcb'])

    ids3 = ids.reshape(B, S, 1).astype(jnp.int32)

    def full(shape):
        return pl.BlockSpec(shape, lambda b, _n=len(shape): (0,) * _n)

    kernel = functools.partial(transformer_kernel, num_layers, num_heads)

    out = pl.pallas_call(
        kernel,
        out_shape=jax.ShapeDtypeStruct((B, 1, OP), jnp.float32),
        grid=(B,),
        in_specs=[
            pl.BlockSpec((1, S, 1), lambda b: (b, 0, 0)),   # token ids per batch elem
            full((V, D)),                                   # embedding table (bf16)
            full((S, D)),                                   # positional embedding (f32)
            full((L, D, D)), full((L, 1, D)),               # Wq, bq
            full((L, D, D)), full((L, 1, D)),               # Wk, bk
            full((L, D, D)), full((L, 1, D)),               # Wv, bv
            full((L, D, D)), full((L, 1, D)),               # out_proj W, b
            full((L, D, FF)), full((L, 1, FF)),             # linear1  W, b
            full((L, FF, D)), full((L, 1, D)),              # linear2  W, b
            full((L, 1, D)), full((L, 1, D)),               # norm1    g, b
            full((L, 1, D)), full((L, 1, D)),               # norm2    g, b
            full((D, OP)), full((1, OP)),                   # fc (lane-padded) W, b
        ],
        out_specs=pl.BlockSpec((1, 1, OP), lambda b: (b, 0, 0)),
        compiler_params=pltpu.CompilerParams(dimension_semantics=("parallel",)),
    )(ids3, bf(params['emb']), params['pos'],
      bf(params['wq']), params['bq'], bf(params['wk']), params['bk'],
      bf(params['wv']), params['bv'], bf(params['wo']), params['bo'],
      bf(params['l1w']), params['l1b'], bf(params['l2w']), params['l2b'],
      params['n1w'], params['n1b'], params['n2w'], params['n2b'],
      fcw_p, fcb_p)
    return out.reshape(B, OP)[:, :O]


def init_params(key):
    L, D, FF, O, V, S = NUM_LAYERS, EMBED_DIM, FF_DIM, OUTPUT_DIM, VOCAB, SEQ_LEN
    ks = jax.random.split(key, 20)

    def nrm(k, shape, s=0.05):
        return (s * jax.random.normal(k, shape)).astype(jnp.float32)

    return dict(
        emb=nrm(ks[0], (V, D), 1.0),            # nn.Embedding weight ~ N(0, 1)
        pos=nrm(ks[1], (S, D), 1.0),            # pos_embedding ~ randn
        # in_proj pre-split into q/k/v, each pre-transposed to (in, out)
        wq=nrm(ks[2], (L, D, D)), bq=nrm(ks[3], (L, 1, D)),
        wk=nrm(ks[4], (L, D, D)), bk=nrm(ks[5], (L, 1, D)),
        wv=nrm(ks[6], (L, D, D)), bv=nrm(ks[7], (L, 1, D)),
        wo=nrm(ks[8], (L, D, D)), bo=nrm(ks[9], (L, 1, D)),
        l1w=nrm(ks[10], (L, D, FF)), l1b=nrm(ks[11], (L, 1, FF)),
        l2w=nrm(ks[12], (L, FF, D)), l2b=nrm(ks[13], (L, 1, D)),
        n1w=(1.0 + nrm(ks[14], (L, 1, D))).astype(jnp.float32),
        n1b=nrm(ks[15], (L, 1, D)),
        n2w=(1.0 + nrm(ks[16], (L, 1, D))).astype(jnp.float32),
        n2b=nrm(ks[17], (L, 1, D)),
        fcw=nrm(ks[18], (D, O)),
        fcb=nrm(ks[19], (1, O)),
    )


def reference_forward(ids, p):
    """Pure-JAX f32 reference mirroring nn.TransformerEncoder (post-norm, eval)."""
    D, H = EMBED_DIM, NUM_HEADS
    hd = D // H
    x = p['emb'][ids] + p['pos'][None]                       # (B, S, D)
    B, S, _ = x.shape
    for l in range(NUM_LAYERS):
        q = jnp.einsum('bsd,de->bse', x, p['wq'][l]) + p['bq'][l]
        k = jnp.einsum('bsd,de->bse', x, p['wk'][l]) + p['bk'][l]
        v = jnp.einsum('bsd,de->bse', x, p['wv'][l]) + p['bv'][l]
        qh = q.reshape(B, S, H, hd)
        kh = k.reshape(B, S, H, hd)
        vh = v.reshape(B, S, H, hd)
        s = jnp.einsum('bqhd,bkhd->bhqk', qh, kh) / np.sqrt(hd)
        a = jax.nn.softmax(s, axis=-1)
        ctx = jnp.einsum('bhqk,bkhd->bqhd', a, vh).reshape(B, S, D)
        attn = jnp.einsum('bsd,de->bse', ctx, p['wo'][l]) + p['bo'][l]
        x = _layernorm(x + attn, p['n1w'][l], p['n1b'][l])
        h1 = jax.nn.relu(jnp.einsum('bsd,df->bsf', x, p['l1w'][l]) + p['l1b'][l])
        ff = jnp.einsum('bsf,fd->bsd', h1, p['l2w'][l]) + p['l2b'][l]
        x = _layernorm(x + ff, p['n2w'][l], p['n2b'][l])
    pooled = jnp.mean(x, axis=1)
    return pooled @ p['fcw'] + p['fcb']


if __name__ == "__main__":
    key = jax.random.PRNGKey(0)
    pkey, ikey = jax.random.split(key)
    params = init_params(pkey)
    ids = jax.random.randint(ikey, (BATCH, SEQ_LEN), 0, VOCAB, dtype=jnp.int32)

    out = integrated_transformer_forward(ids, params)
    out = jax.block_until_ready(out)
    assert out.shape == (BATCH, OUTPUT_DIM)

    with jax.default_matmul_precision("highest"):
        ref = jax.block_until_ready(reference_forward(ids, params))
    np.testing.assert_allclose(np.asarray(out), np.asarray(ref), rtol=3e-2, atol=3e-2)

    print("KERNEL_OK")
</pallas_src>

<mosaic_0001>
module attributes {stable_mosaic.version = 11 : i64} {
  func.func @transformer_kernel(%arg0: i32, %arg1: memref<1x8x1xi32, #tpu.memory_space<vmem>>, %arg2: memref<64x64xbf16, #tpu.memory_space<vmem>>, %arg3: memref<8x64xf32, #tpu.memory_space<vmem>>, %arg4: memref<2x64x64xbf16, #tpu.memory_space<vmem>>, %arg5: memref<2x1x64xf32, #tpu.memory_space<vmem>>, %arg6: memref<2x64x64xbf16, #tpu.memory_space<vmem>>, %arg7: memref<2x1x64xf32, #tpu.memory_space<vmem>>, %arg8: memref<2x64x64xbf16, #tpu.memory_space<vmem>>, %arg9: memref<2x1x64xf32, #tpu.memory_space<vmem>>, %arg10: memref<2x64x64xbf16, #tpu.memory_space<vmem>>, %arg11: memref<2x1x64xf32, #tpu.memory_space<vmem>>, %arg12: memref<2x64x256xbf16, #tpu.memory_space<vmem>>, %arg13: memref<2x1x256xf32, #tpu.memory_space<vmem>>, %arg14: memref<2x256x64xbf16, #tpu.memory_space<vmem>>, %arg15: memref<2x1x64xf32, #tpu.memory_space<vmem>>, %arg16: memref<2x1x64xf32, #tpu.memory_space<vmem>>, %arg17: memref<2x1x64xf32, #tpu.memory_space<vmem>>, %arg18: memref<2x1x64xf32, #tpu.memory_space<vmem>>, %arg19: memref<2x1x64xf32, #tpu.memory_space<vmem>>, %arg20: memref<64x128xbf16, #tpu.memory_space<vmem>>, %arg21: memref<1x128xf32, #tpu.memory_space<vmem>>, %arg22: memref<1x1x128xf32, #tpu.memory_space<vmem>>) attributes {dimension_semantics = [#tpu.dimension_semantics<parallel>], iteration_bounds = array<i64: 2>, scalar_prefetch = 0 : i64, scratch_operands = 0 : i64, tpu.core_type = #tpu.core_type<tc>, window_params = [{transform_indices = @transform_0, window_bounds = array<i64: 1, 8, 1>}, {pipeline_mode = #tpu.pipeline_mode<synchronous>, transform_indices = @transform_1, window_bounds = array<i64: 64, 64>}, {pipeline_mode = #tpu.pipeline_mode<synchronous>, transform_indices = @transform_2, window_bounds = array<i64: 8, 64>}, {pipeline_mode = #tpu.pipeline_mode<synchronous>, transform_indices = @transform_3, window_bounds = array<i64: 2, 64, 64>}, {pipeline_mode = #tpu.pipeline_mode<synchronous>, transform_indices = @transform_4, window_bounds = array<i64: 2, 1, 64>}, {pipeline_mode = #tpu.pipeline_mode<synchronous>, transform_indices = @transform_5, window_bounds = array<i64: 2, 64, 64>}, {pipeline_mode = #tpu.pipeline_mode<synchronous>, transform_indices = @transform_6, window_bounds = array<i64: 2, 1, 64>}, {pipeline_mode = #tpu.pipeline_mode<synchronous>, transform_indices = @transform_7, window_bounds = array<i64: 2, 64, 64>}, {pipeline_mode = #tpu.pipeline_mode<synchronous>, transform_indices = @transform_8, window_bounds = array<i64: 2, 1, 64>}, {pipeline_mode = #tpu.pipeline_mode<synchronous>, transform_indices = @transform_9, window_bounds = array<i64: 2, 64, 64>}, {pipeline_mode = #tpu.pipeline_mode<synchronous>, transform_indices = @transform_10, window_bounds = array<i64: 2, 1, 64>}, {pipeline_mode = #tpu.pipeline_mode<synchronous>, transform_indices = @transform_11, window_bounds = array<i64: 2, 64, 256>}, {pipeline_mode = #tpu.pipeline_mode<synchronous>, transform_indices = @transform_12, window_bounds = array<i64: 2, 1, 256>}, {pipeline_mode = #tpu.pipeline_mode<synchronous>, transform_indices = @transform_13, window_bounds = array<i64: 2, 256, 64>}, {pipeline_mode = #tpu.pipeline_mode<synchronous>, transform_indices = @transform_14, window_bounds = array<i64: 2, 1, 64>}, {pipeline_mode = #tpu.pipeline_mode<synchronous>, transform_indices = @transform_15, window_bounds = array<i64: 2, 1, 64>}, {pipeline_mode = #tpu.pipeline_mode<synchronous>, transform_indices = @transform_16, window_bounds = array<i64: 2, 1, 64>}, {pipeline_mode = #tpu.pipeline_mode<synchronous>, transform_indices = @transform_17, window_bounds = array<i64: 2, 1, 64>}, {pipeline_mode = #tpu.pipeline_mode<synchronous>, transform_indices = @transform_18, window_bounds = array<i64: 2, 1, 64>}, {pipeline_mode = #tpu.pipeline_mode<synchronous>, transform_indices = @transform_19, window_bounds = array<i64: 64, 128>}, {pipeline_mode = #tpu.pipeline_mode<synchronous>, transform_indices = @transform_20, window_bounds = array<i64: 1, 128>}, {transform_indices = @transform_21, window_bounds = array<i64: 1, 1, 128>}]} {
    %c0 = arith.constant 0 : index
    %c0_0 = arith.constant 0 : index
    %c0_1 = arith.constant 0 : index
    %0 = vector.load %arg1[%c0, %c0_0, %c0_1] : memref<1x8x1xi32, #tpu.memory_space<vmem>>, vector<1x8x1xi32>
    %1 = vector.shape_cast %0 : vector<1x8x1xi32> to vector<8x1xi32>
    %2 = tpu.iota {dimensions = array<i32: 1>} : vector<8x64xi32>
    %3 = vector.broadcast %1 : vector<8x1xi32> to vector<8x64xi32>
    %4 = arith.cmpi eq, %3, %2 : vector<8x64xi32>
    %5 = arith.extui %4 : vector<8x64xi1> to vector<8x64xi32>
    %6 = arith.sitofp %5 : vector<8x64xi32> to vector<8x64xf32>
    %7 = arith.truncf %6 : vector<8x64xf32> to vector<8x64xbf16>
    %c0_2 = arith.constant 0 : index
    %c0_3 = arith.constant 0 : index
    %8 = vector.load %arg2[%c0_2, %c0_3] : memref<64x64xbf16, #tpu.memory_space<vmem>>, vector<64x64xbf16>
    %cst = arith.constant dense<0.000000e+00> : vector<8x64xf32>
    %9 = tpu.matmul %7, %8, %cst {dimension_numbers = #tpu.dot_dimension_numbers<[1], [0], [0], [1], [0, 0, 1, 1], [], []>} : vector<8x64xbf16>, vector<64x64xbf16>, vector<8x64xf32> -> vector<8x64xf32>
    %c0_4 = arith.constant 0 : index
    %c0_5 = arith.constant 0 : index
    %10 = vector.load %arg3[%c0_4, %c0_5] : memref<8x64xf32, #tpu.memory_space<vmem>>, vector<8x64xf32>
    %11 = arith.addf %9, %10 : vector<8x64xf32>
    %12 = tpu.iota {dimensions = array<i32: 1>} : vector<1x64xi32>
    %c0_i32 = arith.constant 0 : i32
    %13 = vector.broadcast %c0_i32 : i32 to vector<1x64xi32>
    %14 = arith.cmpi sge, %12, %13 : vector<1x64xi32>
    %c16_i32 = arith.constant 16 : i32
    %15 = vector.broadcast %c16_i32 : i32 to vector<1x64xi32>
    %16 = arith.cmpi slt, %12, %15 : vector<1x64xi32>
    %17 = arith.andi %14, %16 : vector<1x64xi1>
    %18 = arith.extui %17 : vector<1x64xi1> to vector<1x64xi32>
    %19 = arith.sitofp %18 : vector<1x64xi32> to vector<1x64xf32>
    %20 = arith.truncf %19 : vector<1x64xf32> to vector<1x64xbf16>
    %c16_i32_6 = arith.constant 16 : i32
    %21 = vector.broadcast %c16_i32_6 : i32 to vector<1x64xi32>
    %22 = arith.cmpi sge, %12, %21 : vector<1x64xi32>
    %c32_i32 = arith.constant 32 : i32
    %23 = vector.broadcast %c32_i32 : i32 to vector<1x64xi32>
    %24 = arith.cmpi slt, %12, %23 : vector<1x64xi32>
    %25 = arith.andi %22, %24 : vector<1x64xi1>
    %26 = arith.extui %25 : vector<1x64xi1> to vector<1x64xi32>
    %27 = arith.sitofp %26 : vector<1x64xi32> to vector<1x64xf32>
    %28 = arith.truncf %27 : vector<1x64xf32> to vector<1x64xbf16>
    %c32_i32_7 = arith.constant 32 : i32
    %29 = vector.broadcast %c32_i32_7 : i32 to vector<1x64xi32>
    %30 = arith.cmpi sge, %12, %29 : vector<1x64xi32>
    %c48_i32 = arith.constant 48 : i32
    %31 = vector.broadcast %c48_i32 : i32 to vector<1x64xi32>
    %32 = arith.cmpi slt, %12, %31 : vector<1x64xi32>
    %33 = arith.andi %30, %32 : vector<1x64xi1>
    %34 = arith.extui %33 : vector<1x64xi1> to vector<1x64xi32>
    %35 = arith.sitofp %34 : vector<1x64xi32> to vector<1x64xf32>
    %36 = arith.truncf %35 : vector<1x64xf32> to vector<1x64xbf16>
    %c48_i32_8 = arith.constant 48 : i32
    %37 = vector.broadcast %c48_i32_8 : i32 to vector<1x64xi32>
    %38 = arith.cmpi sge, %12, %37 : vector<1x64xi32>
    %c64_i32 = arith.constant 64 : i32
    %39 = vector.broadcast %c64_i32 : i32 to vector<1x64xi32>
    %40 = arith.cmpi slt, %12, %39 : vector<1x64xi32>
    %41 = arith.andi %38, %40 : vector<1x64xi1>
    %42 = arith.extui %41 : vector<1x64xi1> to vector<1x64xi32>
    %43 = arith.sitofp %42 : vector<1x64xi32> to vector<1x64xf32>
    %44 = arith.truncf %43 : vector<1x64xf32> to vector<1x64xbf16>
    %45 = arith.truncf %11 : vector<8x64xf32> to vector<8x64xbf16>
    %c0_9 = arith.constant 0 : index
    %c0_10 = arith.constant 0 : index
    %c0_11 = arith.constant 0 : index
    %46 = vector.load %arg4[%c0_9, %c0_10, %c0_11] : memref<2x64x64xbf16, #tpu.memory_space<vmem>>, vector<1x64x64xbf16>
    %47 = vector.shape_cast %46 : vector<1x64x64xbf16> to vector<64x64xbf16>
    %cst_12 = arith.constant dense<0.000000e+00> : vector<8x64xf32>
    %48 = tpu.matmul %45, %47, %cst_12 {dimension_numbers = #tpu.dot_dimension_numbers<[1], [0], [0], [1], [0, 0, 1, 1], [], []>} : vector<8x64xbf16>, vector<64x64xbf16>, vector<8x64xf32> -> vector<8x64xf32>
    %c0_13 = arith.constant 0 : index
    %c0_14 = arith.constant 0 : index
    %c0_15 = arith.constant 0 : index
    %49 = vector.load %arg5[%c0_13, %c0_14, %c0_15] : memref<2x1x64xf32, #tpu.memory_space<vmem>>, vector<1x1x64xf32>
    %50 = vector.shape_cast %49 : vector<1x1x64xf32> to vector<1x64xf32>
    %51 = vector.broadcast %50 : vector<1x64xf32> to vector<8x64xf32>
    %52 = arith.addf %48, %51 : vector<8x64xf32>
    %cst_16 = arith.constant 2.500000e-01 : f32
    %53 = vector.broadcast %cst_16 : f32 to vector<8x64xf32>
    %54 = arith.mulf %52, %53 : vector<8x64xf32>
    %c0_17 = arith.constant 0 : index
    %c0_18 = arith.constant 0 : index
    %c0_19 = arith.constant 0 : index
    %55 = vector.load %arg6[%c0_17, %c0_18, %c0_19] : memref<2x64x64xbf16, #tpu.memory_space<vmem>>, vector<1x64x64xbf16>
    %56 = vector.shape_cast %55 : vector<1x64x64xbf16> to vector<64x64xbf16>
    %cst_20 = arith.constant dense<0.000000e+00> : vector<8x64xf32>
    %57 = tpu.matmul %45, %56, %cst_20 {dimension_numbers = #tpu.dot_dimension_numbers<[1], [0], [0], [1], [0, 0, 1, 1], [], []>} : vector<8x64xbf16>, vector<64x64xbf16>, vector<8x64xf32> -> vector<8x64xf32>
    %c0_21 = arith.constant 0 : index
    %c0_22 = arith.constant 0 : index
    %c0_23 = arith.constant 0 : index
    %58 = vector.load %arg7[%c0_21, %c0_22, %c0_23] : memref<2x1x64xf32, #tpu.memory_space<vmem>>, vector<1x1x64xf32>
    %59 = vector.shape_cast %58 : vector<1x1x64xf32> to vector<1x64xf32>
    %60 = vector.broadcast %59 : vector<1x64xf32> to vector<8x64xf32>
    %61 = arith.addf %57, %60 : vector<8x64xf32>
    %c0_24 = arith.constant 0 : index
    %c0_25 = arith.constant 0 : index
    %c0_26 = arith.constant 0 : index
    %62 = vector.load %arg8[%c0_24, %c0_25, %c0_26] : memref<2x64x64xbf16, #tpu.memory_space<vmem>>, vector<1x64x64xbf16>
    %63 = vector.shape_cast %62 : vector<1x64x64xbf16> to vector<64x64xbf16>
    %cst_27 = arith.constant dense<0.000000e+00> : vector<8x64xf32>
    %64 = tpu.matmul %45, %63, %cst_27 {dimension_numbers = #tpu.dot_dimension_numbers<[1], [0], [0], [1], [0, 0, 1, 1], [], []>} : vector<8x64xbf16>, vector<64x64xbf16>, vector<8x64xf32> -> vector<8x64xf32>
    %c0_28 = arith.constant 0 : index
    %c0_29 = arith.constant 0 : index
    %c0_30 = arith.constant 0 : index
    %65 = vector.load %arg9[%c0_28, %c0_29, %c0_30] : memref<2x1x64xf32, #tpu.memory_space<vmem>>, vector<1x1x64xf32>
    %66 = vector.shape_cast %65 : vector<1x1x64xf32> to vector<1x64xf32>
    %67 = vector.broadcast %66 : vector<1x64xf32> to vector<8x64xf32>
    %68 = arith.addf %64, %67 : vector<8x64xf32>
    %69 = arith.truncf %54 : vector<8x64xf32> to vector<8x64xbf16>
    %70 = arith.truncf %61 : vector<8x64xf32> to vector<8x64xbf16>
    %71 = arith.truncf %68 : vector<8x64xf32> to vector<8x64xbf16>
    %cst_31 = arith.constant 0.000000e+00 : f32
    %72 = vector.broadcast %cst_31 : f32 to vector<8x64xf32>
    %73 = vector.broadcast %20 : vector<1x64xbf16> to vector<8x64xbf16>
    %74 = arith.mulf %69, %73 : vector<8x64xbf16>
    "tpu.trace_start"() <{level = 10 : i32, message = "qd,kd->qk"}> : () -> ()
    %cst_32 = arith.constant dense<0.000000e+00> : vector<8x8xf32>
    %75 = tpu.matmul %74, %70, %cst_32 {dimension_numbers = #tpu.dot_dimension_numbers<[1], [1], [0], [0], [0, 0, 1, 0], [], []>} : vector<8x64xbf16>, vector<8x64xbf16>, vector<8x8xf32> -> vector<8x8xf32>
    "tpu.trace_stop"() : () -> ()
    %cst_33 = arith.constant dense<0xFF800000> : vector<8xf32>
    %76 = vector.multi_reduction <maximumf>, %75, %cst_33 [1] : vector<8x8xf32> to vector<8xf32>
    %77 = vector.shape_cast %76 : vector<8xf32> to vector<8x1xf32>
    %78 = vector.broadcast %77 : vector<8x1xf32> to vector<8x8xf32>
    %79 = arith.subf %75, %78 : vector<8x8xf32>
    %80 = math.exp %79 : vector<8x8xf32>
    %cst_34 = arith.constant dense<0.000000e+00> : vector<8xf32>
    %81 = vector.multi_reduction <add>, %80, %cst_34 [1] : vector<8x8xf32> to vector<8xf32>
    %82 = vector.shape_cast %81 : vector<8xf32> to vector<8x1xf32>
    %83 = tpu.reciprocal %82 {approx = true} : vector<8x1xf32> -> vector<8x1xf32>
    %84 = vector.broadcast %83 : vector<8x1xf32> to vector<8x8xf32>
    %85 = arith.mulf %80, %84 : vector<8x8xf32>
    %86 = arith.truncf %85 : vector<8x8xf32> to vector<8x8xbf16>
    %87 = vector.broadcast %20 : vector<1x64xbf16> to vector<8x64xbf16>
    %88 = arith.mulf %71, %87 : vector<8x64xbf16>
    %cst_35 = arith.constant dense<0.000000e+00> : vector<8x64xf32>
    %89 = tpu.matmul %86, %88, %cst_35 {dimension_numbers = #tpu.dot_dimension_numbers<[1], [0], [0], [1], [0, 0, 1, 1], [], []>} : vector<8x8xbf16>, vector<8x64xbf16>, vector<8x64xf32> -> vector<8x64xf32>
    %90 = arith.addf %72, %89 : vector<8x64xf32>
    %91 = vector.broadcast %28 : vector<1x64xbf16> to vector<8x64xbf16>
    %92 = arith.mulf %69, %91 : vector<8x64xbf16>
    "tpu.trace_start"() <{level = 10 : i32, message = "qd,kd->qk"}> : () -> ()
    %cst_36 = arith.constant dense<0.000000e+00> : vector<8x8xf32>
    %93 = tpu.matmul %92, %70, %cst_36 {dimension_numbers = #tpu.dot_dimension_numbers<[1], [1], [0], [0], [0, 0, 1, 0], [], []>} : vector<8x64xbf16>, vector<8x64xbf16>, vector<8x8xf32> -> vector<8x8xf32>
    "tpu.trace_stop"() : () -> ()
    %cst_37 = arith.constant dense<0xFF800000> : vector<8xf32>
    %94 = vector.multi_reduction <maximumf>, %93, %cst_37 [1] : vector<8x8xf32> to vector<8xf32>
    %95 = vector.shape_cast %94 : vector<8xf32> to vector<8x1xf32>
    %96 = vector.broadcast %95 : vector<8x1xf32> to vector<8x8xf32>
    %97 = arith.subf %93, %96 : vector<8x8xf32>
    %98 = math.exp %97 : vector<8x8xf32>
    %cst_38 = arith.constant dense<0.000000e+00> : vector<8xf32>
    %99 = vector.multi_reduction <add>, %98, %cst_38 [1] : vector<8x8xf32> to vector<8xf32>
    %100 = vector.shape_cast %99 : vector<8xf32> to vector<8x1xf32>
    %101 = tpu.reciprocal %100 {approx = true} : vector<8x1xf32> -> vector<8x1xf32>
    %102 = vector.broadcast %101 : vector<8x1xf32> to vector<8x8xf32>
    %103 = arith.mulf %98, %102 : vector<8x8xf32>
    %104 = arith.truncf %103 : vector<8x8xf32> to vector<8x8xbf16>
    %105 = vector.broadcast %28 : vector<1x64xbf16> to vector<8x64xbf16>
    %106 = arith.mulf %71, %105 : vector<8x64xbf16>
    %cst_39 = arith.constant dense<0.000000e+00> : vector<8x64xf32>
    %107 = tpu.matmul %104, %106, %cst_39 {dimension_numbers = #tpu.dot_dimension_numbers<[1], [0], [0], [1], [0, 0, 1, 1], [], []>} : vector<8x8xbf16>, vector<8x64xbf16>, vector<8x64xf32> -> vector<8x64xf32>
    %108 = arith.addf %90, %107 : vector<8x64xf32>
    %109 = vector.broadcast %36 : vector<1x64xbf16> to vector<8x64xbf16>
    %110 = arith.mulf %69, %109 : vector<8x64xbf16>
    "tpu.trace_start"() <{level = 10 : i32, message = "qd,kd->qk"}> : () -> ()
    %cst_40 = arith.constant dense<0.000000e+00> : vector<8x8xf32>
    %111 = tpu.matmul %110, %70, %cst_40 {dimension_numbers = #tpu.dot_dimension_numbers<[1], [1], [0], [0], [0, 0, 1, 0], [], []>} : vector<8x64xbf16>, vector<8x64xbf16>, vector<8x8xf32> -> vector<8x8xf32>
    "tpu.trace_stop"() : () -> ()
    %cst_41 = arith.constant dense<0xFF800000> : vector<8xf32>
    %112 = vector.multi_reduction <maximumf>, %111, %cst_41 [1] : vector<8x8xf32> to vector<8xf32>
    %113 = vector.shape_cast %112 : vector<8xf32> to vector<8x1xf32>
    %114 = vector.broadcast %113 : vector<8x1xf32> to vector<8x8xf32>
    %115 = arith.subf %111, %114 : vector<8x8xf32>
    %116 = math.exp %115 : vector<8x8xf32>
    %cst_42 = arith.constant dense<0.000000e+00> : vector<8xf32>
    %117 = vector.multi_reduction <add>, %116, %cst_42 [1] : vector<8x8xf32> to vector<8xf32>
    %118 = vector.shape_cast %117 : vector<8xf32> to vector<8x1xf32>
    %119 = tpu.reciprocal %118 {approx = true} : vector<8x1xf32> -> vector<8x1xf32>
    %120 = vector.broadcast %119 : vector<8x1xf32> to vector<8x8xf32>
    %121 = arith.mulf %116, %120 : vector<8x8xf32>
    %122 = arith.truncf %121 : vector<8x8xf32> to vector<8x8xbf16>
    %123 = vector.broadcast %36 : vector<1x64xbf16> to vector<8x64xbf16>
    %124 = arith.mulf %71, %123 : vector<8x64xbf16>
    %cst_43 = arith.constant dense<0.000000e+00> : vector<8x64xf32>
    %125 = tpu.matmul %122, %124, %cst_43 {dimension_numbers = #tpu.dot_dimension_numbers<[1], [0], [0], [1], [0, 0, 1, 1], [], []>} : vector<8x8xbf16>, vector<8x64xbf16>, vector<8x64xf32> -> vector<8x64xf32>
    %126 = arith.addf %108, %125 : vector<8x64xf32>
    %127 = vector.broadcast %44 : vector<1x64xbf16> to vector<8x64xbf16>
    %128 = arith.mulf %69, %127 : vector<8x64xbf16>
    "tpu.trace_start"() <{level = 10 : i32, message = "qd,kd->qk"}> : () -> ()
    %cst_44 = arith.constant dense<0.000000e+00> : vector<8x8xf32>
    %129 = tpu.matmul %128, %70, %cst_44 {dimension_numbers = #tpu.dot_dimension_numbers<[1], [1], [0], [0], [0, 0, 1, 0], [], []>} : vector<8x64xbf16>, vector<8x64xbf16>, vector<8x8xf32> -> vector<8x8xf32>
    "tpu.trace_stop"() : () -> ()
    %cst_45 = arith.constant dense<0xFF800000> : vector<8xf32>
    %130 = vector.multi_reduction <maximumf>, %129, %cst_45 [1] : vector<8x8xf32> to vector<8xf32>
    %131 = vector.shape_cast %130 : vector<8xf32> to vector<8x1xf32>
    %132 = vector.broadcast %131 : vector<8x1xf32> to vector<8x8xf32>
    %133 = arith.subf %129, %132 : vector<8x8xf32>
    %134 = math.exp %133 : vector<8x8xf32>
    %cst_46 = arith.constant dense<0.000000e+00> : vector<8xf32>
    %135 = vector.multi_reduction <add>, %134, %cst_46 [1] : vector<8x8xf32> to vector<8xf32>
    %136 = vector.shape_cast %135 : vector<8xf32> to vector<8x1xf32>
    %137 = tpu.reciprocal %136 {approx = true} : vector<8x1xf32> -> vector<8x1xf32>
    %138 = vector.broadcast %137 : vector<8x1xf32> to vector<8x8xf32>
    %139 = arith.mulf %134, %138 : vector<8x8xf32>
    %140 = arith.truncf %139 : vector<8x8xf32> to vector<8x8xbf16>
    %141 = vector.broadcast %44 : vector<1x64xbf16> to vector<8x64xbf16>
    %142 = arith.mulf %71, %141 : vector<8x64xbf16>
    %cst_47 = arith.constant dense<0.000000e+00> : vector<8x64xf32>
    %143 = tpu.matmul %140, %142, %cst_47 {dimension_numbers = #tpu.dot_dimension_numbers<[1], [0], [0], [1], [0, 0, 1, 1], [], []>} : vector<8x8xbf16>, vector<8x64xbf16>, vector<8x64xf32> -> vector<8x64xf32>
    %144 = arith.addf %126, %143 : vector<8x64xf32>
    %145 = arith.truncf %144 : vector<8x64xf32> to vector<8x64xbf16>
    %c0_48 = arith.constant 0 : index
    %c0_49 = arith.constant 0 : index
    %c0_50 = arith.constant 0 : index
    %146 = vector.load %arg10[%c0_48, %c0_49, %c0_50] : memref<2x64x64xbf16, #tpu.memory_space<vmem>>, vector<1x64x64xbf16>
    %147 = vector.shape_cast %146 : vector<1x64x64xbf16> to vector<64x64xbf16>
    %cst_51 = arith.constant dense<0.000000e+00> : vector<8x64xf32>
    %148 = tpu.matmul %145, %147, %cst_51 {dimension_numbers = #tpu.dot_dimension_numbers<[1], [0], [0], [1], [0, 0, 1, 1], [], []>} : vector<8x64xbf16>, vector<64x64xbf16>, vector<8x64xf32> -> vector<8x64xf32>
    %c0_52 = arith.constant 0 : index
    %c0_53 = arith.constant 0 : index
    %c0_54 = arith.constant 0 : index
    %149 = vector.load %arg11[%c0_52, %c0_53, %c0_54] : memref<2x1x64xf32, #tpu.memory_space<vmem>>, vector<1x1x64xf32>
    %150 = vector.shape_cast %149 : vector<1x1x64xf32> to vector<1x64xf32>
    %151 = vector.broadcast %150 : vector<1x64xf32> to vector<8x64xf32>
    %152 = arith.addf %148, %151 : vector<8x64xf32>
    %153 = arith.addf %11, %152 : vector<8x64xf32>
    %c0_55 = arith.constant 0 : index
    %c0_56 = arith.constant 0 : index
    %c0_57 = arith.constant 0 : index
    %154 = vector.load %arg16[%c0_55, %c0_56, %c0_57] : memref<2x1x64xf32, #tpu.memory_space<vmem>>, vector<1x1x64xf32>
    %155 = vector.shape_cast %154 : vector<1x1x64xf32> to vector<1x64xf32>
    %c0_58 = arith.constant 0 : index
    %c0_59 = arith.constant 0 : index
    %c0_60 = arith.constant 0 : index
    %156 = vector.load %arg17[%c0_58, %c0_59, %c0_60] : memref<2x1x64xf32, #tpu.memory_space<vmem>>, vector<1x1x64xf32>
    %157 = vector.shape_cast %156 : vector<1x1x64xf32> to vector<1x64xf32>
    %cst_61 = arith.constant dense<0.000000e+00> : vector<8xf32>
    %158 = vector.multi_reduction <add>, %153, %cst_61 [1] : vector<8x64xf32> to vector<8xf32>
    %159 = vector.shape_cast %158 : vector<8xf32> to vector<8x1xf32>
    %cst_62 = arith.constant 6.400000e+01 : f32
    %160 = vector.broadcast %cst_62 : f32 to vector<8x1xf32>
    %161 = arith.divf %159, %160 : vector<8x1xf32>
    %162 = vector.broadcast %161 : vector<8x1xf32> to vector<8x64xf32>
    %163 = arith.subf %153, %162 : vector<8x64xf32>
    %164 = arith.mulf %163, %163 : vector<8x64xf32>
    %cst_63 = arith.constant dense<0.000000e+00> : vector<8xf32>
    %165 = vector.multi_reduction <add>, %164, %cst_63 [1] : vector<8x64xf32> to vector<8xf32>
    %166 = vector.shape_cast %165 : vector<8xf32> to vector<8x1xf32>
    %cst_64 = arith.constant 6.400000e+01 : f32
    %167 = vector.broadcast %cst_64 : f32 to vector<8x1xf32>
    %168 = arith.divf %166, %167 : vector<8x1xf32>
    %169 = vector.broadcast %161 : vector<8x1xf32> to vector<8x64xf32>
    %170 = arith.subf %153, %169 : vector<8x64xf32>
    %cst_65 = arith.constant 9.99999974E-6 : f32
    %171 = vector.broadcast %cst_65 : f32 to vector<8x1xf32>
    %172 = arith.addf %168, %171 : vector<8x1xf32>
    %173 = math.rsqrt %172 : vector<8x1xf32>
    %174 = vector.broadcast %173 : vector<8x1xf32> to vector<8x64xf32>
    %175 = arith.mulf %170, %174 : vector<8x64xf32>
    %176 = vector.broadcast %155 : vector<1x64xf32> to vector<8x64xf32>
    %177 = arith.mulf %175, %176 : vector<8x64xf32>
    %178 = vector.broadcast %157 : vector<1x64xf32> to vector<8x64xf32>
    %179 = arith.addf %177, %178 : vector<8x64xf32>
    %180 = arith.truncf %179 : vector<8x64xf32> to vector<8x64xbf16>
    %c0_66 = arith.constant 0 : index
    %c0_67 = arith.constant 0 : index
    %c0_68 = arith.constant 0 : index
    %181 = vector.load %arg12[%c0_66, %c0_67, %c0_68] : memref<2x64x256xbf16, #tpu.memory_space<vmem>>, vector<1x64x256xbf16>
    %182 = vector.shape_cast %181 : vector<1x64x256xbf16> to vector<64x256xbf16>
    %cst_69 = arith.constant dense<0.000000e+00> : vector<8x256xf32>
    %183 = tpu.matmul %180, %182, %cst_69 {dimension_numbers = #tpu.dot_dimension_numbers<[1], [0], [0], [1], [0, 0, 1, 1], [], []>} : vector<8x64xbf16>, vector<64x256xbf16>, vector<8x256xf32> -> vector<8x256xf32>
    %c0_70 = arith.constant 0 : index
    %c0_71 = arith.constant 0 : index
    %c0_72 = arith.constant 0 : index
    %184 = vector.load %arg13[%c0_70, %c0_71, %c0_72] : memref<2x1x256xf32, #tpu.memory_space<vmem>>, vector<1x1x256xf32>
    %185 = vector.shape_cast %184 : vector<1x1x256xf32> to vector<1x256xf32>
    %186 = vector.broadcast %185 : vector<1x256xf32> to vector<8x256xf32>
    %187 = arith.addf %183, %186 : vector<8x256xf32>
    %cst_73 = arith.constant 0.000000e+00 : f32
    %188 = vector.broadcast %cst_73 : f32 to vector<8x256xf32>
    %189 = arith.maximumf %187, %188 : vector<8x256xf32>
    %190 = arith.truncf %189 : vector<8x256xf32> to vector<8x256xbf16>
    %c0_74 = arith.constant 0 : index
    %c0_75 = arith.constant 0 : index
    %c0_76 = arith.constant 0 : index
    %191 = vector.load %arg14[%c0_74, %c0_75, %c0_76] : memref<2x256x64xbf16, #tpu.memory_space<vmem>>, vector<1x256x64xbf16>
    %192 = vector.shape_cast %191 : vector<1x256x64xbf16> to vector<256x64xbf16>
    %cst_77 = arith.constant dense<0.000000e+00> : vector<8x64xf32>
    %193 = tpu.matmul %190, %192, %cst_77 {dimension_numbers = #tpu.dot_dimension_numbers<[1], [0], [0], [1], [0, 0, 1, 1], [], []>} : vector<8x256xbf16>, vector<256x64xbf16>, vector<8x64xf32> -> vector<8x64xf32>
    %c0_78 = arith.constant 0 : index
    %c0_79 = arith.constant 0 : index
    %c0_80 = arith.constant 0 : index
    %194 = vector.load %arg15[%c0_78, %c0_79, %c0_80] : memref<2x1x64xf32, #tpu.memory_space<vmem>>, vector<1x1x64xf32>
    %195 = vector.shape_cast %194 : vector<1x1x64xf32> to vector<1x64xf32>
    %196 = vector.broadcast %195 : vector<1x64xf32> to vector<8x64xf32>
    %197 = arith.addf %193, %196 : vector<8x64xf32>
    %198 = arith.addf %179, %197 : vector<8x64xf32>
    %c0_81 = arith.constant 0 : index
    %c0_82 = arith.constant 0 : index
    %c0_83 = arith.constant 0 : index
    %199 = vector.load %arg18[%c0_81, %c0_82, %c0_83] : memref<2x1x64xf32, #tpu.memory_space<vmem>>, vector<1x1x64xf32>
    %200 = vector.shape_cast %199 : vector<1x1x64xf32> to vector<1x64xf32>
    %c0_84 = arith.constant 0 : index
    %c0_85 = arith.constant 0 : index
    %c0_86 = arith.constant 0 : index
    %201 = vector.load %arg19[%c0_84, %c0_85, %c0_86] : memref<2x1x64xf32, #tpu.memory_space<vmem>>, vector<1x1x64xf32>
    %202 = vector.shape_cast %201 : vector<1x1x64xf32> to vector<1x64xf32>
    %cst_87 = arith.constant dense<0.000000e+00> : vector<8xf32>
    %203 = vector.multi_reduction <add>, %198, %cst_87 [1] : vector<8x64xf32> to vector<8xf32>
    %204 = vector.shape_cast %203 : vector<8xf32> to vector<8x1xf32>
    %cst_88 = arith.constant 6.400000e+01 : f32
    %205 = vector.broadcast %cst_88 : f32 to vector<8x1xf32>
    %206 = arith.divf %204, %205 : vector<8x1xf32>
    %207 = vector.broadcast %206 : vector<8x1xf32> to vector<8x64xf32>
    %208 = arith.subf %198, %207 : vector<8x64xf32>
    %209 = arith.mulf %208, %208 : vector<8x64xf32>
    %cst_89 = arith.constant dense<0.000000e+00> : vector<8xf32>
    %210 = vector.multi_reduction <add>, %209, %cst_89 [1] : vector<8x64xf32> to vector<8xf32>
    %211 = vector.shape_cast %210 : vector<8xf32> to vector<8x1xf32>
    %cst_90 = arith.constant 6.400000e+01 : f32
    %212 = vector.broadcast %cst_90 : f32 to vector<8x1xf32>
    %213 = arith.divf %211, %212 : vector<8x1xf32>
    %214 = vector.broadcast %206 : vector<8x1xf32> to vector<8x64xf32>
    %215 = arith.subf %198, %214 : vector<8x64xf32>
    %cst_91 = arith.constant 9.99999974E-6 : f32
    %216 = vector.broadcast %cst_91 : f32 to vector<8x1xf32>
    %217 = arith.addf %213, %216 : vector<8x1xf32>
    %218 = math.rsqrt %217 : vector<8x1xf32>
    %219 = vector.broadcast %218 : vector<8x1xf32> to vector<8x64xf32>
    %220 = arith.mulf %215, %219 : vector<8x64xf32>
    %221 = vector.broadcast %200 : vector<1x64xf32> to vector<8x64xf32>
    %222 = arith.mulf %220, %221 : vector<8x64xf32>
    %223 = vector.broadcast %202 : vector<1x64xf32> to vector<8x64xf32>
    %224 = arith.addf %222, %223 : vector<8x64xf32>
    %225 = arith.truncf %224 : vector<8x64xf32> to vector<8x64xbf16>
    %c1 = arith.constant 1 : index
    %c0_92 = arith.constant 0 : index
    %c0_93 = arith.constant 0 : index
    %226 = vector.load %arg4[%c1, %c0_92, %c0_93] : memref<2x64x64xbf16, #tpu.memory_space<vmem>>, vector<1x64x64xbf16>
    %227 = vector.shape_cast %226 : vector<1x64x64xbf16> to vector<64x64xbf16>
    %cst_94 = arith.constant dense<0.000000e+00> : vector<8x64xf32>
    %228 = tpu.matmul %225, %227, %cst_94 {dimension_numbers = #tpu.dot_dimension_numbers<[1], [0], [0], [1], [0, 0, 1, 1], [], []>} : vector<8x64xbf16>, vector<64x64xbf16>, vector<8x64xf32> -> vector<8x64xf32>
    %c1_95 = arith.constant 1 : index
    %c0_96 = arith.constant 0 : index
    %c0_97 = arith.constant 0 : index
    %229 = vector.load %arg5[%c1_95, %c0_96, %c0_97] : memref<2x1x64xf32, #tpu.memory_space<vmem>>, vector<1x1x64xf32>
    %230 = vector.shape_cast %229 : vector<1x1x64xf32> to vector<1x64xf32>
    %231 = vector.broadcast %230 : vector<1x64xf32> to vector<8x64xf32>
    %232 = arith.addf %228, %231 : vector<8x64xf32>
    %cst_98 = arith.constant 2.500000e-01 : f32
    %233 = vector.broadcast %cst_98 : f32 to vector<8x64xf32>
    %234 = arith.mulf %232, %233 : vector<8x64xf32>
    %c1_99 = arith.constant 1 : index
    %c0_100 = arith.constant 0 : index
    %c0_101 = arith.constant 0 : index
    %235 = vector.load %arg6[%c1_99, %c0_100, %c0_101] : memref<2x64x64xbf16, #tpu.memory_space<vmem>>, vector<1x64x64xbf16>
    %236 = vector.shape_cast %235 : vector<1x64x64xbf16> to vector<64x64xbf16>
    %cst_102 = arith.constant dense<0.000000e+00> : vector<8x64xf32>
    %237 = tpu.matmul %225, %236, %cst_102 {dimension_numbers = #tpu.dot_dimension_numbers<[1], [0], [0], [1], [0, 0, 1, 1], [], []>} : vector<8x64xbf16>, vector<64x64xbf16>, vector<8x64xf32> -> vector<8x64xf32>
    %c1_103 = arith.constant 1 : index
    %c0_104 = arith.constant 0 : index
    %c0_105 = arith.constant 0 : index
    %238 = vector.load %arg7[%c1_103, %c0_104, %c0_105] : memref<2x1x64xf32, #tpu.memory_space<vmem>>, vector<1x1x64xf32>
    %239 = vector.shape_cast %238 : vector<1x1x64xf32> to vector<1x64xf32>
    %240 = vector.broadcast %239 : vector<1x64xf32> to vector<8x64xf32>
    %241 = arith.addf %237, %240 : vector<8x64xf32>
    %c1_106 = arith.constant 1 : index
    %c0_107 = arith.constant 0 : index
    %c0_108 = arith.constant 0 : index
    %242 = vector.load %arg8[%c1_106, %c0_107, %c0_108] : memref<2x64x64xbf16, #tpu.memory_space<vmem>>, vector<1x64x64xbf16>
    %243 = vector.shape_cast %242 : vector<1x64x64xbf16> to vector<64x64xbf16>
    %cst_109 = arith.constant dense<0.000000e+00> : vector<8x64xf32>
    %244 = tpu.matmul %225, %243, %cst_109 {dimension_numbers = #tpu.dot_dimension_numbers<[1], [0], [0], [1], [0, 0, 1, 1], [], []>} : vector<8x64xbf16>, vector<64x64xbf16>, vector<8x64xf32> -> vector<8x64xf32>
    %c1_110 = arith.constant 1 : index
    %c0_111 = arith.constant 0 : index
    %c0_112 = arith.constant 0 : index
    %245 = vector.load %arg9[%c1_110, %c0_111, %c0_112] : memref<2x1x64xf32, #tpu.memory_space<vmem>>, vector<1x1x64xf32>
    %246 = vector.shape_cast %245 : vector<1x1x64xf32> to vector<1x64xf32>
    %247 = vector.broadcast %246 : vector<1x64xf32> to vector<8x64xf32>
    %248 = arith.addf %244, %247 : vector<8x64xf32>
    %249 = arith.truncf %234 : vector<8x64xf32> to vector<8x64xbf16>
    %250 = arith.truncf %241 : vector<8x64xf32> to vector<8x64xbf16>
    %251 = arith.truncf %248 : vector<8x64xf32> to vector<8x64xbf16>
    %cst_113 = arith.constant 0.000000e+00 : f32
    %252 = vector.broadcast %cst_113 : f32 to vector<8x64xf32>
    %253 = vector.broadcast %20 : vector<1x64xbf16> to vector<8x64xbf16>
    %254 = arith.mulf %249, %253 : vector<8x64xbf16>
    "tpu.trace_start"() <{level = 10 : i32, message = "qd,kd->qk"}> : () -> ()
    %cst_114 = arith.constant dense<0.000000e+00> : vector<8x8xf32>
    %255 = tpu.matmul %254, %250, %cst_114 {dimension_numbers = #tpu.dot_dimension_numbers<[1], [1], [0], [0], [0, 0, 1, 0], [], []>} : vector<8x64xbf16>, vector<8x64xbf16>, vector<8x8xf32> -> vector<8x8xf32>
    "tpu.trace_stop"() : () -> ()
    %cst_115 = arith.constant dense<0xFF800000> : vector<8xf32>
    %256 = vector.multi_reduction <maximumf>, %255, %cst_115 [1] : vector<8x8xf32> to vector<8xf32>
    %257 = vector.shape_cast %256 : vector<8xf32> to vector<8x1xf32>
    %258 = vector.broadcast %257 : vector<8x1xf32> to vector<8x8xf32>
    %259 = arith.subf %255, %258 : vector<8x8xf32>
    %260 = math.exp %259 : vector<8x8xf32>
    %cst_116 = arith.constant dense<0.000000e+00> : vector<8xf32>
    %261 = vector.multi_reduction <add>, %260, %cst_116 [1] : vector<8x8xf32> to vector<8xf32>
    %262 = vector.shape_cast %261 : vector<8xf32> to vector<8x1xf32>
    %263 = tpu.reciprocal %262 {approx = true} : vector<8x1xf32> -> vector<8x1xf32>
    %264 = vector.broadcast %263 : vector<8x1xf32> to vector<8x8xf32>
    %265 = arith.mulf %260, %264 : vector<8x8xf32>
    %266 = arith.truncf %265 : vector<8x8xf32> to vector<8x8xbf16>
    %267 = vector.broadcast %20 : vector<1x64xbf16> to vector<8x64xbf16>
    %268 = arith.mulf %251, %267 : vector<8x64xbf16>
    %cst_117 = arith.constant dense<0.000000e+00> : vector<8x64xf32>
    %269 = tpu.matmul %266, %268, %cst_117 {dimension_numbers = #tpu.dot_dimension_numbers<[1], [0], [0], [1], [0, 0, 1, 1], [], []>} : vector<8x8xbf16>, vector<8x64xbf16>, vector<8x64xf32> -> vector<8x64xf32>
    %270 = arith.addf %252, %269 : vector<8x64xf32>
    %271 = vector.broadcast %28 : vector<1x64xbf16> to vector<8x64xbf16>
    %272 = arith.mulf %249, %271 : vector<8x64xbf16>
    "tpu.trace_start"() <{level = 10 : i32, message = "qd,kd->qk"}> : () -> ()
    %cst_118 = arith.constant dense<0.000000e+00> : vector<8x8xf32>
    %273 = tpu.matmul %272, %250, %cst_118 {dimension_numbers = #tpu.dot_dimension_numbers<[1], [1], [0], [0], [0, 0, 1, 0], [], []>} : vector<8x64xbf16>, vector<8x64xbf16>, vector<8x8xf32> -> vector<8x8xf32>
    "tpu.trace_stop"() : () -> ()
    %cst_119 = arith.constant dense<0xFF800000> : vector<8xf32>
    %274 = vector.multi_reduction <maximumf>, %273, %cst_119 [1] : vector<8x8xf32> to vector<8xf32>
    %275 = vector.shape_cast %274 : vector<8xf32> to vector<8x1xf32>
    %276 = vector.broadcast %275 : vector<8x1xf32> to vector<8x8xf32>
    %277 = arith.subf %273, %276 : vector<8x8xf32>
    %278 = math.exp %277 : vector<8x8xf32>
    %cst_120 = arith.constant dense<0.000000e+00> : vector<8xf32>
    %279 = vector.multi_reduction <add>, %278, %cst_120 [1] : vector<8x8xf32> to vector<8xf32>
    %280 = vector.shape_cast %279 : vector<8xf32> to vector<8x1xf32>
    %281 = tpu.reciprocal %280 {approx = true} : vector<8x1xf32> -> vector<8x1xf32>
    %282 = vector.broadcast %281 : vector<8x1xf32> to vector<8x8xf32>
    %283 = arith.mulf %278, %282 : vector<8x8xf32>
    %284 = arith.truncf %283 : vector<8x8xf32> to vector<8x8xbf16>
    %285 = vector.broadcast %28 : vector<1x64xbf16> to vector<8x64xbf16>
    %286 = arith.mulf %251, %285 : vector<8x64xbf16>
    %cst_121 = arith.constant dense<0.000000e+00> : vector<8x64xf32>
    %287 = tpu.matmul %284, %286, %cst_121 {dimension_numbers = #tpu.dot_dimension_numbers<[1], [0], [0], [1], [0, 0, 1, 1], [], []>} : vector<8x8xbf16>, vector<8x64xbf16>, vector<8x64xf32> -> vector<8x64xf32>
    %288 = arith.addf %270, %287 : vector<8x64xf32>
    %289 = vector.broadcast %36 : vector<1x64xbf16> to vector<8x64xbf16>
    %290 = arith.mulf %249, %289 : vector<8x64xbf16>
    "tpu.trace_start"() <{level = 10 : i32, message = "qd,kd->qk"}> : () -> ()
    %cst_122 = arith.constant dense<0.000000e+00> : vector<8x8xf32>
    %291 = tpu.matmul %290, %250, %cst_122 {dimension_numbers = #tpu.dot_dimension_numbers<[1], [1], [0], [0], [0, 0, 1, 0], [], []>} : vector<8x64xbf16>, vector<8x64xbf16>, vector<8x8xf32> -> vector<8x8xf32>
    "tpu.trace_stop"() : () -> ()
    %cst_123 = arith.constant dense<0xFF800000> : vector<8xf32>
    %292 = vector.multi_reduction <maximumf>, %291, %cst_123 [1] : vector<8x8xf32> to vector<8xf32>
    %293 = vector.shape_cast %292 : vector<8xf32> to vector<8x1xf32>
    %294 = vector.broadcast %293 : vector<8x1xf32> to vector<8x8xf32>
    %295 = arith.subf %291, %294 : vector<8x8xf32>
    %296 = math.exp %295 : vector<8x8xf32>
    %cst_124 = arith.constant dense<0.000000e+00> : vector<8xf32>
    %297 = vector.multi_reduction <add>, %296, %cst_124 [1] : vector<8x8xf32> to vector<8xf32>
    %298 = vector.shape_cast %297 : vector<8xf32> to vector<8x1xf32>
    %299 = tpu.reciprocal %298 {approx = true} : vector<8x1xf32> -> vector<8x1xf32>
    %300 = vector.broadcast %299 : vector<8x1xf32> to vector<8x8xf32>
    %301 = arith.mulf %296, %300 : vector<8x8xf32>
    %302 = arith.truncf %301 : vector<8x8xf32> to vector<8x8xbf16>
    %303 = vector.broadcast %36 : vector<1x64xbf16> to vector<8x64xbf16>
    %304 = arith.mulf %251, %303 : vector<8x64xbf16>
    %cst_125 = arith.constant dense<0.000000e+00> : vector<8x64xf32>
    %305 = tpu.matmul %302, %304, %cst_125 {dimension_numbers = #tpu.dot_dimension_numbers<[1], [0], [0], [1], [0, 0, 1, 1], [], []>} : vector<8x8xbf16>, vector<8x64xbf16>, vector<8x64xf32> -> vector<8x64xf32>
    %306 = arith.addf %288, %305 : vector<8x64xf32>
    %307 = vector.broadcast %44 : vector<1x64xbf16> to vector<8x64xbf16>
    %308 = arith.mulf %249, %307 : vector<8x64xbf16>
    "tpu.trace_start"() <{level = 10 : i32, message = "qd,kd->qk"}> : () -> ()
    %cst_126 = arith.constant dense<0.000000e+00> : vector<8x8xf32>
    %309 = tpu.matmul %308, %250, %cst_126 {dimension_numbers = #tpu.dot_dimension_numbers<[1], [1], [0], [0], [0, 0, 1, 0], [], []>} : vector<8x64xbf16>, vector<8x64xbf16>, vector<8x8xf32> -> vector<8x8xf32>
    "tpu.trace_stop"() : () -> ()
    %cst_127 = arith.constant dense<0xFF800000> : vector<8xf32>
    %310 = vector.multi_reduction <maximumf>, %309, %cst_127 [1] : vector<8x8xf32> to vector<8xf32>
    %311 = vector.shape_cast %310 : vector<8xf32> to vector<8x1xf32>
    %312 = vector.broadcast %311 : vector<8x1xf32> to vector<8x8xf32>
    %313 = arith.subf %309, %312 : vector<8x8xf32>
    %314 = math.exp %313 : vector<8x8xf32>
    %cst_128 = arith.constant dense<0.000000e+00> : vector<8xf32>
    %315 = vector.multi_reduction <add>, %314, %cst_128 [1] : vector<8x8xf32> to vector<8xf32>
    %316 = vector.shape_cast %315 : vector<8xf32> to vector<8x1xf32>
    %317 = tpu.reciprocal %316 {approx = true} : vector<8x1xf32> -> vector<8x1xf32>
    %318 = vector.broadcast %317 : vector<8x1xf32> to vector<8x8xf32>
    %319 = arith.mulf %314, %318 : vector<8x8xf32>
    %320 = arith.truncf %319 : vector<8x8xf32> to vector<8x8xbf16>
    %321 = vector.broadcast %44 : vector<1x64xbf16> to vector<8x64xbf16>
    %322 = arith.mulf %251, %321 : vector<8x64xbf16>
    %cst_129 = arith.constant dense<0.000000e+00> : vector<8x64xf32>
    %323 = tpu.matmul %320, %322, %cst_129 {dimension_numbers = #tpu.dot_dimension_numbers<[1], [0], [0], [1], [0, 0, 1, 1], [], []>} : vector<8x8xbf16>, vector<8x64xbf16>, vector<8x64xf32> -> vector<8x64xf32>
    %324 = arith.addf %306, %323 : vector<8x64xf32>
    %325 = arith.truncf %324 : vector<8x64xf32> to vector<8x64xbf16>
    %c1_130 = arith.constant 1 : index
    %c0_131 = arith.constant 0 : index
    %c0_132 = arith.constant 0 : index
    %326 = vector.load %arg10[%c1_130, %c0_131, %c0_132] : memref<2x64x64xbf16, #tpu.memory_space<vmem>>, vector<1x64x64xbf16>
    %327 = vector.shape_cast %326 : vector<1x64x64xbf16> to vector<64x64xbf16>
    %cst_133 = arith.constant dense<0.000000e+00> : vector<8x64xf32>
    %328 = tpu.matmul %325, %327, %cst_133 {dimension_numbers = #tpu.dot_dimension_numbers<[1], [0], [0], [1], [0, 0, 1, 1], [], []>} : vector<8x64xbf16>, vector<64x64xbf16>, vector<8x64xf32> -> vector<8x64xf32>
    %c1_134 = arith.constant 1 : index
    %c0_135 = arith.constant 0 : index
    %c0_136 = arith.constant 0 : index
    %329 = vector.load %arg11[%c1_134, %c0_135, %c0_136] : memref<2x1x64xf32, #tpu.memory_space<vmem>>, vector<1x1x64xf32>
    %330 = vector.shape_cast %329 : vector<1x1x64xf32> to vector<1x64xf32>
    %331 = vector.broadcast %330 : vector<1x64xf32> to vector<8x64xf32>
    %332 = arith.addf %328, %331 : vector<8x64xf32>
    %333 = arith.addf %224, %332 : vector<8x64xf32>
    %c1_137 = arith.constant 1 : index
    %c0_138 = arith.constant 0 : index
    %c0_139 = arith.constant 0 : index
    %334 = vector.load %arg16[%c1_137, %c0_138, %c0_139] : memref<2x1x64xf32, #tpu.memory_space<vmem>>, vector<1x1x64xf32>
    %335 = vector.shape_cast %334 : vector<1x1x64xf32> to vector<1x64xf32>
    %c1_140 = arith.constant 1 : index
    %c0_141 = arith.constant 0 : index
    %c0_142 = arith.constant 0 : index
    %336 = vector.load %arg17[%c1_140, %c0_141, %c0_142] : memref<2x1x64xf32, #tpu.memory_space<vmem>>, vector<1x1x64xf32>
    %337 = vector.shape_cast %336 : vector<1x1x64xf32> to vector<1x64xf32>
    %cst_143 = arith.constant dense<0.000000e+00> : vector<8xf32>
    %338 = vector.multi_reduction <add>, %333, %cst_143 [1] : vector<8x64xf32> to vector<8xf32>
    %339 = vector.shape_cast %338 : vector<8xf32> to vector<8x1xf32>
    %cst_144 = arith.constant 6.400000e+01 : f32
    %340 = vector.broadcast %cst_144 : f32 to vector<8x1xf32>
    %341 = arith.divf %339, %340 : vector<8x1xf32>
    %342 = vector.broadcast %341 : vector<8x1xf32> to vector<8x64xf32>
    %343 = arith.subf %333, %342 : vector<8x64xf32>
    %344 = arith.mulf %343, %343 : vector<8x64xf32>
    %cst_145 = arith.constant dense<0.000000e+00> : vector<8xf32>
    %345 = vector.multi_reduction <add>, %344, %cst_145 [1] : vector<8x64xf32> to vector<8xf32>
    %346 = vector.shape_cast %345 : vector<8xf32> to vector<8x1xf32>
    %cst_146 = arith.constant 6.400000e+01 : f32
    %347 = vector.broadcast %cst_146 : f32 to vector<8x1xf32>
    %348 = arith.divf %346, %347 : vector<8x1xf32>
    %349 = vector.broadcast %341 : vector<8x1xf32> to vector<8x64xf32>
    %350 = arith.subf %333, %349 : vector<8x64xf32>
    %cst_147 = arith.constant 9.99999974E-6 : f32
    %351 = vector.broadcast %cst_147 : f32 to vector<8x1xf32>
    %352 = arith.addf %348, %351 : vector<8x1xf32>
    %353 = math.rsqrt %352 : vector<8x1xf32>
    %354 = vector.broadcast %353 : vector<8x1xf32> to vector<8x64xf32>
    %355 = arith.mulf %350, %354 : vector<8x64xf32>
    %356 = vector.broadcast %335 : vector<1x64xf32> to vector<8x64xf32>
    %357 = arith.mulf %355, %356 : vector<8x64xf32>
    %358 = vector.broadcast %337 : vector<1x64xf32> to vector<8x64xf32>
    %359 = arith.addf %357, %358 : vector<8x64xf32>
    %360 = arith.truncf %359 : vector<8x64xf32> to vector<8x64xbf16>
    %c1_148 = arith.constant 1 : index
    %c0_149 = arith.constant 0 : index
    %c0_150 = arith.constant 0 : index
    %361 = vector.load %arg12[%c1_148, %c0_149, %c0_150] : memref<2x64x256xbf16, #tpu.memory_space<vmem>>, vector<1x64x256xbf16>
    %362 = vector.shape_cast %361 : vector<1x64x256xbf16> to vector<64x256xbf16>
    %cst_151 = arith.constant dense<0.000000e+00> : vector<8x256xf32>
    %363 = tpu.matmul %360, %362, %cst_151 {dimension_numbers = #tpu.dot_dimension_numbers<[1], [0], [0], [1], [0, 0, 1, 1], [], []>} : vector<8x64xbf16>, vector<64x256xbf16>, vector<8x256xf32> -> vector<8x256xf32>
    %c1_152 = arith.constant 1 : index
    %c0_153 = arith.constant 0 : index
    %c0_154 = arith.constant 0 : index
    %364 = vector.load %arg13[%c1_152, %c0_153, %c0_154] : memref<2x1x256xf32, #tpu.memory_space<vmem>>, vector<1x1x256xf32>
    %365 = vector.shape_cast %364 : vector<1x1x256xf32> to vector<1x256xf32>
    %366 = vector.broadcast %365 : vector<1x256xf32> to vector<8x256xf32>
    %367 = arith.addf %363, %366 : vector<8x256xf32>
    %cst_155 = arith.constant 0.000000e+00 : f32
    %368 = vector.broadcast %cst_155 : f32 to vector<8x256xf32>
    %369 = arith.maximumf %367, %368 : vector<8x256xf32>
    %370 = arith.truncf %369 : vector<8x256xf32> to vector<8x256xbf16>
    %c1_156 = arith.constant 1 : index
    %c0_157 = arith.constant 0 : index
    %c0_158 = arith.constant 0 : index
    %371 = vector.load %arg14[%c1_156, %c0_157, %c0_158] : memref<2x256x64xbf16, #tpu.memory_space<vmem>>, vector<1x256x64xbf16>
    %372 = vector.shape_cast %371 : vector<1x256x64xbf16> to vector<256x64xbf16>
    %cst_159 = arith.constant dense<0.000000e+00> : vector<8x64xf32>
    %373 = tpu.matmul %370, %372, %cst_159 {dimension_numbers = #tpu.dot_dimension_numbers<[1], [0], [0], [1], [0, 0, 1, 1], [], []>} : vector<8x256xbf16>, vector<256x64xbf16>, vector<8x64xf32> -> vector<8x64xf32>
    %c1_160 = arith.constant 1 : index
    %c0_161 = arith.constant 0 : index
    %c0_162 = arith.constant 0 : index
    %374 = vector.load %arg15[%c1_160, %c0_161, %c0_162] : memref<2x1x64xf32, #tpu.memory_space<vmem>>, vector<1x1x64xf32>
    %375 = vector.shape_cast %374 : vector<1x1x64xf32> to vector<1x64xf32>
    %376 = vector.broadcast %375 : vector<1x64xf32> to vector<8x64xf32>
    %377 = arith.addf %373, %376 : vector<8x64xf32>
    %378 = arith.addf %359, %377 : vector<8x64xf32>
    %c1_163 = arith.constant 1 : index
    %c0_164 = arith.constant 0 : index
    %c0_165 = arith.constant 0 : index
    %379 = vector.load %arg18[%c1_163, %c0_164, %c0_165] : memref<2x1x64xf32, #tpu.memory_space<vmem>>, vector<1x1x64xf32>
    %380 = vector.shape_cast %379 : vector<1x1x64xf32> to vector<1x64xf32>
    %c1_166 = arith.constant 1 : index
    %c0_167 = arith.constant 0 : index
    %c0_168 = arith.constant 0 : index
    %381 = vector.load %arg19[%c1_166, %c0_167, %c0_168] : memref<2x1x64xf32, #tpu.memory_space<vmem>>, vector<1x1x64xf32>
    %382 = vector.shape_cast %381 : vector<1x1x64xf32> to vector<1x64xf32>
    %cst_169 = arith.constant dense<0.000000e+00> : vector<8xf32>
    %383 = vector.multi_reduction <add>, %378, %cst_169 [1] : vector<8x64xf32> to vector<8xf32>
    %384 = vector.shape_cast %383 : vector<8xf32> to vector<8x1xf32>
    %cst_170 = arith.constant 6.400000e+01 : f32
    %385 = vector.broadcast %cst_170 : f32 to vector<8x1xf32>
    %386 = arith.divf %384, %385 : vector<8x1xf32>
    %387 = vector.broadcast %386 : vector<8x1xf32> to vector<8x64xf32>
    %388 = arith.subf %378, %387 : vector<8x64xf32>
    %389 = arith.mulf %388, %388 : vector<8x64xf32>
    %cst_171 = arith.constant dense<0.000000e+00> : vector<8xf32>
    %390 = vector.multi_reduction <add>, %389, %cst_171 [1] : vector<8x64xf32> to vector<8xf32>
    %391 = vector.shape_cast %390 : vector<8xf32> to vector<8x1xf32>
    %cst_172 = arith.constant 6.400000e+01 : f32
    %392 = vector.broadcast %cst_172 : f32 to vector<8x1xf32>
    %393 = arith.divf %391, %392 : vector<8x1xf32>
    %394 = vector.broadcast %386 : vector<8x1xf32> to vector<8x64xf32>
    %395 = arith.subf %378, %394 : vector<8x64xf32>
    %cst_173 = arith.constant 9.99999974E-6 : f32
    %396 = vector.broadcast %cst_173 : f32 to vector<8x1xf32>
    %397 = arith.addf %393, %396 : vector<8x1xf32>
    %398 = math.rsqrt %397 : vector<8x1xf32>
    %399 = vector.broadcast %398 : vector<8x1xf32> to vector<8x64xf32>
    %400 = arith.mulf %395, %399 : vector<8x64xf32>
    %401 = vector.broadcast %380 : vector<1x64xf32> to vector<8x64xf32>
    %402 = arith.mulf %400, %401 : vector<8x64xf32>
    %403 = vector.broadcast %382 : vector<1x64xf32> to vector<8x64xf32>
    %404 = arith.addf %402, %403 : vector<8x64xf32>
    %cst_174 = arith.constant dense<0.000000e+00> : vector<64xf32>
    %405 = vector.multi_reduction <add>, %404, %cst_174 [0] : vector<8x64xf32> to vector<64xf32>
    %406 = vector.shape_cast %405 : vector<64xf32> to vector<1x64xf32>
    %cst_175 = arith.constant 8.000000e+00 : f32
    %407 = vector.broadcast %cst_175 : f32 to vector<1x64xf32>
    %408 = arith.divf %406, %407 : vector<1x64xf32>
    %409 = arith.truncf %408 : vector<1x64xf32> to vector<1x64xbf16>
    %c0_176 = arith.constant 0 : index
    %c0_177 = arith.constant 0 : index
    %410 = vector.load %arg20[%c0_176, %c0_177] : memref<64x128xbf16, #tpu.memory_space<vmem>>, vector<64x128xbf16>
    %cst_178 = arith.constant dense<0.000000e+00> : vector<1x128xf32>
    %411 = tpu.matmul %409, %410, %cst_178 {dimension_numbers = #tpu.dot_dimension_numbers<[1], [0], [0], [1], [0, 0, 1, 1], [], []>} : vector<1x64xbf16>, vector<64x128xbf16>, vector<1x128xf32> -> vector<1x128xf32>
    %c0_179 = arith.constant 0 : index
    %c0_180 = arith.constant 0 : index
    %412 = vector.load %arg21[%c0_179, %c0_180] : memref<1x128xf32, #tpu.memory_space<vmem>>, vector<1x128xf32>
    %413 = arith.addf %411, %412 : vector<1x128xf32>
    %c0_181 = arith.constant 0 : index
    %c0_182 = arith.constant 0 : index
    %c0_183 = arith.constant 0 : index
    %414 = vector.load %arg22[%c0_181, %c0_182, %c0_183] : memref<1x1x128xf32, #tpu.memory_space<vmem>>, vector<1x1x128xf32>
    %415 = vector.shape_cast %414 : vector<1x1x128xf32> to vector<1x128xf32>
    %416 = vector.shape_cast %413 : vector<1x128xf32> to vector<1x1x128xf32>
    tpu.vector_store %arg22[%c0_181, %c0_182, %c0_183], %416 {strides = array<i32>} : memref<1x1x128xf32, #tpu.memory_space<vmem>>, vector<1x1x128xf32>,
    return
  }
  func.func @transform_0(%arg0: i32) -> (i32, i32, i32) {
    %c0_i32 = arith.constant 0 : i32
    %c0_i32_0 = arith.constant 0 : i32
    %c0_i32_1 = arith.constant 0 : i32
    return %arg0, %c0_i32, %c0_i32_0 : i32, i32, i32
  }
  func.func @transform_1(%arg0: i32) -> (i32, i32) {
    %c0_i32 = arith.constant 0 : i32
    %c0_i32_0 = arith.constant 0 : i32
    %c0_i32_1 = arith.constant 0 : i32
    return %c0_i32, %c0_i32_0 : i32, i32
  }
  func.func @transform_2(%arg0: i32) -> (i32, i32) {
    %c0_i32 = arith.constant 0 : i32
    %c0_i32_0 = arith.constant 0 : i32
    %c0_i32_1 = arith.constant 0 : i32
    return %c0_i32, %c0_i32_0 : i32, i32
  }
  func.func @transform_3(%arg0: i32) -> (i32, i32, i32) {
    %c0_i32 = arith.constant 0 : i32
    %c0_i32_0 = arith.constant 0 : i32
    %c0_i32_1 = arith.constant 0 : i32
    %c0_i32_2 = arith.constant 0 : i32
    return %c0_i32, %c0_i32_0, %c0_i32_1 : i32, i32, i32
  }
  func.func @transform_4(%arg0: i32) -> (i32, i32, i32) {
    %c0_i32 = arith.constant 0 : i32
    %c0_i32_0 = arith.constant 0 : i32
    %c0_i32_1 = arith.constant 0 : i32
    %c0_i32_2 = arith.constant 0 : i32
    return %c0_i32, %c0_i32_0, %c0_i32_1 : i32, i32, i32
  }
  func.func @transform_5(%arg0: i32) -> (i32, i32, i32) {
    %c0_i32 = arith.constant 0 : i32
    %c0_i32_0 = arith.constant 0 : i32
    %c0_i32_1 = arith.constant 0 : i32
    %c0_i32_2 = arith.constant 0 : i32
    return %c0_i32, %c0_i32_0, %c0_i32_1 : i32, i32, i32
  }
  func.func @transform_6(%arg0: i32) -> (i32, i32, i32) {
    %c0_i32 = arith.constant 0 : i32
    %c0_i32_0 = arith.constant 0 : i32
    %c0_i32_1 = arith.constant 0 : i32
    %c0_i32_2 = arith.constant 0 : i32
    return %c0_i32, %c0_i32_0, %c0_i32_1 : i32, i32, i32
  }
  func.func @transform_7(%arg0: i32) -> (i32, i32, i32) {
    %c0_i32 = arith.constant 0 : i32
    %c0_i32_0 = arith.constant 0 : i32
    %c0_i32_1 = arith.constant 0 : i32
    %c0_i32_2 = arith.constant 0 : i32
    return %c0_i32, %c0_i32_0, %c0_i32_1 : i32, i32, i32
  }
  func.func @transform_8(%arg0: i32) -> (i32, i32, i32) {
    %c0_i32 = arith.constant 0 : i32
    %c0_i32_0 = arith.constant 0 : i32
    %c0_i32_1 = arith.constant 0 : i32
    %c0_i32_2 = arith.constant 0 : i32
    return %c0_i32, %c0_i32_0, %c0_i32_1 : i32, i32, i32
  }
  func.func @transform_9(%arg0: i32) -> (i32, i32, i32) {
    %c0_i32 = arith.constant 0 : i32
    %c0_i32_0 = arith.constant 0 : i32
    %c0_i32_1 = arith.constant 0 : i32
    %c0_i32_2 = arith.constant 0 : i32
    return %c0_i32, %c0_i32_0, %c0_i32_1 : i32, i32, i32
  }
  func.func @transform_10(%arg0: i32) -> (i32, i32, i32) {
    %c0_i32 = arith.constant 0 : i32
    %c0_i32_0 = arith.constant 0 : i32
    %c0_i32_1 = arith.constant 0 : i32
    %c0_i32_2 = arith.constant 0 : i32
    return %c0_i32, %c0_i32_0, %c0_i32_1 : i32, i32, i32
  }
  func.func @transform_11(%arg0: i32) -> (i32, i32, i32) {
    %c0_i32 = arith.constant 0 : i32
    %c0_i32_0 = arith.constant 0 : i32
    %c0_i32_1 = arith.constant 0 : i32
    %c0_i32_2 = arith.constant 0 : i32
    return %c0_i32, %c0_i32_0, %c0_i32_1 : i32, i32, i32
  }
  func.func @transform_12(%arg0: i32) -> (i32, i32, i32) {
    %c0_i32 = arith.constant 0 : i32
    %c0_i32_0 = arith.constant 0 : i32
    %c0_i32_1 = arith.constant 0 : i32
    %c0_i32_2 = arith.constant 0 : i32
    return %c0_i32, %c0_i32_0, %c0_i32_1 : i32, i32, i32
  }
  func.func @transform_13(%arg0: i32) -> (i32, i32, i32) {
    %c0_i32 = arith.constant 0 : i32
    %c0_i32_0 = arith.constant 0 : i32
    %c0_i32_1 = arith.constant 0 : i32
    %c0_i32_2 = arith.constant 0 : i32
    return %c0_i32, %c0_i32_0, %c0_i32_1 : i32, i32, i32
  }
  func.func @transform_14(%arg0: i32) -> (i32, i32, i32) {
    %c0_i32 = arith.constant 0 : i32
    %c0_i32_0 = arith.constant 0 : i32
    %c0_i32_1 = arith.constant 0 : i32
    %c0_i32_2 = arith.constant 0 : i32
    return %c0_i32, %c0_i32_0, %c0_i32_1 : i32, i32, i32
  }
  func.func @transform_15(%arg0: i32) -> (i32, i32, i32) {
    %c0_i32 = arith.constant 0 : i32
    %c0_i32_0 = arith.constant 0 : i32
    %c0_i32_1 = arith.constant 0 : i32
    %c0_i32_2 = arith.constant 0 : i32
    return %c0_i32, %c0_i32_0, %c0_i32_1 : i32, i32, i32
  }
  func.func @transform_16(%arg0: i32) -> (i32, i32, i32) {
    %c0_i32 = arith.constant 0 : i32
    %c0_i32_0 = arith.constant 0 : i32
    %c0_i32_1 = arith.constant 0 : i32
    %c0_i32_2 = arith.constant 0 : i32
    return %c0_i32, %c0_i32_0, %c0_i32_1 : i32, i32, i32
  }
  func.func @transform_17(%arg0: i32) -> (i32, i32, i32) {
    %c0_i32 = arith.constant 0 : i32
    %c0_i32_0 = arith.constant 0 : i32
    %c0_i32_1 = arith.constant 0 : i32
    %c0_i32_2 = arith.constant 0 : i32
    return %c0_i32, %c0_i32_0, %c0_i32_1 : i32, i32, i32
  }
  func.func @transform_18(%arg0: i32) -> (i32, i32, i32) {
    %c0_i32 = arith.constant 0 : i32
    %c0_i32_0 = arith.constant 0 : i32
    %c0_i32_1 = arith.constant 0 : i32
    %c0_i32_2 = arith.constant 0 : i32
    return %c0_i32, %c0_i32_0, %c0_i32_1 : i32, i32, i32
  }
  func.func @transform_19(%arg0: i32) -> (i32, i32) {
    %c0_i32 = arith.constant 0 : i32
    %c0_i32_0 = arith.constant 0 : i32
    %c0_i32_1 = arith.constant 0 : i32
    return %c0_i32, %c0_i32_0 : i32, i32
  }
  func.func @transform_20(%arg0: i32) -> (i32, i32) {
    %c0_i32 = arith.constant 0 : i32
    %c0_i32_0 = arith.constant 0 : i32
    %c0_i32_1 = arith.constant 0 : i32
    return %c0_i32, %c0_i32_0 : i32, i32
  }
  func.func @transform_21(%arg0: i32) -> (i32, i32, i32) {
    %c0_i32 = arith.constant 0 : i32
    %c0_i32_0 = arith.constant 0 : i32
    %c0_i32_1 = arith.constant 0 : i32
    return %arg0, %c0_i32, %c0_i32_0 : i32, i32, i32
  }
}

</mosaic_0001>

<llo_original>
// kernel: tpu_custom_call.1
$region0: #{tpu_custom_call.1}
  #allocation0 [shape = 'u32[]', space=smem, size = 0x4, offset = 0x4, fixed_abs, tag = 'smem constant byte address 0x4 - core index']
  #allocation1 [shape = 'u32[144,128]{1,0:T(1,128)}', space=vmem, size = 0x12000, scoped, tag = 'internal scratch']
  %s0 = inlined_call_operand.vmem [shape: s32[2,8,1], index: 0, kind: input, shape index: {}]
  %s1 = inlined_call_operand.hbm [shape: bf16[64,64], index: 1, kind: input, shape index: {}]
  %s2 = inlined_call_operand.hbm [shape: f32[8,64], index: 2, kind: input, shape index: {}]
  %s3 = inlined_call_operand.vmem [shape: bf16[2,64,64], index: 3, kind: input, shape index: {}]
  %s4 = inlined_call_operand.hbm [shape: f32[2,1,64], index: 4, kind: input, shape index: {}]
  %s5 = inlined_call_operand.vmem [shape: bf16[2,64,64], index: 5, kind: input, shape index: {}]
  %s6 = inlined_call_operand.vmem [shape: f32[2,1,64], index: 6, kind: input, shape index: {}]
  %s7 = inlined_call_operand.vmem [shape: bf16[2,64,64], index: 7, kind: input, shape index: {}]
  %s8 = inlined_call_operand.vmem [shape: f32[2,1,64], index: 8, kind: input, shape index: {}]
  %s9 = inlined_call_operand.vmem [shape: bf16[2,64,64], index: 9, kind: input, shape index: {}]
  %s10 = inlined_call_operand.vmem [shape: f32[2,1,64], index: 10, kind: input, shape index: {}]
  %s11 = inlined_call_operand.vmem [shape: bf16[2,64,256], index: 11, kind: input, shape index: {}]
  %s12 = inlined_call_operand.vmem [shape: f32[2,1,256], index: 12, kind: input, shape index: {}]
  %s13 = inlined_call_operand.vmem [shape: bf16[2,256,64], index: 13, kind: input, shape index: {}]
  %s14 = inlined_call_operand.vmem [shape: f32[2,1,64], index: 14, kind: input, shape index: {}]
  %s15 = inlined_call_operand.vmem [shape: f32[2,1,64], index: 15, kind: input, shape index: {}]
  %s16 = inlined_call_operand.vmem [shape: f32[2,1,64], index: 16, kind: input, shape index: {}]
  %s17 = inlined_call_operand.vmem [shape: f32[2,1,64], index: 17, kind: input, shape index: {}]
  %s18 = inlined_call_operand.vmem [shape: f32[2,1,64], index: 18, kind: input, shape index: {}]
  %s19 = inlined_call_operand.vmem [shape: bf16[64,128], index: 19, kind: input, shape index: {}]
  %s20 = inlined_call_operand.vmem [shape: f32[1,128], index: 20, kind: input, shape index: {}]
  %s21 = inlined_call_operand.hbm [shape: f32[2,1,128], index: 21, kind: output, shape index: {}]
  %s22 = sld [smem:[#allocation0]]
  $region129: #{tpu_custom_call.1} parent=0
    _
  %s24 = ssub.s32 1, %s22
  %s25 = scalar_select 0, %s24, %s22
  $region1: #{tpu_custom_call.1} parent=0
    #allocation2 [shape = 'u8[16384]{0}', space=vmem, size = 0x4000, scoped, tag = 'input window, operand 1, single buffered']
    #allocation3 [shape = 's32[2]{0}', space=sflag, size = 0x8, scoped, tag = 'scoped memory for tpu_custom_call.1']
    #allocation4 [shape = 's32[2]{0}', space=sflag, size = 0x8, scoped, tag = 'scoped memory for tpu_custom_call.1']
    #allocation5 [shape = 'u8[4096]{0}', space=vmem, size = 0x1000, scoped, tag = 'input window, operand 2, single buffered']
    #allocation6 [shape = 's32[1]{0}', space=sflag, size = 0x4, scoped, tag = 'scoped memory for tpu_custom_call.1']
    #allocation7 [shape = 'u8[1024]{0}', space=vmem, size = 0x400, scoped, tag = 'input window, operand 4, single buffered']
    #allocation8 [shape = 'u8[1024]{0}', space=vmem, size = 0x400, scoped, tag = 'output window, operand 0']
    %26 = vsyncpa [#allocation3], 0
    %27 = vsyncpa [#allocation6], 0
    %28 = vsyncpa [#allocation4], 0
    %s29 = scalar_lea.sflag [#allocation4], 1
    %30 = vsyncpa %s29, 0
    loop: start=0, step=1, limit=4
    $region2: #{tpu_custom_call.1} parent=1 // loop_pre_header
      _
    $region3: #{tpu_custom_call.1} parent=1 // loop_header
      %s32 = sphi 0, %s36
      %p33 = scmp.ge.s32.totalorder %s32, 4
      %s42 = sphi 0, %s44
      %s45 = sphi 0, %s42
      %s46 = sphi 0, %s45
      %s62 = sphi 0, %s46
      %s66 = sphi 0, %s66
      %s68 = sphi 0, %s66
      %s69 = sphi 0, %s68
      %s83 = sphi 0, %s69
      %s87 = sphi 0, %s87
      %s89 = sphi 0, %s87
      %s90 = sphi 0, %s89
      %s104 = sphi 0, %s90
      %s108 = sphi 0, %s108
      %s110 = sphi 0, %s108
      %s111 = sphi 0, %s110
      %s125 = sphi 0, %s111
      %s129 = sphi 0, %s129
      %s131 = sphi 0, %s129
      %s132 = sphi 0, %s131
      %s146 = sphi 0, %s132
      %s150 = sphi 0, %s150
      %s152 = sphi 0, %s150
      %s153 = sphi 0, %s152
      %s167 = sphi 0, %s153
      %s171 = sphi 0, %s171
      %s173 = sphi 0, %s171
      %s174 = sphi 0, %s173
      %s188 = sphi 0, %s174
      %s192 = sphi 0, %s192
      %s194 = sphi 0, %s192
      %s195 = sphi 0, %s194
      %s209 = sphi 0, %s195
      %s213 = sphi 0, %s213
      %s215 = sphi 0, %s213
      %s216 = sphi 0, %s215
      %s230 = sphi 0, %s216
      %s234 = sphi 0, %s234
      %s236 = sphi 0, %s234
      %s237 = sphi 0, %s236
      %s251 = sphi 0, %s237
      %s255 = sphi 0, %s255
      %s257 = sphi 0, %s255
      %s258 = sphi 0, %s257
      %s272 = sphi 0, %s258
      %s276 = sphi 0, %s276
      %s278 = sphi 0, %s276
      %s279 = sphi 0, %s278
      %s293 = sphi 0, %s279
      %s297 = sphi 0, %s297
      %s299 = sphi 0, %s297
      %s300 = sphi 0, %s299
      %s314 = sphi 0, %s300
      %s318 = sphi 0, %s318
      %s320 = sphi 0, %s318
      %s321 = sphi 0, %s320
      %s335 = sphi 0, %s321
      %s339 = sphi 0, %s339
      %s341 = sphi 0, %s339
      %s342 = sphi 0, %s341
      %s356 = sphi 0, %s342
      %s360 = sphi 0, %s360
      %s362 = sphi 0, %s360
      %s363 = sphi 0, %s362
      %s377 = sphi 0, %s363
      %s381 = sphi 0, %s381
      %s383 = sphi 0, %s381
      %s384 = sphi 0, %s383
      %s398 = sphi 0, %s384
      %s402 = sphi 0, %s402
      %s404 = sphi 0, %s402
      %s405 = sphi 0, %s404
      %s419 = sphi 0, %s405
      %s423 = sphi 0, %s423
      %s425 = sphi 0, %s423
      %s426 = sphi 0, %s425
      %s440 = sphi 0, %s426
      %s444 = sphi 0, %s444
      %s446 = sphi 0, %s444
      %s447 = sphi 0, %s446
      %s461 = sphi 0, %s447
      %s465 = sphi 0, %s465
      %s467 = sphi 0, %s465
      %s468 = sphi 0, %s467
      %s482 = sphi 0, %s468
      %s488 = sphi 0, %s490
      %s491 = sphi 0, %s488
      %s492 = sphi 0, %s491
      %s508 = sphi 0, %s492
    $region4: #{tpu_custom_call.1} parent=1 // loop_header_branch
      %35 = sbr.rel (%p33) target = $region8
    $region5: #{tpu_custom_call.1} parent=1 // loop_body
      %s37 = ssub.s32 %s32, 1
      %s38 = ssub.s32 %s32, 2
      %s39 = sadd.s32 %s32, 1
      %s40 = ssub.s32 %s32, %s39
      %p41 = scmp.eq.s32.totalorder %s40, 0
      %s43 = sadd.s32 %s42, 1
      %s44 = scalar_select %p41, %s42, %s43
      %p47 = pneg %p41
      %p48 = scmp.eq.s32.totalorder %s32, 1
      %p49 = por %p47, %p48
      %p50 = scmp.ne.s32.totalorder %s42, %s45
      %p51 = scmp.eq.s32.totalorder %s32, 0
      %p52 = por %p50, %p51
      %p53 = scmp.ne.s32.totalorder %s42, %s45
      %p54 = scmp.eq.s32.totalorder %s37, 1
      %p55 = por %p53, %p54
      %p56 = scmp.ne.s32.totalorder %s45, %s46
      %p57 = scmp.eq.s32.totalorder %s37, 0
      %p58 = por %p56, %p57
      %p59 = scmp.ne.s32.totalorder %s45, %s46
      %p60 = scmp.eq.s32.totalorder %s38, 1
      %p61 = por %p59, %p60
      %p63 = scmp.ne.s32.totalorder %s46, %s62
      %p64 = scmp.eq.s32.totalorder %s38, 0
      %p65 = por %p63, %p64
      %s67 = sadd.s32 %s66, 1
      %p70 = scmp.eq.s32.totalorder %s32, 1
      %p71 = scmp.ne.s32.totalorder %s66, %s68
      %p72 = scmp.eq.s32.totalorder %s32, 0
      %p73 = por %p71, %p72
      %p74 = scmp.ne.s32.totalorder %s66, %s68
      %p75 = scmp.eq.s32.totalorder %s37, 1
      %p76 = por %p74, %p75
      %p77 = scmp.ne.s32.totalorder %s68, %s69
      %p78 = scmp.eq.s32.totalorder %s37, 0
      %p79 = por %p77, %p78
      %p80 = scmp.ne.s32.totalorder %s68, %s69
      %p81 = scmp.eq.s32.totalorder %s38, 1
      %p82 = por %p80, %p81
      %p84 = scmp.ne.s32.totalorder %s69, %s83
      %p85 = scmp.eq.s32.totalorder %s38, 0
      %p86 = por %p84, %p85
      %s88 = sadd.s32 %s87, 1
      %p91 = scmp.eq.s32.totalorder %s32, 1
      %p92 = scmp.ne.s32.totalorder %s87, %s89
      %p93 = scmp.eq.s32.totalorder %s32, 0
      %p94 = por %p92, %p93
      %p95 = scmp.ne.s32.totalorder %s87, %s89
      %p96 = scmp.eq.s32.totalorder %s37, 1
      %p97 = por %p95, %p96
      %p98 = scmp.ne.s32.totalorder %s89, %s90
      %p99 = scmp.eq.s32.totalorder %s37, 0
      %p100 = por %p98, %p99
      %p101 = scmp.ne.s32.totalorder %s89, %s90
      %p102 = scmp.eq.s32.totalorder %s38, 1
      %p103 = por %p101, %p102
      %p105 = scmp.ne.s32.totalorder %s90, %s104
      %p106 = scmp.eq.s32.totalorder %s38, 0
      %p107 = por %p105, %p106
      %s109 = sadd.s32 %s108, 1
      %p112 = scmp.eq.s32.totalorder %s32, 1
      %p113 = scmp.ne.s32.totalorder %s108, %s110
      %p114 = scmp.eq.s32.totalorder %s32, 0
      %p115 = por %p113, %p114
      %p116 = scmp.ne.s32.totalorder %s108, %s110
      %p117 = scmp.eq.s32.totalorder %s37, 1
      %p118 = por %p116, %p117
      %p119 = scmp.ne.s32.totalorder %s110, %s111
      %p120 = scmp.eq.s32.totalorder %s37, 0
      %p121 = por %p119, %p120
      %p122 = scmp.ne.s32.totalorder %s110, %s111
      %p123 = scmp.eq.s32.totalorder %s38, 1
      %p124 = por %p122, %p123
      %p126 = scmp.ne.s32.totalorder %s111, %s125
      %p127 = scmp.eq.s32.totalorder %s38, 0
      %p128 = por %p126, %p127
      %s130 = sadd.s32 %s129, 1
      %p133 = scmp.eq.s32.totalorder %s32, 1
      %p134 = scmp.ne.s32.totalorder %s129, %s131
      %p135 = scmp.eq.s32.totalorder %s32, 0
      %p136 = por %p134, %p135
      %p137 = scmp.ne.s32.totalorder %s129, %s131
      %p138 = scmp.eq.s32.totalorder %s37, 1
      %p139 = por %p137, %p138
      %p140 = scmp.ne.s32.totalorder %s131, %s132
      %p141 = scmp.eq.s32.totalorder %s37, 0
      %p142 = por %p140, %p141
      %p143 = scmp.ne.s32.totalorder %s131, %s132
      %p144 = scmp.eq.s32.totalorder %s38, 1
      %p145 = por %p143, %p144
      %p147 = scmp.ne.s32.totalorder %s132, %s146
      %p148 = scmp.eq.s32.totalorder %s38, 0
      %p149 = por %p147, %p148
      %s151 = sadd.s32 %s150, 1
      %p154 = scmp.eq.s32.totalorder %s32, 1
      %p155 = scmp.ne.s32.totalorder %s150, %s152
      %p156 = scmp.eq.s32.totalorder %s32, 0
      %p157 = por %p155, %p156
      %p158 = scmp.ne.s32.totalorder %s150, %s152
      %p159 = scmp.eq.s32.totalorder %s37, 1
      %p160 = por %p158, %p159
      %p161 = scmp.ne.s32.totalorder %s152, %s153
      %p162 = scmp.eq.s32.totalorder %s37, 0
      %p163 = por %p161, %p162
      %p164 = scmp.ne.s32.totalorder %s152, %s153
      %p165 = scmp.eq.s32.totalorder %s38, 1
      %p166 = por %p164, %p165
      %p168 = scmp.ne.s32.totalorder %s153, %s167
      %p169 = scmp.eq.s32.totalorder %s38, 0
      %p170 = por %p168, %p169
      %s172 = sadd.s32 %s171, 1
      %p175 = scmp.eq.s32.totalorder %s32, 1
      %p176 = scmp.ne.s32.totalorder %s171, %s173
      %p177 = scmp.eq.s32.totalorder %s32, 0
      %p178 = por %p176, %p177
      %p179 = scmp.ne.s32.totalorder %s171, %s173
      %p180 = scmp.eq.s32.totalorder %s37, 1
      %p181 = por %p179, %p180
      %p182 = scmp.ne.s32.totalorder %s173, %s174
      %p183 = scmp.eq.s32.totalorder %s37, 0
      %p184 = por %p182, %p183
      %p185 = scmp.ne.s32.totalorder %s173, %s174
      %p186 = scmp.eq.s32.totalorder %s38, 1
      %p187 = por %p185, %p186
      %p189 = scmp.ne.s32.totalorder %s174, %s188
      %p190 = scmp.eq.s32.totalorder %s38, 0
      %p191 = por %p189, %p190
      %s193 = sadd.s32 %s192, 1
      %p196 = scmp.eq.s32.totalorder %s32, 1
      %p197 = scmp.ne.s32.totalorder %s192, %s194
      %p198 = scmp.eq.s32.totalorder %s32, 0
      %p199 = por %p197, %p198
      %p200 = scmp.ne.s32.totalorder %s192, %s194
      %p201 = scmp.eq.s32.totalorder %s37, 1
      %p202 = por %p200, %p201
      %p203 = scmp.ne.s32.totalorder %s194, %s195
      %p204 = scmp.eq.s32.totalorder %s37, 0
      %p205 = por %p203, %p204
      %p206 = scmp.ne.s32.totalorder %s194, %s195
      %p207 = scmp.eq.s32.totalorder %s38, 1
      %p208 = por %p206, %p207
      %p210 = scmp.ne.s32.totalorder %s195, %s209
      %p211 = scmp.eq.s32.totalorder %s38, 0
      %p212 = por %p210, %p211
      %s214 = sadd.s32 %s213, 1
      %p217 = scmp.eq.s32.totalorder %s32, 1
      %p218 = scmp.ne.s32.totalorder %s213, %s215
      %p219 = scmp.eq.s32.totalorder %s32, 0
      %p220 = por %p218, %p219
      %p221 = scmp.ne.s32.totalorder %s213, %s215
      %p222 = scmp.eq.s32.totalorder %s37, 1
      %p223 = por %p221, %p222
      %p224 = scmp.ne.s32.totalorder %s215, %s216
      %p225 = scmp.eq.s32.totalorder %s37, 0
      %p226 = por %p224, %p225
      %p227 = scmp.ne.s32.totalorder %s215, %s216
      %p228 = scmp.eq.s32.totalorder %s38, 1
      %p229 = por %p227, %p228
      %p231 = scmp.ne.s32.totalorder %s216, %s230
      %p232 = scmp.eq.s32.totalorder %s38, 0
      %p233 = por %p231, %p232
      %s235 = sadd.s32 %s234, 1
      %p238 = scmp.eq.s32.totalorder %s32, 1
      %p239 = scmp.ne.s32.totalorder %s234, %s236
      %p240 = scmp.eq.s32.totalorder %s32, 0
      %p241 = por %p239, %p240
      %p242 = scmp.ne.s32.totalorder %s234, %s236
      %p243 = scmp.eq.s32.totalorder %s37, 1
      %p244 = por %p242, %p243
      %p245 = scmp.ne.s32.totalorder %s236, %s237
      %p246 = scmp.eq.s32.totalorder %s37, 0
      %p247 = por %p245, %p246
      %p248 = scmp.ne.s32.totalorder %s236, %s237
      %p249 = scmp.eq.s32.totalorder %s38, 1
      %p250 = por %p248, %p249
      %p252 = scmp.ne.s32.totalorder %s237, %s251
      %p253 = scmp.eq.s32.totalorder %s38, 0
      %p254 = por %p252, %p253
      %s256 = sadd.s32 %s255, 1
      %p259 = scmp.eq.s32.totalorder %s32, 1
      %p260 = scmp.ne.s32.totalorder %s255, %s257
      %p261 = scmp.eq.s32.totalorder %s32, 0
      %p262 = por %p260, %p261
      %p263 = scmp.ne.s32.totalorder %s255, %s257
      %p264 = scmp.eq.s32.totalorder %s37, 1
      %p265 = por %p263, %p264
      %p266 = scmp.ne.s32.totalorder %s257, %s258
      %p267 = scmp.eq.s32.totalorder %s37, 0
      %p268 = por %p266, %p267
      %p269 = scmp.ne.s32.totalorder %s257, %s258
      %p270 = scmp.eq.s32.totalorder %s38, 1
      %p271 = por %p269, %p270
      %p273 = scmp.ne.s32.totalorder %s258, %s272
      %p274 = scmp.eq.s32.totalorder %s38, 0
      %p275 = por %p273, %p274
      %s277 = sadd.s32 %s276, 1
      %p280 = scmp.eq.s32.totalorder %s32, 1
      %p281 = scmp.ne.s32.totalorder %s276, %s278
      %p282 = scmp.eq.s32.totalorder %s32, 0
      %p283 = por %p281, %p282
      %p284 = scmp.ne.s32.totalorder %s276, %s278
      %p285 = scmp.eq.s32.totalorder %s37, 1
      %p286 = por %p284, %p285
      %p287 = scmp.ne.s32.totalorder %s278, %s279
      %p288 = scmp.eq.s32.totalorder %s37, 0
      %p289 = por %p287, %p288
      %p290 = scmp.ne.s32.totalorder %s278, %s279
      %p291 = scmp.eq.s32.totalorder %s38, 1
      %p292 = por %p290, %p291
      %p294 = scmp.ne.s32.totalorder %s279, %s293
      %p295 = scmp.eq.s32.totalorder %s38, 0
      %p296 = por %p294, %p295
      %s298 = sadd.s32 %s297, 1
      %p301 = scmp.eq.s32.totalorder %s32, 1
      %p302 = scmp.ne.s32.totalorder %s297, %s299
      %p303 = scmp.eq.s32.totalorder %s32, 0
      %p304 = por %p302, %p303
      %p305 = scmp.ne.s32.totalorder %s297, %s299
      %p306 = scmp.eq.s32.totalorder %s37, 1
      %p307 = por %p305, %p306
      %p308 = scmp.ne.s32.totalorder %s299, %s300
      %p309 = scmp.eq.s32.totalorder %s37, 0
      %p310 = por %p308, %p309
      %p311 = scmp.ne.s32.totalorder %s299, %s300
      %p312 = scmp.eq.s32.totalorder %s38, 1
      %p313 = por %p311, %p312
      %p315 = scmp.ne.s32.totalorder %s300, %s314
      %p316 = scmp.eq.s32.totalorder %s38, 0
      %p317 = por %p315, %p316
      %s319 = sadd.s32 %s318, 1
      %p322 = scmp.eq.s32.totalorder %s32, 1
      %p323 = scmp.ne.s32.totalorder %s318, %s320
      %p324 = scmp.eq.s32.totalorder %s32, 0
      %p325 = por %p323, %p324
      %p326 = scmp.ne.s32.totalorder %s318, %s320
      %p327 = scmp.eq.s32.totalorder %s37, 1
      %p328 = por %p326, %p327
      %p329 = scmp.ne.s32.totalorder %s320, %s321
      %p330 = scmp.eq.s32.totalorder %s37, 0
      %p331 = por %p329, %p330
      %p332 = scmp.ne.s32.totalorder %s320, %s321
      %p333 = scmp.eq.s32.totalorder %s38, 1
      %p334 = por %p332, %p333
      %p336 = scmp.ne.s32.totalorder %s321, %s335
      %p337 = scmp.eq.s32.totalorder %s38, 0
      %p338 = por %p336, %p337
      %s340 = sadd.s32 %s339, 1
      %p343 = scmp.eq.s32.totalorder %s32, 1
      %p344 = scmp.ne.s32.totalorder %s339, %s341
      %p345 = scmp.eq.s32.totalorder %s32, 0
      %p346 = por %p344, %p345
      %p347 = scmp.ne.s32.totalorder %s339, %s341
      %p348 = scmp.eq.s32.totalorder %s37, 1
      %p349 = por %p347, %p348
      %p350 = scmp.ne.s32.totalorder %s341, %s342
      %p351 = scmp.eq.s32.totalorder %s37, 0
      %p352 = por %p350, %p351
      %p353 = scmp.ne.s32.totalorder %s341, %s342
      %p354 = scmp.eq.s32.totalorder %s38, 1
      %p355 = por %p353, %p354
      %p357 = scmp.ne.s32.totalorder %s342, %s356
      %p358 = scmp.eq.s32.totalorder %s38, 0
      %p359 = por %p357, %p358
      %s361 = sadd.s32 %s360, 1
      %p364 = scmp.eq.s32.totalorder %s32, 1
      %p365 = scmp.ne.s32.totalorder %s360, %s362
      %p366 = scmp.eq.s32.totalorder %s32, 0
      %p367 = por %p365, %p366
      %p368 = scmp.ne.s32.totalorder %s360, %s362
      %p369 = scmp.eq.s32.totalorder %s37, 1
      %p370 = por %p368, %p369
      %p371 = scmp.ne.s32.totalorder %s362, %s363
      %p372 = scmp.eq.s32.totalorder %s37, 0
      %p373 = por %p371, %p372
      %p374 = scmp.ne.s32.totalorder %s362, %s363
      %p375 = scmp.eq.s32.totalorder %s38, 1
      %p376 = por %p374, %p375
      %p378 = scmp.ne.s32.totalorder %s363, %s377
      %p379 = scmp.eq.s32.totalorder %s38, 0
      %p380 = por %p378, %p379
      %s382 = sadd.s32 %s381, 1
      %p385 = scmp.eq.s32.totalorder %s32, 1
      %p386 = scmp.ne.s32.totalorder %s381, %s383
      %p387 = scmp.eq.s32.totalorder %s32, 0
      %p388 = por %p386, %p387
      %p389 = scmp.ne.s32.totalorder %s381, %s383
      %p390 = scmp.eq.s32.totalorder %s37, 1
      %p391 = por %p389, %p390
      %p392 = scmp.ne.s32.totalorder %s383, %s384
      %p393 = scmp.eq.s32.totalorder %s37, 0
      %p394 = por %p392, %p393
      %p395 = scmp.ne.s32.totalorder %s383, %s384
      %p396 = scmp.eq.s32.totalorder %s38, 1
      %p397 = por %p395, %p396
      %p399 = scmp.ne.s32.totalorder %s384, %s398
      %p400 = scmp.eq.s32.totalorder %s38, 0
      %p401 = por %p399, %p400
      %s403 = sadd.s32 %s402, 1
      %p406 = scmp.eq.s32.totalorder %s32, 1
      %p407 = scmp.ne.s32.totalorder %s402, %s404
      %p408 = scmp.eq.s32.totalorder %s32, 0
      %p409 = por %p407, %p408
      %p410 = scmp.ne.s32.totalorder %s402, %s404
      %p411 = scmp.eq.s32.totalorder %s37, 1
      %p412 = por %p410, %p411
      %p413 = scmp.ne.s32.totalorder %s404, %s405
      %p414 = scmp.eq.s32.totalorder %s37, 0
      %p415 = por %p413, %p414
      %p416 = scmp.ne.s32.totalorder %s404, %s405
      %p417 = scmp.eq.s32.totalorder %s38, 1
      %p418 = por %p416, %p417
      %p420 = scmp.ne.s32.totalorder %s405, %s419
      %p421 = scmp.eq.s32.totalorder %s38, 0
      %p422 = por %p420, %p421
      %s424 = sadd.s32 %s423, 1
      %p427 = scmp.eq.s32.totalorder %s32, 1
      %p428 = scmp.ne.s32.totalorder %s423, %s425
      %p429 = scmp.eq.s32.totalorder %s32, 0
      %p430 = por %p428, %p429
      %p431 = scmp.ne.s32.totalorder %s423, %s425
      %p432 = scmp.eq.s32.totalorder %s37, 1
      %p433 = por %p431, %p432
      %p434 = scmp.ne.s32.totalorder %s425, %s426
      %p435 = scmp.eq.s32.totalorder %s37, 0
      %p436 = por %p434, %p435
      %p437 = scmp.ne.s32.totalorder %s425, %s426
      %p438 = scmp.eq.s32.totalorder %s38, 1
      %p439 = por %p437, %p438
      %p441 = scmp.ne.s32.totalorder %s426, %s440
      %p442 = scmp.eq.s32.totalorder %s38, 0
      %p443 = por %p441, %p442
      %s445 = sadd.s32 %s444, 1
      %p448 = scmp.eq.s32.totalorder %s32, 1
      %p449 = scmp.ne.s32.totalorder %s444, %s446
      %p450 = scmp.eq.s32.totalorder %s32, 0
      %p451 = por %p449, %p450
      %p452 = scmp.ne.s32.totalorder %s444, %s446
      %p453 = scmp.eq.s32.totalorder %s37, 1
      %p454 = por %p452, %p453
      %p455 = scmp.ne.s32.totalorder %s446, %s447
      %p456 = scmp.eq.s32.totalorder %s37, 0
      %p457 = por %p455, %p456
      %p458 = scmp.ne.s32.totalorder %s446, %s447
      %p459 = scmp.eq.s32.totalorder %s38, 1
      %p460 = por %p458, %p459
      %p462 = scmp.ne.s32.totalorder %s447, %s461
      %p463 = scmp.eq.s32.totalorder %s38, 0
      %p464 = por %p462, %p463
      %s466 = sadd.s32 %s465, 1
      %p469 = scmp.eq.s32.totalorder %s32, 1
      %p470 = scmp.ne.s32.totalorder %s465, %s467
      %p471 = scmp.eq.s32.totalorder %s32, 0
      %p472 = por %p470, %p471
      %p473 = scmp.ne.s32.totalorder %s465, %s467
      %p474 = scmp.eq.s32.totalorder %s37, 1
      %p475 = por %p473, %p474
      %p476 = scmp.ne.s32.totalorder %s467, %s468
      %p477 = scmp.eq.s32.totalorder %s37, 0
      %p478 = por %p476, %p477
      %p479 = scmp.ne.s32.totalorder %s467, %s468
      %p480 = scmp.eq.s32.totalorder %s38, 1
      %p481 = por %p479, %p480
      %p483 = scmp.ne.s32.totalorder %s468, %s482
      %p484 = scmp.eq.s32.totalorder %s38, 0
      %p485 = por %p483, %p484
      %s486 = ssub.s32 %s32, %s39
      %p487 = scmp.eq.s32.totalorder %s486, 0
      %s489 = sadd.s32 %s488, 1
      %s490 = scalar_select %p487, %s488, %s489
      %p493 = pneg %p487
      %p494 = scmp.eq.s32.totalorder %s32, 1
      %p495 = por %p493, %p494
      %p496 = scmp.ne.s32.totalorder %s488, %s491
      %p497 = scmp.eq.s32.totalorder %s32, 0
      %p498 = por %p496, %p497
      %p499 = scmp.ne.s32.totalorder %s488, %s491
      %p500 = scmp.eq.s32.totalorder %s37, 1
      %p501 = por %p499, %p500
      %p502 = scmp.ne.s32.totalorder %s491, %s492
      %p503 = scmp.eq.s32.totalorder %s37, 0
      %p504 = por %p502, %p503
      %p505 = scmp.ne.s32.totalorder %s491, %s492
      %p506 = scmp.eq.s32.totalorder %s38, 1
      %p507 = por %p505, %p506
      %p509 = scmp.ne.s32.totalorder %s492, %s508
      %p510 = scmp.eq.s32.totalorder %s38, 0
      %p511 = por %p509, %p510
      %p512 = scmp.le.s32.totalorder 1, %s32
      %p513 = scmp.lt.s32.totalorder %s32, 3
      %p514 = pnand %p512, %p513
      %p515 = pneg %p514
      // Predicated region
      $region9: #{tpu_custom_call.1} parent=5 // pred_check
        _
      $region10: #{tpu_custom_call.1} parent=5 // pred_check_branch
        %517 = sbr.rel (%p514) target = $region12
      $region11: #{tpu_custom_call.1} parent=5 // pred_region
        %s518 = ssub.s32 %s32, 1
        // Predicated region
        $region13: #{tpu_custom_call.1} parent=11 // pred_check
          %p519 = pneg %p79
        $region14: #{tpu_custom_call.1} parent=11 // pred_check_branch
          %521 = sbr.rel (%p519) target = $region16
        $region15: #{tpu_custom_call.1} parent=11 // pred_region
          %s523 = ssub.s32 512, 512
          %524 = vsyncadd [#allocation3], %s523
          %s525 = sshll.u32 [#allocation2], 4
          %s526 = int_to_ptr.vmem [resolvable:$true] %s525
          %531 = dma.hbm_to_vmem [thread:$0]  %s1, 512, %s526, [#allocation3], 64, 64, 4
        $region16: #{tpu_custom_call.1} parent=11 // pred_fallthru
          _
        // Predicated region
        $region17: #{tpu_custom_call.1} parent=11 // pred_check
          %p532 = pneg %p100
        $region18: #{tpu_custom_call.1} parent=11 // pred_check_branch
          %534 = sbr.rel (%p532) target = $region20
        $region19: #{tpu_custom_call.1} parent=11 // pred_region
          %s536 = ssub.s32 128, 128
          %537 = vsyncadd [#allocation6], %s536
          %s539 = sshll.u32 [#allocation5], 4
          %s540 = int_to_ptr.vmem [resolvable:$true] %s539
          %542 = dma.hbm_to_vmem [thread:$0]  %s2, 128, %s540, [#allocation6]
        $region20: #{tpu_custom_call.1} parent=11 // pred_fallthru
          _
        // Predicated region
        $region21: #{tpu_custom_call.1} parent=11 // pred_check
          %p543 = pneg %p121
        $region22: #{tpu_custom_call.1} parent=11 // pred_check_branch
          %545 = sbr.rel (%p543) target = $region24
        $region23: #{tpu_custom_call.1} parent=11 // pred_region
          _
        $region24: #{tpu_custom_call.1} parent=11 // pred_fallthru
          _
        // Predicated region
        $region25: #{tpu_custom_call.1} parent=11 // pred_check
          %p546 = pneg %p142
        $region26: #{tpu_custom_call.1} parent=11 // pred_check_branch
          %548 = sbr.rel (%p546) target = $region28
        $region27: #{tpu_custom_call.1} parent=11 // pred_region
          %s550 = ssub.s32 32, 32
          %551 = vsyncadd [#allocation6], %s550
          %s552 = sshll.u32 [#allocation7], 4
          %s553 = int_to_ptr.vmem [resolvable:$true] %s552
          %558 = dma.hbm_to_vmem [thread:$0]  %s4, 32, %s553, [#allocation6], 16, 16, 1
        $region28: #{tpu_custom_call.1} parent=11 // pred_fallthru
          _
        // Predicated region
        $region29: #{tpu_custom_call.1} parent=11 // pred_check
          %p559 = pneg %p163
        $region30: #{tpu_custom_call.1} parent=11 // pred_check_branch
          %561 = sbr.rel (%p559) target = $region32
        $region31: #{tpu_custom_call.1} parent=11 // pred_region
          _
        $region32: #{tpu_custom_call.1} parent=11 // pred_fallthru
          _
        // Predicated region
        $region33: #{tpu_custom_call.1} parent=11 // pred_check
          %p562 = pneg %p184
        $region34: #{tpu_custom_call.1} parent=11 // pred_check_branch
          %564 = sbr.rel (%p562) target = $region36
        $region35: #{tpu_custom_call.1} parent=11 // pred_region
          _
        $region36: #{tpu_custom_call.1} parent=11 // pred_fallthru
          _
        // Predicated region
        $region37: #{tpu_custom_call.1} parent=11 // pred_check
          %p565 = pneg %p205
        $region38: #{tpu_custom_call.1} parent=11 // pred_check_branch
          %567 = sbr.rel (%p565) target = $region40
        $region39: #{tpu_custom_call.1} parent=11 // pred_region
          _
        $region40: #{tpu_custom_call.1} parent=11 // pred_fallthru
          _
        // Predicated region
        $region41: #{tpu_custom_call.1} parent=11 // pred_check
          %p568 = pneg %p226
        $region42: #{tpu_custom_call.1} parent=11 // pred_check_branch
          %570 = sbr.rel (%p568) target = $region44
        $region43: #{tpu_custom_call.1} parent=11 // pred_region
          _
        $region44: #{tpu_custom_call.1} parent=11 // pred_fallthru
          _
        // Predicated region
        $region45: #{tpu_custom_call.1} parent=11 // pred_check
          %p571 = pneg %p247
        $region46: #{tpu_custom_call.1} parent=11 // pred_check_branch
          %573 = sbr.rel (%p571) target = $region48
        $region47: #{tpu_custom_call.1} parent=11 // pred_region
          _
        $region48: #{tpu_custom_call.1} parent=11 // pred_fallthru
          _
        // Predicated region
        $region49: #{tpu_custom_call.1} parent=11 // pred_check
          %p574 = pneg %p268
        $region50: #{tpu_custom_call.1} parent=11 // pred_check_branch
          %576 = sbr.rel (%p574) target = $region52
        $region51: #{tpu_custom_call.1} parent=11 // pred_region
          _
        $region52: #{tpu_custom_call.1} parent=11 // pred_fallthru
          _
        // Predicated region
        $region53: #{tpu_custom_call.1} parent=11 // pred_check
          %p577 = pneg %p289
        $region54: #{tpu_custom_call.1} parent=11 // pred_check_branch
          %579 = sbr.rel (%p577) target = $region56
        $region55: #{tpu_custom_call.1} parent=11 // pred_region
          _
        $region56: #{tpu_custom_call.1} parent=11 // pred_fallthru
          _
        // Predicated region
        $region57: #{tpu_custom_call.1} parent=11 // pred_check
          %p580 = pneg %p310
        $region58: #{tpu_custom_call.1} parent=11 // pred_check_branch
          %582 = sbr.rel (%p580) target = $region60
        $region59: #{tpu_custom_call.1} parent=11 // pred_region
          _
        $region60: #{tpu_custom_call.1} parent=11 // pred_fallthru
          _
        // Predicated region
        $region61: #{tpu_custom_call.1} parent=11 // pred_check
          %p583 = pneg %p331
        $region62: #{tpu_custom_call.1} parent=11 // pred_check_branch
          %585 = sbr.rel (%p583) target = $region64
        $region63: #{tpu_custom_call.1} parent=11 // pred_region
          _
        $region64: #{tpu_custom_call.1} parent=11 // pred_fallthru
          _
        // Predicated region
        $region65: #{tpu_custom_call.1} parent=11 // pred_check
          %p586 = pneg %p352
        $region66: #{tpu_custom_call.1} parent=11 // pred_check_branch
          %588 = sbr.rel (%p586) target = $region68
        $region67: #{tpu_custom_call.1} parent=11 // pred_region
          _
        $region68: #{tpu_custom_call.1} parent=11 // pred_fallthru
          _
        // Predicated region
        $region69: #{tpu_custom_call.1} parent=11 // pred_check
          %p589 = pneg %p373
        $region70: #{tpu_custom_call.1} parent=11 // pred_check_branch
          %591 = sbr.rel (%p589) target = $region72
        $region71: #{tpu_custom_call.1} parent=11 // pred_region
          _
        $region72: #{tpu_custom_call.1} parent=11 // pred_fallthru
          _
        // Predicated region
        $region73: #{tpu_custom_call.1} parent=11 // pred_check
          %p592 = pneg %p394
        $region74: #{tpu_custom_call.1} parent=11 // pred_check_branch
          %594 = sbr.rel (%p592) target = $region76
        $region75: #{tpu_custom_call.1} parent=11 // pred_region
          _
        $region76: #{tpu_custom_call.1} parent=11 // pred_fallthru
          _
        // Predicated region
        $region77: #{tpu_custom_call.1} parent=11 // pred_check
          %p595 = pneg %p415
        $region78: #{tpu_custom_call.1} parent=11 // pred_check_branch
          %597 = sbr.rel (%p595) target = $region80
        $region79: #{tpu_custom_call.1} parent=11 // pred_region
          _
        $region80: #{tpu_custom_call.1} parent=11 // pred_fallthru
          _
        // Predicated region
        $region81: #{tpu_custom_call.1} parent=11 // pred_check
          %p598 = pneg %p436
        $region82: #{tpu_custom_call.1} parent=11 // pred_check_branch
          %600 = sbr.rel (%p598) target = $region84
        $region83: #{tpu_custom_call.1} parent=11 // pred_region
          _
        $region84: #{tpu_custom_call.1} parent=11 // pred_fallthru
          _
        // Predicated region
        $region85: #{tpu_custom_call.1} parent=11 // pred_check
          %p601 = pneg %p457
        $region86: #{tpu_custom_call.1} parent=11 // pred_check_branch
          %603 = sbr.rel (%p601) target = $region88
        $region87: #{tpu_custom_call.1} parent=11 // pred_region
          _
        $region88: #{tpu_custom_call.1} parent=11 // pred_fallthru
          _
        // Predicated region
        $region89: #{tpu_custom_call.1} parent=11 // pred_check
          %p604 = pneg %p478
        $region90: #{tpu_custom_call.1} parent=11 // pred_check_branch
          %606 = sbr.rel (%p604) target = $region92
        $region91: #{tpu_custom_call.1} parent=11 // pred_region
          _
        $region92: #{tpu_custom_call.1} parent=11 // pred_fallthru
          _
      $region12: #{tpu_custom_call.1} parent=5 // pred_fallthru
        _
      %p607 = scmp.lt.s32.totalorder %s32, 2
      // Predicated region
      $region93: #{tpu_custom_call.1} parent=5 // pred_check
        %p608 = pneg %p607
      $region94: #{tpu_custom_call.1} parent=5 // pred_check_branch
        %610 = sbr.rel (%p608) target = $region96
      $region95: #{tpu_custom_call.1} parent=5 // pred_region
        // Predicated region
        $region97: #{tpu_custom_call.1} parent=95 // pred_check
          %p611 = pneg %p52
        $region98: #{tpu_custom_call.1} parent=95 // pred_check_branch
          %613 = sbr.rel (%p611) target = $region100
        $region99: #{tpu_custom_call.1} parent=95 // pred_region
          %p614 = scmp.lt.s32.totalorder %s32, 1
          %s615 = scalar_select %p614, %s32, 1
          %s616 = smul.addr %s615, 8
          %s617 = scalar_lea.vmem %s0, %s616
        $region100: #{tpu_custom_call.1} parent=95 // pred_fallthru
          _
      $region96: #{tpu_custom_call.1} parent=5 // pred_fallthru
        _
      %p618 = scmp.le.s32.totalorder 1, %s32
      %p619 = scmp.lt.s32.totalorder %s32, 3
      %p620 = pnand %p618, %p619
      %p621 = pneg %p620
      // Predicated region
      $region101: #{tpu_custom_call.1} parent=5 // pred_check
        _
      $region102: #{tpu_custom_call.1} parent=5 // pred_check_branch
        %623 = sbr.rel (%p620) target = $region104
      $region103: #{tpu_custom_call.1} parent=5 // pred_region
        %s624 = ssub.s32 %s32, 1
        // Predicated region
        $region105: #{tpu_custom_call.1} parent=103 // pred_check
          %p625 = pneg %p79
        $region106: #{tpu_custom_call.1} parent=103 // pred_check_branch
          %627 = sbr.rel (%p625) target = $region108
        $region107: #{tpu_custom_call.1} parent=103 // pred_region
          %628 = dma.done [#allocation3], 512
        $region108: #{tpu_custom_call.1} parent=103 // pred_fallthru
          _
        // Predicated region
        $region109: #{tpu_custom_call.1} parent=103 // pred_check
          %p629 = pneg %p100
        $region110: #{tpu_custom_call.1} parent=103 // pred_check_branch
          %631 = sbr.rel (%p629) target = $region112
        $region111: #{tpu_custom_call.1} parent=103 // pred_region
          %632 = dma.done [#allocation6], 128
        $region112: #{tpu_custom_call.1} parent=103 // pred_fallthru
          _
        // Predicated region
        $region113: #{tpu_custom_call.1} parent=103 // pred_check
          %p633 = pneg %p142
        $region114: #{tpu_custom_call.1} parent=103 // pred_check_branch
          %635 = sbr.rel (%p633) target = $region116
        $region115: #{tpu_custom_call.1} parent=103 // pred_region
          %636 = dma.done [#allocation6], 32
        $region116: #{tpu_custom_call.1} parent=103 // pred_fallthru
          _
        %p637 = scmp.lt.s32.totalorder %s37, 1
        %s638 = scalar_select %p637, %s37, 1
        %s639 = smul.addr %s638, 8
        %s640 = scalar_lea.vmem %s0, %s639
        %p641 = pneg %p58
        %p642 = pneg %p55
        %p643 = pneg %p79
        %p644 = pneg %p76
        %p645 = pneg %p100
        %p646 = pneg %p97
        %p647 = pneg %p121
        %p648 = pneg %p118
        %p649 = pneg %p142
        %p650 = pneg %p139
        %p651 = pneg %p163
        %p652 = pneg %p160
        %p653 = pneg %p184
        %p654 = pneg %p181
        %p655 = pneg %p205
        %p656 = pneg %p202
        %p657 = pneg %p226
        %p658 = pneg %p223
        %p659 = pneg %p247
        %p660 = pneg %p244
        %p661 = pneg %p268
        %p662 = pneg %p265
        %p663 = pneg %p289
        %p664 = pneg %p286
        %p665 = pneg %p310
        %p666 = pneg %p307
        %p667 = pneg %p331
        %p668 = pneg %p328
        %p669 = pneg %p352
        %p670 = pneg %p349
        %p671 = pneg %p373
        %p672 = pneg %p370
        %p673 = pneg %p394
        %p674 = pneg %p391
        %p675 = pneg %p415
        %p676 = pneg %p412
        %p677 = pneg %p436
        %p678 = pneg %p433
        %p679 = pneg %p457
        %p680 = pneg %p454
        %p681 = pneg %p478
        %p682 = pneg %p475
        %p683 = pneg %p504
        %p684 = pneg %p501
        %s685 = sand.u32 %s491, 1
        %s686 = scalar_lea.sflag [#allocation4], %s685
        %s687 = sand.u32 %s491, 1
        %s688 = scalar_lea.vmem [#allocation8], %s687
        %p689 = scmp.lt.s32.totalorder %s37, 1
        %s690 = scalar_select %p689, %s37, 1
        %s691 = smul.addr %s690, 8
        %s692 = scalar_lea.vmem %s0, %s691
        %v694 = vld [vmem:[%s692] sm:$0xff]
        %v695 = vlaneseq
        %v696 = vand.u32 %v695, 127
        %697 = vset.pattern.permute.xlu0 0
        %698 = vperm.xlu0 %697, %v694
        %v699 = vpop.permute.xlu0 %698
        %vm700 = vcmp.eq.s32.totalorder %v699, %v696
        %v701 = vsel %vm700, 1, 0
        %v702 = vcvt.s32.f32 %v701
        %v703 = vpack.c.bf16 %v702, %v702
        %v704 = vld [vmem:[#allocation2] sm:$0xf]
        %v705 = vld [vmem:[#allocation2 + $0x4] sm:$0xf]
        %v706 = vld [vmem:[#allocation2 + $0x8] sm:$0xf]
        %v707 = vld [vmem:[#allocation2 + $0xc] sm:$0xf]
        %v708 = vld [vmem:[#allocation2 + $0x10] sm:$0xf]
        %v709 = vld [vmem:[#allocation2 + $0x14] sm:$0xf]
        %v710 = vld [vmem:[#allocation2 + $0x18] sm:$0xf]
        %v711 = vld [vmem:[#allocation2 + $0x1c] sm:$0xf]
        %v712 = vld [vmem:[#allocation5] sm:$0xff]
        %v721 = vunpack.c.l.b16 %v704
        %v722 = vunpack.c.l.b16 %v705
        %v723 = vunpack.c.l.b16 %v706
        %v724 = vunpack.c.l.b16 %v707
        %v725 = vunpack.c.l.b16 %v708
        %v726 = vunpack.c.l.b16 %v709
        %v727 = vunpack.c.l.b16 %v710
        %v728 = vunpack.c.l.b16 %v711
        %v729 = vpack.c.b16 %v722, %v721
        %v730 = vpack.c.b16 %v724, %v723
        %v731 = vpack.c.b16 %v726, %v725
        %v732 = vpack.c.b16 %v728, %v727
        %vm737 = vcmask 523264
        %v739 = vsel %vm737, %v703, 0
        %741 = vmatprep.subr.bf16.mxu0 0
        %742 = vmatpush1.bf16.msra.mxu0 %v729
        %743 = vmatprep.subr.bf16.mxu0 0
        %744 = vmatpush1.bf16.msra.mxu0 %v730
        %745 = vmatprep.subr.bf16.mxu0 0
        %746 = vmatpush1.bf16.msra.mxu0 %v731
        %747 = vmatprep.subr.bf16.mxu0 0
        %748 = vmatpush1.bf16.msra.mxu0 %v732
        %749 = vmatprep.subr.bf16.mxu0 0
        %750 = vmatpush1.bf16.msra.mxu0 0
        %751 = vmatprep.subr.bf16.mxu0 0
        %752 = vmatpush1.bf16.msra.mxu0 0
        %753 = vmatprep.subr.bf16.mxu0 0
        %754 = vmatpush1.bf16.msra.mxu0 0
        %755 = vmatprep.subr.bf16.mxu0 0
        %756 = vmatpush1.bf16.msra.mxu0 0
        %757 = vmatprep.subr.bf16.mxu0 0
        %758 = vmatpush1.bf16.msra.mxu0 0
        %759 = vmatprep.subr.bf16.mxu0 0
        %760 = vmatpush1.bf16.msra.mxu0 0
        %761 = vmatprep.subr.bf16.mxu0 0
        %762 = vmatpush1.bf16.msra.mxu0 0
        %763 = vmatprep.subr.bf16.mxu0 0
        %764 = vmatpush1.bf16.msra.mxu0 0
        %765 = vmatprep.subr.bf16.mxu0 0
        %766 = vmatpush1.bf16.msra.mxu0 0
        %767 = vmatprep.subr.bf16.mxu0 0
        %768 = vmatpush1.bf16.msra.mxu0 0
        %769 = vmatprep.subr.bf16.mxu0 0
        %770 = vmatpush1.bf16.msra.mxu0 0
        %771 = vmatprep.subr.bf16.mxu0 0
        %772 = vmatpush1.bf16.msra.mxu0 0
        %773 = vmatprep.mubr.bf16.mxu0 0
        %774 = vmatmul.mubr.bf16.gmra.mrb[0].mxu0 %v739
        %v775 = vpop.f32.mrb[0].mxu0
        %v776 = vadd.f32 %v712, %v775
        %v777 = vpop.f32.mrb[0].mxu0
        %v778 = vpop.f32.mrb[0].mxu0
        %v779 = vpop.f32.mrb[0].mxu0
        %780 = vdwg.mxu0
        %vm781 = vcmp.ge.s32.totalorder %v696, 0
        %vm782 = vcmp.lt.s32.totalorder %v696, 16
        %vm783 = vmand %vm781, %vm782
        %v784 = vsel %vm783, 1, 0
        %v785 = vcvt.s32.f32 %v784
        %v786 = vpack.c.bf16 %v785, %v785
        %vm787 = vcmp.ge.s32.totalorder %v696, 16
        %vm788 = vcmp.lt.s32.totalorder %v696, 32
        %vm789 = vmand %vm787, %vm788
        %v790 = vsel %vm789, 1, 0
        %v791 = vcvt.s32.f32 %v790
        %v792 = vpack.c.bf16 %v791, %v791
        %vm793 = vcmp.ge.s32.totalorder %v696, 32
        %vm794 = vcmp.lt.s32.totalorder %v696, 48
        %vm795 = vmand %vm793, %vm794
        %v796 = vsel %vm795, 1, 0
        %v797 = vcvt.s32.f32 %v796
        %v798 = vpack.c.bf16 %v797, %v797
        %vm799 = vcmp.ge.s32.totalorder %v696, 48
        %vm800 = vcmp.lt.s32.totalorder %v696, 64
        %vm801 = vmand %vm799, %vm800
        %v802 = vsel %vm801, 1, 0
        %v803 = vcvt.s32.f32 %v802
        %v804 = vpack.c.bf16 %v803, %v803
        %v805 = vpack.c.bf16 %v776, %v776
        %v806 = vld [vmem:[%s3] sm:$0xf]
        %v807 = vld [vmem:[%s3 + $0x4] sm:$0xf]
        %v808 = vld [vmem:[%s3 + $0x8] sm:$0xf]
        %v809 = vld [vmem:[%s3 + $0xc] sm:$0xf]
        %v810 = vld [vmem:[%s3 + $0x10] sm:$0xf]
        %v811 = vld [vmem:[%s3 + $0x14] sm:$0xf]
        %v812 = vld [vmem:[%s3 + $0x18] sm:$0xf]
        %v813 = vld [vmem:[%s3 + $0x1c] sm:$0xf]
        %v814 = vld [vmem:[#allocation7] sm:$0x1]
        %v816 = vlaneseq
        %v817 = vshrl.u32 %v816, 7
        %v818 = vsub.s32 0, %v817
        %v819 = vrot.slane %v814, %v818
        %v829 = vunpack.c.l.b16 %v806
        %v830 = vunpack.c.l.b16 %v807
        %v831 = vunpack.c.l.b16 %v808
        %v832 = vunpack.c.l.b16 %v809
        %v833 = vunpack.c.l.b16 %v810
        %v834 = vunpack.c.l.b16 %v811
        %v835 = vunpack.c.l.b16 %v812
        %v836 = vunpack.c.l.b16 %v813
        %v837 = vpack.c.b16 %v830, %v829
        %v838 = vpack.c.b16 %v832, %v831
        %v839 = vpack.c.b16 %v834, %v833
        %v840 = vpack.c.b16 %v836, %v835
        %v846 = vsel %vm737, %v805, 0
        %848 = vmatprep.subr.bf16.mxu0 0
        %849 = vmatpush1.bf16.msra.mxu0 %v837
        %850 = vmatprep.subr.bf16.mxu0 0
        %851 = vmatpush1.bf16.msra.mxu0 %v838
        %852 = vmatprep.subr.bf16.mxu0 0
        %853 = vmatpush1.bf16.msra.mxu0 %v839
        %854 = vmatprep.subr.bf16.mxu0 0
        %855 = vmatpush1.bf16.msra.mxu0 %v840
        %856 = vmatprep.subr.bf16.mxu0 0
        %857 = vmatpush1.bf16.msra.mxu0 0
        %858 = vmatprep.subr.bf16.mxu0 0
        %859 = vmatpush1.bf16.msra.mxu0 0
        %860 = vmatprep.subr.bf16.mxu0 0
        %861 = vmatpush1.bf16.msra.mxu0 0
        %862 = vmatprep.subr.bf16.mxu0 0
        %863 = vmatpush1.bf16.msra.mxu0 0
        %864 = vmatprep.subr.bf16.mxu0 0
        %865 = vmatpush1.bf16.msra.mxu0 0
        %866 = vmatprep.subr.bf16.mxu0 0
        %867 = vmatpush1.bf16.msra.mxu0 0
        %868 = vmatprep.subr.bf16.mxu0 0
        %869 = vmatpush1.bf16.msra.mxu0 0
        %870 = vmatprep.subr.bf16.mxu0 0
        %871 = vmatpush1.bf16.msra.mxu0 0
        %872 = vmatprep.subr.bf16.mxu0 0
        %873 = vmatpush1.bf16.msra.mxu0 0
        %874 = vmatprep.subr.bf16.mxu0 0
        %875 = vmatpush1.bf16.msra.mxu0 0
        %876 = vmatprep.subr.bf16.mxu0 0
        %877 = vmatpush1.bf16.msra.mxu0 0
        %878 = vmatprep.subr.bf16.mxu0 0
        %879 = vmatpush1.bf16.msra.mxu0 0
        %880 = vmatprep.mubr.bf16.mxu0 0
        %881 = vmatmul.mubr.bf16.gmra.mrb[0].mxu0 %v846
        %v882 = vpop.f32.mrb[0].mxu0
        %v883 = vadd.f32 %v819, %v882
        %v884 = vpop.f32.mrb[0].mxu0
        %v885 = vpop.f32.mrb[0].mxu0
        %v886 = vpop.f32.mrb[0].mxu0
        %887 = vdwg.mxu0
        %v888 = vmul.f32 %v883, 0.25
        %v889 = vld [vmem:[%s5] sm:$0xf]
        %v890 = vld [vmem:[%s5 + $0x4] sm:$0xf]
        %v891 = vld [vmem:[%s5 + $0x8] sm:$0xf]
        %v892 = vld [vmem:[%s5 + $0xc] sm:$0xf]
        %v893 = vld [vmem:[%s5 + $0x10] sm:$0xf]
        %v894 = vld [vmem:[%s5 + $0x14] sm:$0xf]
        %v895 = vld [vmem:[%s5 + $0x18] sm:$0xf]
        %v896 = vld [vmem:[%s5 + $0x1c] sm:$0xf]
        %v897 = vld [vmem:[%s6] sm:$0x1]
        %v899 = vlaneseq
        %v900 = vshrl.u32 %v899, 7
        %v901 = vsub.s32 0, %v900
        %v902 = vrot.slane %v897, %v901
        %v912 = vunpack.c.l.b16 %v889
        %v913 = vunpack.c.l.b16 %v890
        %v914 = vunpack.c.l.b16 %v891
        %v915 = vunpack.c.l.b16 %v892
        %v916 = vunpack.c.l.b16 %v893
        %v917 = vunpack.c.l.b16 %v894
        %v918 = vunpack.c.l.b16 %v895
        %v919 = vunpack.c.l.b16 %v896
        %v920 = vpack.c.b16 %v913, %v912
        %v921 = vpack.c.b16 %v915, %v914
        %v922 = vpack.c.b16 %v917, %v916
        %v923 = vpack.c.b16 %v919, %v918
        %928 = vmatprep.subr.bf16.mxu0 0
        %929 = vmatpush1.bf16.msra.mxu0 %v920
        %930 = vmatprep.subr.bf16.mxu0 0
        %931 = vmatpush1.bf16.msra.mxu0 %v921
        %932 = vmatprep.subr.bf16.mxu0 0
        %933 = vmatpush1.bf16.msra.mxu0 %v922
        %934 = vmatprep.subr.bf16.mxu0 0
        %935 = vmatpush1.bf16.msra.mxu0 %v923
        %936 = vmatprep.subr.bf16.mxu0 0
        %937 = vmatpush1.bf16.msra.mxu0 0
        %938 = vmatprep.subr.bf16.mxu0 0
        %939 = vmatpush1.bf16.msra.mxu0 0
        %940 = vmatprep.subr.bf16.mxu0 0
        %941 = vmatpush1.bf16.msra.mxu0 0
        %942 = vmatprep.subr.bf16.mxu0 0
        %943 = vmatpush1.bf16.msra.mxu0 0
        %944 = vmatprep.subr.bf16.mxu0 0
        %945 = vmatpush1.bf16.msra.mxu0 0
        %946 = vmatprep.subr.bf16.mxu0 0
        %947 = vmatpush1.bf16.msra.mxu0 0
        %948 = vmatprep.subr.bf16.mxu0 0
        %949 = vmatpush1.bf16.msra.mxu0 0
        %950 = vmatprep.subr.bf16.mxu0 0
        %951 = vmatpush1.bf16.msra.mxu0 0
        %952 = vmatprep.subr.bf16.mxu0 0
        %953 = vmatpush1.bf16.msra.mxu0 0
        %954 = vmatprep.subr.bf16.mxu0 0
        %955 = vmatpush1.bf16.msra.mxu0 0
        %956 = vmatprep.subr.bf16.mxu0 0
        %957 = vmatpush1.bf16.msra.mxu0 0
        %958 = vmatprep.subr.bf16.mxu0 0
        %959 = vmatpush1.bf16.msra.mxu0 0
        %960 = vmatprep.mubr.bf16.mxu0 0
        %961 = vmatmul.mubr.bf16.gmra.mrb[0].mxu0 %v846
        %v962 = vpop.f32.mrb[0].mxu0
        %v963 = vadd.f32 %v902, %v962
        %v964 = vpop.f32.mrb[0].mxu0
        %v965 = vpop.f32.mrb[0].mxu0
        %v966 = vpop.f32.mrb[0].mxu0
        %967 = vdwg.mxu0
        %v968 = vld [vmem:[%s7] sm:$0xf]
        %v969 = vld [vmem:[%s7 + $0x4] sm:$0xf]
        %v970 = vld [vmem:[%s7 + $0x8] sm:$0xf]
        %v971 = vld [vmem:[%s7 + $0xc] sm:$0xf]
        %v972 = vld [vmem:[%s7 + $0x10] sm:$0xf]
        %v973 = vld [vmem:[%s7 + $0x14] sm:$0xf]
        %v974 = vld [vmem:[%s7 + $0x18] sm:$0xf]
        %v975 = vld [vmem:[%s7 + $0x1c] sm:$0xf]
        %v976 = vld [vmem:[%s8] sm:$0x1]
        %v978 = vlaneseq
        %v979 = vshrl.u32 %v978, 7
        %v980 = vsub.s32 0, %v979
        %v981 = vrot.slane %v976, %v980
        %v991 = vunpack.c.l.b16 %v968
        %v992 = vunpack.c.l.b16 %v969
        %v993 = vunpack.c.l.b16 %v970
        %v994 = vunpack.c.l.b16 %v971
        %v995 = vunpack.c.l.b16 %v972
        %v996 = vunpack.c.l.b16 %v973
        %v997 = vunpack.c.l.b16 %v974
        %v998 = vunpack.c.l.b16 %v975
        %v999 = vpack.c.b16 %v992, %v991
        %v1000 = vpack.c.b16 %v994, %v993
        %v1001 = vpack.c.b16 %v996, %v995
        %v1002 = vpack.c.b16 %v998, %v997
        %1007 = vmatprep.subr.bf16.mxu0 0
        %1008 = vmatpush1.bf16.msra.mxu0 %v999
        %1009 = vmatprep.subr.bf16.mxu0 0
        %1010 = vmatpush1.bf16.msra.mxu0 %v1000
        %1011 = vmatprep.subr.bf16.mxu0 0
        %1012 = vmatpush1.bf16.msra.mxu0 %v1001
        %1013 = vmatprep.subr.bf16.mxu0 0
        %1014 = vmatpush1.bf16.msra.mxu0 %v1002
        %1015 = vmatprep.subr.bf16.mxu0 0
        %1016 = vmatpush1.bf16.msra.mxu0 0
        %1017 = vmatprep.subr.bf16.mxu0 0
        %1018 = vmatpush1.bf16.msra.mxu0 0
        %1019 = vmatprep.subr.bf16.mxu0 0
        %1020 = vmatpush1.bf16.msra.mxu0 0
        %1021 = vmatprep.subr.bf16.mxu0 0
        %1022 = vmatpush1.bf16.msra.mxu0 0
        %1023 = vmatprep.subr.bf16.mxu0 0
        %1024 = vmatpush1.bf16.msra.mxu0 0
        %1025 = vmatprep.subr.bf16.mxu0 0
        %1026 = vmatpush1.bf16.msra.mxu0 0
        %1027 = vmatprep.subr.bf16.mxu0 0
        %1028 = vmatpush1.bf16.msra.mxu0 0
        %1029 = vmatprep.subr.bf16.mxu0 0
        %1030 = vmatpush1.bf16.msra.mxu0 0
        %1031 = vmatprep.subr.bf16.mxu0 0
        %1032 = vmatpush1.bf16.msra.mxu0 0
        %1033 = vmatprep.subr.bf16.mxu0 0
        %1034 = vmatpush1.bf16.msra.mxu0 0
        %1035 = vmatprep.subr.bf16.mxu0 0
        %1036 = vmatpush1.bf16.msra.mxu0 0
        %1037 = vmatprep.subr.bf16.mxu0 0
        %1038 = vmatpush1.bf16.msra.mxu0 0
        %1039 = vmatprep.mubr.bf16.mxu0 0
        %1040 = vmatmul.mubr.bf16.gmra.mrb[0].mxu0 %v846
        %v1041 = vpop.f32.mrb[0].mxu0
        %v1042 = vadd.f32 %v981, %v1041
        %v1043 = vpop.f32.mrb[0].mxu0
        %v1044 = vpop.f32.mrb[0].mxu0
        %v1045 = vpop.f32.mrb[0].mxu0
        %1046 = vdwg.mxu0
        %v1047 = vpack.c.bf16 %v888, %v888
        %v1048 = vpack.c.bf16 %v963, %v963
        %v1049 = vpack.c.bf16 %v1042, %v1042
        %v1050 = vmul.bf16 %v1047, %v786
        %v1052 = vsel %vm737, %v1050, 0
        %v1055 = vsel %vm737, %v1048, 0
        %1057 = vmatprep.subr.bf16.mxu0 0
        %1058 = vmatpush1.bf16.xpose.msra.mxu0 %v1055
        %1059 = vmatprep.subr.bf16.mxu0 0
        %1060 = vmatpush1.bf16.xpose.msra.mxu0 0
        %1061 = vmatprep.subr.bf16.mxu0 0
        %1062 = vmatpush1.bf16.xpose.msra.mxu0 0
        %1063 = vmatprep.subr.bf16.mxu0 0
        %1064 = vmatpush1.bf16.xpose.msra.mxu0 0
        %1065 = vmatprep.subr.bf16.mxu0 0
        %1066 = vmatpush1.bf16.xpose.msra.mxu0 0
        %1067 = vmatprep.subr.bf16.mxu0 0
        %1068 = vmatpush1.bf16.xpose.msra.mxu0 0
        %1069 = vmatprep.subr.bf16.mxu0 0
        %1070 = vmatpush1.bf16.xpose.msra.mxu0 0
        %1071 = vmatprep.subr.bf16.mxu0 0
        %1072 = vmatpush1.bf16.xpose.msra.mxu0 0
        %1073 = vmatprep.subr.bf16.mxu0 0
        %1074 = vmatpush1.bf16.xpose.msra.mxu0 0
        %1075 = vmatprep.subr.bf16.mxu0 0
        %1076 = vmatpush1.bf16.xpose.msra.mxu0 0
        %1077 = vmatprep.subr.bf16.mxu0 0
        %1078 = vmatpush1.bf16.xpose.msra.mxu0 0
        %1079 = vmatprep.subr.bf16.mxu0 0
        %1080 = vmatpush1.bf16.xpose.msra.mxu0 0
        %1081 = vmatprep.subr.bf16.mxu0 0
        %1082 = vmatpush1.bf16.xpose.msra.mxu0 0
        %1083 = vmatprep.subr.bf16.mxu0 0
        %1084 = vmatpush1.bf16.xpose.msra.mxu0 0
        %1085 = vmatprep.subr.bf16.mxu0 0
        %1086 = vmatpush1.bf16.xpose.msra.mxu0 0
        %1087 = vmatprep.subr.bf16.mxu0 0
        %1088 = vmatpush1.bf16.xpose.msra.mxu0 0
        %1089 = vmatprep.mubr.bf16.mxu0 0
        %1090 = vmatmul.mubr.bf16.gmra.mrb[0].mxu0 %v1052
        %v1091 = vpop.f32.mrb[0].mxu0
        %v1092 = vadd.f32 0.0, %v1091
        %v1093 = vpop.f32.mrb[0].mxu0
        %v1094 = vpop.f32.mrb[0].mxu0
        %v1095 = vpop.f32.mrb[0].mxu0
        %1096 = vdwg.mxu0
        %vm1097 = vcmask 64512
        %v1098 = vsel %vm1097, %v1092, -inf
        %1099 = vmax.xlane.f32.xlu0 %v1098
        %v1100 = vpop.xlane.xlu0 %1099
        %v1101 = vsub.f32 %v1092, %v1100
        %v1102 = vmul.f32 %v1101, 1.442695
        %v1103 = vpow.pop %v1102
        %v1104 = vsel %vm1097, %v1103, 0.0
        %1105 = vadd.xlane.f32.xlu0 %v1104
        %v1106 = vpop.xlane.xlu0 %1105
        %v1107 = vrcp.pop %v1106
        %v1108 = vmul.f32 %v1103, %v1107
        %v1109 = vpack.c.bf16 %v1108, %v1108
        %v1110 = vmul.bf16 %v1049, %v786
        %v1111 = vmul.bf16 %v1047, %v792
        %v1113 = vsel %vm737, %v1111, 0
        %1115 = vmatprep.subr.bf16.mxu0 0
        %1116 = vmatpush1.bf16.xpose.msra.mxu0 %v1055
        %1117 = vmatprep.subr.bf16.mxu0 0
        %1118 = vmatpush1.bf16.xpose.msra.mxu0 0
        %1119 = vmatprep.subr.bf16.mxu0 0
        %1120 = vmatpush1.bf16.xpose.msra.mxu0 0
        %1121 = vmatprep.subr.bf16.mxu0 0
        %1122 = vmatpush1.bf16.xpose.msra.mxu0 0
        %1123 = vmatprep.subr.bf16.mxu0 0
        %1124 = vmatpush1.bf16.xpose.msra.mxu0 0
        %1125 = vmatprep.subr.bf16.mxu0 0
        %1126 = vmatpush1.bf16.xpose.msra.mxu0 0
        %1127 = vmatprep.subr.bf16.mxu0 0
        %1128 = vmatpush1.bf16.xpose.msra.mxu0 0
        %1129 = vmatprep.subr.bf16.mxu0 0
        %1130 = vmatpush1.bf16.xpose.msra.mxu0 0
        %1131 = vmatprep.subr.bf16.mxu0 0
        %1132 = vmatpush1.bf16.xpose.msra.mxu0 0
        %1133 = vmatprep.subr.bf16.mxu0 0
        %1134 = vmatpush1.bf16.xpose.msra.mxu0 0
        %1135 = vmatprep.subr.bf16.mxu0 0
        %1136 = vmatpush1.bf16.xpose.msra.mxu0 0
        %1137 = vmatprep.subr.bf16.mxu0 0
        %1138 = vmatpush1.bf16.xpose.msra.mxu0 0
        %1139 = vmatprep.subr.bf16.mxu0 0
        %1140 = vmatpush1.bf16.xpose.msra.mxu0 0
        %1141 = vmatprep.subr.bf16.mxu0 0
        %1142 = vmatpush1.bf16.xpose.msra.mxu0 0
        %1143 = vmatprep.subr.bf16.mxu0 0
        %1144 = vmatpush1.bf16.xpose.msra.mxu0 0
        %1145 = vmatprep.subr.bf16.mxu0 0
        %1146 = vmatpush1.bf16.xpose.msra.mxu0 0
        %1147 = vmatprep.mubr.bf16.mxu0 0
        %1148 = vmatmul.mubr.bf16.gmra.mrb[0].mxu0 %v1113
        %v1149 = vpop.f32.mrb[0].mxu0
        %v1150 = vadd.f32 0.0, %v1149
        %v1151 = vpop.f32.mrb[0].mxu0
        %v1152 = vpop.f32.mrb[0].mxu0
        %v1153 = vpop.f32.mrb[0].mxu0
        %1154 = vdwg.mxu0
        %v1155 = vsel %vm1097, %v1150, -inf
        %1156 = vmax.xlane.f32.xlu0 %v1155
        %v1157 = vpop.xlane.xlu0 %1156
        %v1158 = vsub.f32 %v1150, %v1157
        %v1159 = vmul.f32 %v1158, 1.442695
        %v1160 = vpow.pop %v1159
        %v1161 = vsel %vm1097, %v1160, 0.0
        %1162 = vadd.xlane.f32.xlu0 %v1161
        %v1163 = vpop.xlane.xlu0 %1162
        %v1164 = vrcp.pop %v1163
        %v1165 = vmul.f32 %v1160, %v1164
        %v1166 = vpack.c.bf16 %v1165, %v1165
        %v1167 = vmul.bf16 %v1049, %v792
        %v1169 = vsel %vm1097, %v1166, 0
        %vm1171 = vcmask 1043456
        %v1173 = vsel %vm1171, %v1167, 0
        %1175 = vmatprep.subr.bf16.mxu0 0
        %1176 = vmatpush1.bf16.msra.mxu0 %v1173
        %1177 = vmatprep.subr.bf16.mxu0 0
        %1178 = vmatpush1.bf16.msra.mxu0 0
        %1179 = vmatprep.subr.bf16.mxu0 0
        %1180 = vmatpush1.bf16.msra.mxu0 0
        %1181 = vmatprep.subr.bf16.mxu0 0
        %1182 = vmatpush1.bf16.msra.mxu0 0
        %1183 = vmatprep.subr.bf16.mxu0 0
        %1184 = vmatpush1.bf16.msra.mxu0 0
        %1185 = vmatprep.subr.bf16.mxu0 0
        %1186 = vmatpush1.bf16.msra.mxu0 0
        %1187 = vmatprep.subr.bf16.mxu0 0
        %1188 = vmatpush1.bf16.msra.mxu0 0
        %1189 = vmatprep.subr.bf16.mxu0 0
        %1190 = vmatpush1.bf16.msra.mxu0 0
        %1191 = vmatprep.subr.bf16.mxu0 0
        %1192 = vmatpush1.bf16.msra.mxu0 0
        %1193 = vmatprep.subr.bf16.mxu0 0
        %1194 = vmatpush1.bf16.msra.mxu0 0
        %1195 = vmatprep.subr.bf16.mxu0 0
        %1196 = vmatpush1.bf16.msra.mxu0 0
        %1197 = vmatprep.subr.bf16.mxu0 0
        %1198 = vmatpush1.bf16.msra.mxu0 0
        %1199 = vmatprep.subr.bf16.mxu0 0
        %1200 = vmatpush1.bf16.msra.mxu0 0
        %1201 = vmatprep.subr.bf16.mxu0 0
        %1202 = vmatpush1.bf16.msra.mxu0 0
        %1203 = vmatprep.subr.bf16.mxu0 0
        %1204 = vmatpush1.bf16.msra.mxu0 0
        %1205 = vmatprep.subr.bf16.mxu0 0
        %1206 = vmatpush1.bf16.msra.mxu0 0
        %1207 = vmatprep.mubr.bf16.mxu0 0
        %1208 = vmatmul.mubr.bf16.gmra.mrb[0].mxu0 %v1169
        %v1209 = vpop.f32.mrb[0].mxu0
        %v1210 = vadd.f32 0.0, %v1209
        %v1211 = vpop.f32.mrb[0].mxu0
        %v1212 = vpop.f32.mrb[0].mxu0
        %v1213 = vpop.f32.mrb[0].mxu0
        %1214 = vdwg.mxu0
        %v1216 = vsel %vm1097, %v1109, 0
        %v1219 = vsel %vm1171, %v1110, 0
        %1221 = vmatprep.subr.bf16.mxu0 0
        %1222 = vmatpush1.bf16.msra.mxu0 %v1219
        %1223 = vmatprep.subr.bf16.mxu0 0
        %1224 = vmatpush1.bf16.msra.mxu0 0
        %1225 = vmatprep.subr.bf16.mxu0 0
        %1226 = vmatpush1.bf16.msra.mxu0 0
        %1227 = vmatprep.subr.bf16.mxu0 0
        %1228 = vmatpush1.bf16.msra.mxu0 0
        %1229 = vmatprep.subr.bf16.mxu0 0
        %1230 = vmatpush1.bf16.msra.mxu0 0
        %1231 = vmatprep.subr.bf16.mxu0 0
        %1232 = vmatpush1.bf16.msra.mxu0 0
        %1233 = vmatprep.subr.bf16.mxu0 0
        %1234 = vmatpush1.bf16.msra.mxu0 0
        %1235 = vmatprep.subr.bf16.mxu0 0
        %1236 = vmatpush1.bf16.msra.mxu0 0
        %1237 = vmatprep.subr.bf16.mxu0 0
        %1238 = vmatpush1.bf16.msra.mxu0 0
        %1239 = vmatprep.subr.bf16.mxu0 0
        %1240 = vmatpush1.bf16.msra.mxu0 0
        %1241 = vmatprep.subr.bf16.mxu0 0
        %1242 = vmatpush1.bf16.msra.mxu0 0
        %1243 = vmatprep.subr.bf16.mxu0 0
        %1244 = vmatpush1.bf16.msra.mxu0 0
        %1245 = vmatprep.subr.bf16.mxu0 0
        %1246 = vmatpush1.bf16.msra.mxu0 0
        %1247 = vmatprep.subr.bf16.mxu0 0
        %1248 = vmatpush1.bf16.msra.mxu0 0
        %1249 = vmatprep.subr.bf16.mxu0 0
        %1250 = vmatpush1.bf16.msra.mxu0 0
        %1251 = vmatprep.subr.bf16.mxu0 0
        %1252 = vmatpush1.bf16.msra.mxu0 0
        %1253 = vmatprep.mubr.bf16.mxu0 0
        %1254 = vmatmul.mubr.bf16.gmra.mrb[0].mxu0 %v1216
        %v1255 = vpop.f32.mrb[0].mxu0
        %v1256 = vadd.f32 %v1210, %v1255
        %v1257 = vpop.f32.mrb[0].mxu0
        %v1258 = vpop.f32.mrb[0].mxu0
        %v1259 = vpop.f32.mrb[0].mxu0
        %1260 = vdwg.mxu0
        %v1261 = vmul.bf16 %v1047, %v798
        %v1263 = vsel %vm737, %v1261, 0
        %1265 = vmatprep.subr.bf16.mxu0 0
        %1266 = vmatpush1.bf16.xpose.msra.mxu0 %v1055
        %1267 = vmatprep.subr.bf16.mxu0 0
        %1268 = vmatpush1.bf16.xpose.msra.mxu0 0
        %1269 = vmatprep.subr.bf16.mxu0 0
        %1270 = vmatpush1.bf16.xpose.msra.mxu0 0
        %1271 = vmatprep.subr.bf16.mxu0 0
        %1272 = vmatpush1.bf16.xpose.msra.mxu0 0
        %1273 = vmatprep.subr.bf16.mxu0 0
        %1274 = vmatpush1.bf16.xpose.msra.mxu0 0
        %1275 = vmatprep.subr.bf16.mxu0 0
        %1276 = vmatpush1.bf16.xpose.msra.mxu0 0
        %1277 = vmatprep.subr.bf16.mxu0 0
        %1278 = vmatpush1.bf16.xpose.msra.mxu0 0
        %1279 = vmatprep.subr.bf16.mxu0 0
        %1280 = vmatpush1.bf16.xpose.msra.mxu0 0
        %1281 = vmatprep.subr.bf16.mxu0 0
        %1282 = vmatpush1.bf16.xpose.msra.mxu0 0
        %1283 = vmatprep.subr.bf16.mxu0 0
        %1284 = vmatpush1.bf16.xpose.msra.mxu0 0
        %1285 = vmatprep.subr.bf16.mxu0 0
        %1286 = vmatpush1.bf16.xpose.msra.mxu0 0
        %1287 = vmatprep.subr.bf16.mxu0 0
        %1288 = vmatpush1.bf16.xpose.msra.mxu0 0
        %1289 = vmatprep.subr.bf16.mxu0 0
        %1290 = vmatpush1.bf16.xpose.msra.mxu0 0
        %1291 = vmatprep.subr.bf16.mxu0 0
        %1292 = vmatpush1.bf16.xpose.msra.mxu0 0
        %1293 = vmatprep.subr.bf16.mxu0 0
        %1294 = vmatpush1.bf16.xpose.msra.mxu0 0
        %1295 = vmatprep.subr.bf16.mxu0 0
        %1296 = vmatpush1.bf16.xpose.msra.mxu0 0
        %1297 = vmatprep.mubr.bf16.mxu0 0
        %1298 = vmatmul.mubr.bf16.gmra.mrb[0].mxu0 %v1263
        %v1299 = vpop.f32.mrb[0].mxu0
        %v1300 = vadd.f32 0.0, %v1299
        %v1301 = vpop.f32.mrb[0].mxu0
        %v1302 = vpop.f32.mrb[0].mxu0
        %v1303 = vpop.f32.mrb[0].mxu0
        %1304 = vdwg.mxu0
        %v1305 = vsel %vm1097, %v1300, -inf
        %1306 = vmax.xlane.f32.xlu0 %v1305
        %v1307 = vpop.xlane.xlu0 %1306
        %v1308 = vsub.f32 %v1300, %v1307
        %v1309 = vmul.f32 %v1308, 1.442695
        %v1310 = vpow.pop %v1309
        %v1311 = vsel %vm1097, %v1310, 0.0
        %1312 = vadd.xlane.f32.xlu0 %v1311
        %v1313 = vpop.xlane.xlu0 %1312
        %v1314 = vrcp.pop %v1313
        %v1315 = vmul.f32 %v1310, %v1314
        %v1316 = vpack.c.bf16 %v1315, %v1315
        %v1317 = vmul.bf16 %v1049, %v798
        %v1319 = vsel %vm1097, %v1316, 0
        %v1322 = vsel %vm1171, %v1317, 0
        %1324 = vmatprep.subr.bf16.mxu0 0
        %1325 = vmatpush1.bf16.msra.mxu0 %v1322
        %1326 = vmatprep.subr.bf16.mxu0 0
        %1327 = vmatpush1.bf16.msra.mxu0 0
        %1328 = vmatprep.subr.bf16.mxu0 0
        %1329 = vmatpush1.bf16.msra.mxu0 0
        %1330 = vmatprep.subr.bf16.mxu0 0
        %1331 = vmatpush1.bf16.msra.mxu0 0
        %1332 = vmatprep.subr.bf16.mxu0 0
        %1333 = vmatpush1.bf16.msra.mxu0 0
        %1334 = vmatprep.subr.bf16.mxu0 0
        %1335 = vmatpush1.bf16.msra.mxu0 0
        %1336 = vmatprep.subr.bf16.mxu0 0
        %1337 = vmatpush1.bf16.msra.mxu0 0
        %1338 = vmatprep.subr.bf16.mxu0 0
        %1339 = vmatpush1.bf16.msra.mxu0 0
        %1340 = vmatprep.subr.bf16.mxu0 0
        %1341 = vmatpush1.bf16.msra.mxu0 0
        %1342 = vmatprep.subr.bf16.mxu0 0
        %1343 = vmatpush1.bf16.msra.mxu0 0
        %1344 = vmatprep.subr.bf16.mxu0 0
        %1345 = vmatpush1.bf16.msra.mxu0 0
        %1346 = vmatprep.subr.bf16.mxu0 0
        %1347 = vmatpush1.bf16.msra.mxu0 0
        %1348 = vmatprep.subr.bf16.mxu0 0
        %1349 = vmatpush1.bf16.msra.mxu0 0
        %1350 = vmatprep.subr.bf16.mxu0 0
        %1351 = vmatpush1.bf16.msra.mxu0 0
        %1352 = vmatprep.subr.bf16.mxu0 0
        %1353 = vmatpush1.bf16.msra.mxu0 0
        %1354 = vmatprep.subr.bf16.mxu0 0
        %1355 = vmatpush1.bf16.msra.mxu0 0
        %1356 = vmatprep.mubr.bf16.mxu0 0
        %1357 = vmatmul.mubr.bf16.gmra.mrb[0].mxu0 %v1319
        %v1358 = vpop.f32.mrb[0].mxu0
        %v1359 = vadd.f32 0.0, %v1358
        %v1360 = vpop.f32.mrb[0].mxu0
        %v1361 = vpop.f32.mrb[0].mxu0
        %v1362 = vpop.f32.mrb[0].mxu0
        %1363 = vdwg.mxu0
        %v1364 = vadd.f32 %v1256, %v1359
        %v1365 = vmul.bf16 %v1047, %v804
        %v1367 = vsel %vm737, %v1365, 0
        %1369 = vmatprep.subr.bf16.mxu0 0
        %1370 = vmatpush1.bf16.xpose.msra.mxu0 %v1055
        %1371 = vmatprep.subr.bf16.mxu0 0
        %1372 = vmatpush1.bf16.xpose.msra.mxu0 0
        %1373 = vmatprep.subr.bf16.mxu0 0
        %1374 = vmatpush1.bf16.xpose.msra.mxu0 0
        %1375 = vmatprep.subr.bf16.mxu0 0
        %1376 = vmatpush1.bf16.xpose.msra.mxu0 0
        %1377 = vmatprep.subr.bf16.mxu0 0
        %1378 = vmatpush1.bf16.xpose.msra.mxu0 0
        %1379 = vmatprep.subr.bf16.mxu0 0
        %1380 = vmatpush1.bf16.xpose.msra.mxu0 0
        %1381 = vmatprep.subr.bf16.mxu0 0
        %1382 = vmatpush1.bf16.xpose.msra.mxu0 0
        %1383 = vmatprep.subr.bf16.mxu0 0
        %1384 = vmatpush1.bf16.xpose.msra.mxu0 0
        %1385 = vmatprep.subr.bf16.mxu0 0
        %1386 = vmatpush1.bf16.xpose.msra.mxu0 0
        %1387 = vmatprep.subr.bf16.mxu0 0
        %1388 = vmatpush1.bf16.xpose.msra.mxu0 0
        %1389 = vmatprep.subr.bf16.mxu0 0
        %1390 = vmatpush1.bf16.xpose.msra.mxu0 0
        %1391 = vmatprep.subr.bf16.mxu0 0
        %1392 = vmatpush1.bf16.xpose.msra.mxu0 0
        %1393 = vmatprep.subr.bf16.mxu0 0
        %1394 = vmatpush1.bf16.xpose.msra.mxu0 0
        %1395 = vmatprep.subr.bf16.mxu0 0
        %1396 = vmatpush1.bf16.xpose.msra.mxu0 0
        %1397 = vmatprep.subr.bf16.mxu0 0
        %1398 = vmatpush1.bf16.xpose.msra.mxu0 0
        %1399 = vmatprep.subr.bf16.mxu0 0
        %1400 = vmatpush1.bf16.xpose.msra.mxu0 0
        %1401 = vmatprep.mubr.bf16.mxu0 0
        %1402 = vmatmul.mubr.bf16.gmra.mrb[0].mxu0 %v1367
        %v1403 = vpop.f32.mrb[0].mxu0
        %v1404 = vadd.f32 0.0, %v1403
        %v1405 = vpop.f32.mrb[0].mxu0
        %v1406 = vpop.f32.mrb[0].mxu0
        %v1407 = vpop.f32.mrb[0].mxu0
        %1408 = vdwg.mxu0
        %v1409 = vsel %vm1097, %v1404, -inf
        %1410 = vmax.xlane.f32.xlu0 %v1409
        %v1411 = vpop.xlane.xlu0 %1410
        %v1412 = vsub.f32 %v1404, %v1411
        %v1413 = vmul.f32 %v1412, 1.442695
        %v1414 = vpow.pop %v1413
        %v1415 = vsel %vm1097, %v1414, 0.0
        %1416 = vadd.xlane.f32.xlu0 %v1415
        %v1417 = vpop.xlane.xlu0 %1416
        %v1418 = vrcp.pop %v1417
        %v1419 = vmul.f32 %v1414, %v1418
        %v1420 = vpack.c.bf16 %v1419, %v1419
        %v1421 = vmul.bf16 %v1049, %v804
        %v1423 = vsel %vm1097, %v1420, 0
        %v1426 = vsel %vm1171, %v1421, 0
        %1428 = vmatprep.subr.bf16.mxu0 0
        %1429 = vmatpush1.bf16.msra.mxu0 %v1426
        %1430 = vmatprep.subr.bf16.mxu0 0
        %1431 = vmatpush1.bf16.msra.mxu0 0
        %1432 = vmatprep.subr.bf16.mxu0 0
        %1433 = vmatpush1.bf16.msra.mxu0 0
        %1434 = vmatprep.subr.bf16.mxu0 0
        %1435 = vmatpush1.bf16.msra.mxu0 0
        %1436 = vmatprep.subr.bf16.mxu0 0
        %1437 = vmatpush1.bf16.msra.mxu0 0
        %1438 = vmatprep.subr.bf16.mxu0 0
        %1439 = vmatpush1.bf16.msra.mxu0 0
        %1440 = vmatprep.subr.bf16.mxu0 0
        %1441 = vmatpush1.bf16.msra.mxu0 0
        %1442 = vmatprep.subr.bf16.mxu0 0
        %1443 = vmatpush1.bf16.msra.mxu0 0
        %1444 = vmatprep.subr.bf16.mxu0 0
        %1445 = vmatpush1.bf16.msra.mxu0 0
        %1446 = vmatprep.subr.bf16.mxu0 0
        %1447 = vmatpush1.bf16.msra.mxu0 0
        %1448 = vmatprep.subr.bf16.mxu0 0
        %1449 = vmatpush1.bf16.msra.mxu0 0
        %1450 = vmatprep.subr.bf16.mxu0 0
        %1451 = vmatpush1.bf16.msra.mxu0 0
        %1452 = vmatprep.subr.bf16.mxu0 0
        %1453 = vmatpush1.bf16.msra.mxu0 0
        %1454 = vmatprep.subr.bf16.mxu0 0
        %1455 = vmatpush1.bf16.msra.mxu0 0
        %1456 = vmatprep.subr.bf16.mxu0 0
        %1457 = vmatpush1.bf16.msra.mxu0 0
        %1458 = vmatprep.subr.bf16.mxu0 0
        %1459 = vmatpush1.bf16.msra.mxu0 0
        %1460 = vmatprep.mubr.bf16.mxu0 0
        %1461 = vmatmul.mubr.bf16.gmra.mrb[0].mxu0 %v1423
        %v1462 = vpop.f32.mrb[0].mxu0
        %v1463 = vadd.f32 0.0, %v1462
        %v1464 = vpop.f32.mrb[0].mxu0
        %v1465 = vpop.f32.mrb[0].mxu0
        %v1466 = vpop.f32.mrb[0].mxu0
        %1467 = vdwg.mxu0
        %v1468 = vadd.f32 %v1364, %v1463
        %v1469 = vpack.c.bf16 %v1468, %v1468
        %v1470 = vld [vmem:[%s9] sm:$0xf]
        %v1471 = vld [vmem:[%s9 + $0x4] sm:$0xf]
        %v1472 = vld [vmem:[%s9 + $0x8] sm:$0xf]
        %v1473 = vld [vmem:[%s9 + $0xc] sm:$0xf]
        %v1474 = vld [vmem:[%s9 + $0x10] sm:$0xf]
        %v1475 = vld [vmem:[%s9 + $0x14] sm:$0xf]
        %v1476 = vld [vmem:[%s9 + $0x18] sm:$0xf]
        %v1477 = vld [vmem:[%s9 + $0x1c] sm:$0xf]
        %v1478 = vld [vmem:[%s10] sm:$0x1]
        %v1480 = vlaneseq
        %v1481 = vshrl.u32 %v1480, 7
        %v1482 = vsub.s32 0, %v1481
        %v1483 = vrot.slane %v1478, %v1482
        %v1493 = vunpack.c.l.b16 %v1470
        %v1494 = vunpack.c.l.b16 %v1471
        %v1495 = vunpack.c.l.b16 %v1472
        %v1496 = vunpack.c.l.b16 %v1473
        %v1497 = vunpack.c.l.b16 %v1474
        %v1498 = vunpack.c.l.b16 %v1475
        %v1499 = vunpack.c.l.b16 %v1476
        %v1500 = vunpack.c.l.b16 %v1477
        %v1501 = vpack.c.b16 %v1494, %v1493
        %v1502 = vpack.c.b16 %v1496, %v1495
        %v1503 = vpack.c.b16 %v1498, %v1497
        %v1504 = vpack.c.b16 %v1500, %v1499
        %v1510 = vsel %vm737, %v1469, 0
        %1512 = vmatprep.subr.bf16.mxu0 0
        %1513 = vmatpush1.bf16.msra.mxu0 %v1501
        %1514 = vmatprep.subr.bf16.mxu0 0
        %1515 = vmatpush1.bf16.msra.mxu0 %v1502
        %1516 = vmatprep.subr.bf16.mxu0 0
        %1517 = vmatpush1.bf16.msra.mxu0 %v1503
        %1518 = vmatprep.subr.bf16.mxu0 0
        %1519 = vmatpush1.bf16.msra.mxu0 %v1504
        %1520 = vmatprep.subr.bf16.mxu0 0
        %1521 = vmatpush1.bf16.msra.mxu0 0
        %1522 = vmatprep.subr.bf16.mxu0 0
        %1523 = vmatpush1.bf16.msra.mxu0 0
        %1524 = vmatprep.subr.bf16.mxu0 0
        %1525 = vmatpush1.bf16.msra.mxu0 0
        %1526 = vmatprep.subr.bf16.mxu0 0
        %1527 = vmatpush1.bf16.msra.mxu0 0
        %1528 = vmatprep.subr.bf16.mxu0 0
        %1529 = vmatpush1.bf16.msra.mxu0 0
        %1530 = vmatprep.subr.bf16.mxu0 0
        %1531 = vmatpush1.bf16.msra.mxu0 0
        %1532 = vmatprep.subr.bf16.mxu0 0
        %1533 = vmatpush1.bf16.msra.mxu0 0
        %1534 = vmatprep.subr.bf16.mxu0 0
        %1535 = vmatpush1.bf16.msra.mxu0 0
        %1536 = vmatprep.subr.bf16.mxu0 0
        %1537 = vmatpush1.bf16.msra.mxu0 0
        %1538 = vmatprep.subr.bf16.mxu0 0
        %1539 = vmatpush1.bf16.msra.mxu0 0
        %1540 = vmatprep.subr.bf16.mxu0 0
        %1541 = vmatpush1.bf16.msra.mxu0 0
        %1542 = vmatprep.subr.bf16.mxu0 0
        %1543 = vmatpush1.bf16.msra.mxu0 0
        %1544 = vmatprep.mubr.bf16.mxu0 0
        %1545 = vmatmul.mubr.bf16.gmra.mrb[0].mxu0 %v1510
        %v1546 = vpop.f32.mrb[0].mxu0
        %v1547 = vadd.f32 %v1483, %v1546
        %v1548 = vpop.f32.mrb[0].mxu0
        %v1549 = vpop.f32.mrb[0].mxu0
        %v1550 = vpop.f32.mrb[0].mxu0
        %1551 = vdwg.mxu0
        %v1552 = vadd.f32 %v776, %v1547
        %v1553 = vld [vmem:[%s15] sm:$0x1]
        %v1554 = vld [vmem:[%s16] sm:$0x1]
        %v1555 = vsel %vm737, %v1552, 0.0
        %1556 = vadd.xlane.f32.xlu0 %v1555
        %v1557 = vpop.xlane.xlu0 %1556
        %v1558 = vrcp.pop 64.0
        %v1559 = vmul.f32 %v1557, %v1558
        %v1560 = vsub.f32 %v1552, %v1559
        %v1561 = vmul.f32 %v1560, %v1560
        %v1562 = vsel %vm737, %v1561, 0.0
        %1563 = vadd.xlane.f32.xlu0 %v1562
        %v1564 = vpop.xlane.xlu0 %1563
        %v1565 = vmul.f32 %v1564, %v1558
        %v1566 = vadd.f32 %v1565, 1e-05
        %v1567 = vrsqrt.pop %v1566
        %v1568 = vmul.f32 %v1560, %v1567
        %v1570 = vlaneseq
        %v1571 = vshrl.u32 %v1570, 7
        %v1572 = vsub.s32 0, %v1571
        %v1573 = vrot.slane %v1553, %v1572
        %v1575 = vmul.f32 %v1568, %v1573
        %v1577 = vlaneseq
        %v1578 = vshrl.u32 %v1577, 7
        %v1579 = vsub.s32 0, %v1578
        %v1580 = vrot.slane %v1554, %v1579
        %v1582 = vadd.f32 %v1575, %v1580
        %v1583 = vpack.c.bf16 %v1582, %v1582
        %v1584 = vld [vmem:[%s11] sm:$0xff]
        %v1585 = vld [vmem:[%s11 + $0x8] sm:$0xff]
        %v1586 = vld [vmem:[%s11 + $0x10] sm:$0xff]
        %v1587 = vld [vmem:[%s11 + $0x18] sm:$0xff]
        %v1588 = vld [vmem:[%s11 + $0x20] sm:$0xff]
        %v1589 = vld [vmem:[%s11 + $0x28] sm:$0xff]
        %v1590 = vld [vmem:[%s11 + $0x30] sm:$0xff]
        %v1591 = vld [vmem:[%s11 + $0x38] sm:$0xff]
        %v1592 = vld [vmem:[%s12] sm:$0x3]
        %v1594 = vlaneseq
        %v1595 = vshrl.u32 %v1594, 7
        %v1596 = vsub.s32 0, %v1595
        %v1597 = vrot.slane %v1592, %v1596
        %v1598 = vlaneseq
        %v1599 = vshrl.u32 %v1598, 7
        %v1600 = vsub.s32 1, %v1599
        %v1601 = vrot.slane %v1592, %v1600
        %v1612 = vunpack.c.l.b16 %v1584
        %v1613 = vunpack.c.h.b16 %v1584
        %v1614 = vunpack.c.l.b16 %v1585
        %v1615 = vunpack.c.h.b16 %v1585
        %v1616 = vunpack.c.l.b16 %v1586
        %v1617 = vunpack.c.h.b16 %v1586
        %v1618 = vunpack.c.l.b16 %v1587
        %v1619 = vunpack.c.h.b16 %v1587
        %v1620 = vunpack.c.l.b16 %v1588
        %v1621 = vunpack.c.h.b16 %v1588
        %v1622 = vunpack.c.l.b16 %v1589
        %v1623 = vunpack.c.h.b16 %v1589
        %v1624 = vunpack.c.l.b16 %v1590
        %v1625 = vunpack.c.h.b16 %v1590
        %v1626 = vunpack.c.l.b16 %v1591
        %v1627 = vunpack.c.h.b16 %v1591
        %v1628 = vpack.c.b16 %v1614, %v1612
        %v1629 = vpack.c.b16 %v1615, %v1613
        %v1630 = vpack.c.b16 %v1618, %v1616
        %v1631 = vpack.c.b16 %v1619, %v1617
        %v1632 = vpack.c.b16 %v1622, %v1620
        %v1633 = vpack.c.b16 %v1623, %v1621
        %v1634 = vpack.c.b16 %v1626, %v1624
        %v1635 = vpack.c.b16 %v1627, %v1625
        %v1645 = vsel %vm737, %v1583, 0
        %1647 = vmatprep.subr.bf16.mxu0 %v1629
        %1648 = vmatpush1.bf16.msra.mxu0 %v1628
        %1649 = vmatprep.subr.bf16.mxu0 %v1631
        %1650 = vmatpush1.bf16.msra.mxu0 %v1630
        %1651 = vmatprep.subr.bf16.mxu0 %v1633
        %1652 = vmatpush1.bf16.msra.mxu0 %v1632
        %1653 = vmatprep.subr.bf16.mxu0 %v1635
        %1654 = vmatpush1.bf16.msra.mxu0 %v1634
        %1655 = vmatprep.subr.bf16.mxu0 0
        %1656 = vmatpush1.bf16.msra.mxu0 0
        %1657 = vmatprep.subr.bf16.mxu0 0
        %1658 = vmatpush1.bf16.msra.mxu0 0
        %1659 = vmatprep.subr.bf16.mxu0 0
        %1660 = vmatpush1.bf16.msra.mxu0 0
        %1661 = vmatprep.subr.bf16.mxu0 0
        %1662 = vmatpush1.bf16.msra.mxu0 0
        %1663 = vmatprep.subr.bf16.mxu0 0
        %1664 = vmatpush1.bf16.msra.mxu0 0
        %1665 = vmatprep.subr.bf16.mxu0 0
        %1666 = vmatpush1.bf16.msra.mxu0 0
        %1667 = vmatprep.subr.bf16.mxu0 0
        %1668 = vmatpush1.bf16.msra.mxu0 0
        %1669 = vmatprep.subr.bf16.mxu0 0
        %1670 = vmatpush1.bf16.msra.mxu0 0
        %1671 = vmatprep.subr.bf16.mxu0 0
        %1672 = vmatpush1.bf16.msra.mxu0 0
        %1673 = vmatprep.subr.bf16.mxu0 0
        %1674 = vmatpush1.bf16.msra.mxu0 0
        %1675 = vmatprep.subr.bf16.mxu0 0
        %1676 = vmatpush1.bf16.msra.mxu0 0
        %1677 = vmatprep.subr.bf16.mxu0 0
        %1678 = vmatpush1.bf16.msra.mxu0 0
        %1679 = vmatprep.mubr.bf16.mxu0 0
        %1680 = vmatmul.mubr.bf16.gmra.mrb[0].mxu0 %v1645
        %v1681 = vpop.f32.mrb[0].mxu0
        %v1682 = vadd.f32 %v1597, %v1681
        %v1683 = vpop.f32.mrb[0].mxu0
        %v1684 = vadd.f32 %v1601, %v1683
        %v1685 = vpop.f32.mrb[0].mxu0
        %v1686 = vpop.f32.mrb[0].mxu0
        %1687 = vdwg.mxu0
        %v1688 = vmax.f32 %v1682, 0.0
        %v1689 = vmax.f32 %v1684, 0.0
        %v1690 = vpack.c.bf16 %v1688, %v1688
        %v1691 = vpack.c.bf16 %v1689, %v1689
        %v1692 = vld [vmem:[%s13] sm:$0xf]
        %v1693 = vld [vmem:[%s13 + $0x4] sm:$0xf]
        %v1694 = vld [vmem:[%s13 + $0x8] sm:$0xf]
        %v1695 = vld [vmem:[%s13 + $0xc] sm:$0xf]
        %v1696 = vld [vmem:[%s13 + $0x10] sm:$0xf]
        %v1697 = vld [vmem:[%s13 + $0x14] sm:$0xf]
        %v1698 = vld [vmem:[%s13 + $0x18] sm:$0xf]
        %v1699 = vld [vmem:[%s13 + $0x1c] sm:$0xf]
        %v1700 = vld [vmem:[%s13 + $0x20] sm:$0xf]
        %v1701 = vld [vmem:[%s13 + $0x24] sm:$0xf]
        %v1702 = vld [vmem:[%s13 + $0x28] sm:$0xf]
        %v1703 = vld [vmem:[%s13 + $0x2c] sm:$0xf]
        %v1704 = vld [vmem:[%s13 + $0x30] sm:$0xf]
        %v1705 = vld [vmem:[%s13 + $0x34] sm:$0xf]
        %v1706 = vld [vmem:[%s13 + $0x38] sm:$0xf]
        %v1707 = vld [vmem:[%s13 + $0x3c] sm:$0xf]
        %v1708 = vld [vmem:[%s13 + $0x40] sm:$0xf]
        %v1709 = vld [vmem:[%s13 + $0x44] sm:$0xf]
        %v1710 = vld [vmem:[%s13 + $0x48] sm:$0xf]
        %v1711 = vld [vmem:[%s13 + $0x4c] sm:$0xf]
        %v1712 = vld [vmem:[%s13 + $0x50] sm:$0xf]
        %v1713 = vld [vmem:[%s13 + $0x54] sm:$0xf]
        %v1714 = vld [vmem:[%s13 + $0x58] sm:$0xf]
        %v1715 = vld [vmem:[%s13 + $0x5c] sm:$0xf]
        %v1716 = vld [vmem:[%s13 + $0x60] sm:$0xf]
        %v1717 = vld [vmem:[%s13 + $0x64] sm:$0xf]
        %v1718 = vld [vmem:[%s13 + $0x68] sm:$0xf]
        %v1719 = vld [vmem:[%s13 + $0x6c] sm:$0xf]
        %v1720 = vld [vmem:[%s13 + $0x70] sm:$0xf]
        %v1721 = vld [vmem:[%s13 + $0x74] sm:$0xf]
        %v1722 = vld [vmem:[%s13 + $0x78] sm:$0xf]
        %v1723 = vld [vmem:[%s13 + $0x7c] sm:$0xf]
        %v1724 = vld [vmem:[%s14] sm:$0x1]
        %v1726 = vlaneseq
        %v1727 = vshrl.u32 %v1726, 7
        %v1728 = vsub.s32 0, %v1727
        %v1729 = vrot.slane %v1724, %v1728
        %v1763 = vunpack.c.l.b16 %v1692
        %v1764 = vunpack.c.l.b16 %v1693
        %v1765 = vunpack.c.l.b16 %v1694
        %v1766 = vunpack.c.l.b16 %v1695
        %v1767 = vunpack.c.l.b16 %v1696
        %v1768 = vunpack.c.l.b16 %v1697
        %v1769 = vunpack.c.l.b16 %v1698
        %v1770 = vunpack.c.l.b16 %v1699
        %v1771 = vunpack.c.l.b16 %v1700
        %v1772 = vunpack.c.l.b16 %v1701
        %v1773 = vunpack.c.l.b16 %v1702
        %v1774 = vunpack.c.l.b16 %v1703
        %v1775 = vunpack.c.l.b16 %v1704
        %v1776 = vunpack.c.l.b16 %v1705
        %v1777 = vunpack.c.l.b16 %v1706
        %v1778 = vunpack.c.l.b16 %v1707
        %v1779 = vunpack.c.l.b16 %v1708
        %v1780 = vunpack.c.l.b16 %v1709
        %v1781 = vunpack.c.l.b16 %v1710
        %v1782 = vunpack.c.l.b16 %v1711
        %v1783 = vunpack.c.l.b16 %v1712
        %v1784 = vunpack.c.l.b16 %v1713
        %v1785 = vunpack.c.l.b16 %v1714
        %v1786 = vunpack.c.l.b16 %v1715
        %v1787 = vunpack.c.l.b16 %v1716
        %v1788 = vunpack.c.l.b16 %v1717
        %v1789 = vunpack.c.l.b16 %v1718
        %v1790 = vunpack.c.l.b16 %v1719
        %v1791 = vunpack.c.l.b16 %v1720
        %v1792 = vunpack.c.l.b16 %v1721
        %v1793 = vunpack.c.l.b16 %v1722
        %v1794 = vunpack.c.l.b16 %v1723
        %v1795 = vpack.c.b16 %v1764, %v1763
        %v1796 = vpack.c.b16 %v1766, %v1765
        %v1797 = vpack.c.b16 %v1768, %v1767
        %v1798 = vpack.c.b16 %v1770, %v1769
        %v1799 = vpack.c.b16 %v1772, %v1771
        %v1800 = vpack.c.b16 %v1774, %v1773
        %v1801 = vpack.c.b16 %v1776, %v1775
        %v1802 = vpack.c.b16 %v1778, %v1777
        %v1803 = vpack.c.b16 %v1780, %v1779
        %v1804 = vpack.c.b16 %v1782, %v1781
        %v1805 = vpack.c.b16 %v1784, %v1783
        %v1806 = vpack.c.b16 %v1786, %v1785
        %v1807 = vpack.c.b16 %v1788, %v1787
        %v1808 = vpack.c.b16 %v1790, %v1789
        %v1809 = vpack.c.b16 %v1792, %v1791
        %v1810 = vpack.c.b16 %v1794, %v1793
        %1827 = vmatprep.subr.bf16.mxu0 0
        %1828 = vmatpush1.bf16.msra.mxu0 %v1795
        %1829 = vmatprep.subr.bf16.mxu0 0
        %1830 = vmatpush1.bf16.msra.mxu0 %v1796
        %1831 = vmatprep.subr.bf16.mxu0 0
        %1832 = vmatpush1.bf16.msra.mxu0 %v1797
        %1833 = vmatprep.subr.bf16.mxu0 0
        %1834 = vmatpush1.bf16.msra.mxu0 %v1798
        %1835 = vmatprep.subr.bf16.mxu0 0
        %1836 = vmatpush1.bf16.msra.mxu0 %v1799
        %1837 = vmatprep.subr.bf16.mxu0 0
        %1838 = vmatpush1.bf16.msra.mxu0 %v1800
        %1839 = vmatprep.subr.bf16.mxu0 0
        %1840 = vmatpush1.bf16.msra.mxu0 %v1801
        %1841 = vmatprep.subr.bf16.mxu0 0
        %1842 = vmatpush1.bf16.msra.mxu0 %v1802
        %1843 = vmatprep.subr.bf16.mxu0 0
        %1844 = vmatpush1.bf16.msra.mxu0 %v1803
        %1845 = vmatprep.subr.bf16.mxu0 0
        %1846 = vmatpush1.bf16.msra.mxu0 %v1804
        %1847 = vmatprep.subr.bf16.mxu0 0
        %1848 = vmatpush1.bf16.msra.mxu0 %v1805
        %1849 = vmatprep.subr.bf16.mxu0 0
        %1850 = vmatpush1.bf16.msra.mxu0 %v1806
        %1851 = vmatprep.subr.bf16.mxu0 0
        %1852 = vmatpush1.bf16.msra.mxu0 %v1807
        %1853 = vmatprep.subr.bf16.mxu0 0
        %1854 = vmatpush1.bf16.msra.mxu0 %v1808
        %1855 = vmatprep.subr.bf16.mxu0 0
        %1856 = vmatpush1.bf16.msra.mxu0 %v1809
        %1857 = vmatprep.subr.bf16.mxu0 0
        %1858 = vmatpush1.bf16.msra.mxu0 %v1810
        %1859 = vmatprep.mubr.bf16.mxu0 %v1691
        %1860 = vmatmul.mubr.bf16.gmra.mrb[0].mxu0 %v1690
        %v1861 = vpop.f32.mrb[0].mxu0
        %v1862 = vadd.f32 %v1729, %v1861
        %v1863 = vpop.f32.mrb[0].mxu0
        %v1864 = vpop.f32.mrb[0].mxu0
        %v1865 = vpop.f32.mrb[0].mxu0
        %1866 = vdwg.mxu0
        %v1867 = vadd.f32 %v1582, %v1862
        %v1868 = vld [vmem:[%s17] sm:$0x1]
        %v1869 = vld [vmem:[%s18] sm:$0x1]
        %v1870 = vsel %vm737, %v1867, 0.0
        %1871 = vadd.xlane.f32.xlu0 %v1870
        %v1872 = vpop.xlane.xlu0 %1871
        %v1873 = vmul.f32 %v1872, %v1558
        %v1874 = vsub.f32 %v1867, %v1873
        %v1875 = vmul.f32 %v1874, %v1874
        %v1876 = vsel %vm737, %v1875, 0.0
        %1877 = vadd.xlane.f32.xlu0 %v1876
        %v1878 = vpop.xlane.xlu0 %1877
        %v1879 = vmul.f32 %v1878, %v1558
        %v1880 = vadd.f32 %v1879, 1e-05
        %v1881 = vrsqrt.pop %v1880
        %v1882 = vmul.f32 %v1874, %v1881
        %v1884 = vlaneseq
        %v1885 = vshrl.u32 %v1884, 7
        %v1886 = vsub.s32 0, %v1885
        %v1887 = vrot.slane %v1868, %v1886
        %v1889 = vmul.f32 %v1882, %v1887
        %v1891 = vlaneseq
        %v1892 = vshrl.u32 %v1891, 7
        %v1893 = vsub.s32 0, %v1892
        %v1894 = vrot.slane %v1869, %v1893
        %v1896 = vadd.f32 %v1889, %v1894
        %v1897 = vpack.c.bf16 %v1896, %v1896
        %s1898 = scalar_lea.vmem %s3, 32
        %v1899 = vld [vmem:[%s1898] sm:$0xf]
        %v1900 = vld [vmem:[%s1898 + $0x4] sm:$0xf]
        %v1901 = vld [vmem:[%s1898 + $0x8] sm:$0xf]
        %v1902 = vld [vmem:[%s1898 + $0xc] sm:$0xf]
        %v1903 = vld [vmem:[%s1898 + $0x10] sm:$0xf]
        %v1904 = vld [vmem:[%s1898 + $0x14] sm:$0xf]
        %v1905 = vld [vmem:[%s1898 + $0x18] sm:$0xf]
        %v1906 = vld [vmem:[%s1898 + $0x1c] sm:$0xf]
        %s1907 = scalar_lea.vmem [#allocation7], 1
        %v1908 = vld [vmem:[%s1907] sm:$0x1]
        %v1910 = vlaneseq
        %v1911 = vshrl.u32 %v1910, 7
        %v1912 = vsub.s32 0, %v1911
        %v1913 = vrot.slane %v1908, %v1912
        %v1923 = vunpack.c.l.b16 %v1899
        %v1924 = vunpack.c.l.b16 %v1900
        %v1925 = vunpack.c.l.b16 %v1901
        %v1926 = vunpack.c.l.b16 %v1902
        %v1927 = vunpack.c.l.b16 %v1903
        %v1928 = vunpack.c.l.b16 %v1904
        %v1929 = vunpack.c.l.b16 %v1905
        %v1930 = vunpack.c.l.b16 %v1906
        %v1931 = vpack.c.b16 %v1924, %v1923
        %v1932 = vpack.c.b16 %v1926, %v1925
        %v1933 = vpack.c.b16 %v1928, %v1927
        %v1934 = vpack.c.b16 %v1930, %v1929
        %v1940 = vsel %vm737, %v1897, 0
        %1942 = vmatprep.subr.bf16.mxu0 0
        %1943 = vmatpush1.bf16.msra.mxu0 %v1931
        %1944 = vmatprep.subr.bf16.mxu0 0
        %1945 = vmatpush1.bf16.msra.mxu0 %v1932
        %1946 = vmatprep.subr.bf16.mxu0 0
        %1947 = vmatpush1.bf16.msra.mxu0 %v1933
        %1948 = vmatprep.subr.bf16.mxu0 0
        %1949 = vmatpush1.bf16.msra.mxu0 %v1934
        %1950 = vmatprep.subr.bf16.mxu0 0
        %1951 = vmatpush1.bf16.msra.mxu0 0
        %1952 = vmatprep.subr.bf16.mxu0 0
        %1953 = vmatpush1.bf16.msra.mxu0 0
        %1954 = vmatprep.subr.bf16.mxu0 0
        %1955 = vmatpush1.bf16.msra.mxu0 0
        %1956 = vmatprep.subr.bf16.mxu0 0
        %1957 = vmatpush1.bf16.msra.mxu0 0
        %1958 = vmatprep.subr.bf16.mxu0 0
        %1959 = vmatpush1.bf16.msra.mxu0 0
        %1960 = vmatprep.subr.bf16.mxu0 0
        %1961 = vmatpush1.bf16.msra.mxu0 0
        %1962 = vmatprep.subr.bf16.mxu0 0
        %1963 = vmatpush1.bf16.msra.mxu0 0
        %1964 = vmatprep.subr.bf16.mxu0 0
        %1965 = vmatpush1.bf16.msra.mxu0 0
        %1966 = vmatprep.subr.bf16.mxu0 0
        %1967 = vmatpush1.bf16.msra.mxu0 0
        %1968 = vmatprep.subr.bf16.mxu0 0
        %1969 = vmatpush1.bf16.msra.mxu0 0
        %1970 = vmatprep.subr.bf16.mxu0 0
        %1971 = vmatpush1.bf16.msra.mxu0 0
        %1972 = vmatprep.subr.bf16.mxu0 0
        %1973 = vmatpush1.bf16.msra.mxu0 0
        %1974 = vmatprep.mubr.bf16.mxu0 0
        %1975 = vmatmul.mubr.bf16.gmra.mrb[0].mxu0 %v1940
        %v1976 = vpop.f32.mrb[0].mxu0
        %v1977 = vadd.f32 %v1913, %v1976
        %v1978 = vpop.f32.mrb[0].mxu0
        %v1979 = vpop.f32.mrb[0].mxu0
        %v1980 = vpop.f32.mrb[0].mxu0
        %1981 = vdwg.mxu0
        %v1982 = vmul.f32 %v1977, 0.25
        %s1983 = scalar_lea.vmem %s5, 32
        %v1984 = vld [vmem:[%s1983] sm:$0xf]
        %v1985 = vld [vmem:[%s1983 + $0x4] sm:$0xf]
        %v1986 = vld [vmem:[%s1983 + $0x8] sm:$0xf]
        %v1987 = vld [vmem:[%s1983 + $0xc] sm:$0xf]
        %v1988 = vld [vmem:[%s1983 + $0x10] sm:$0xf]
        %v1989 = vld [vmem:[%s1983 + $0x14] sm:$0xf]
        %v1990 = vld [vmem:[%s1983 + $0x18] sm:$0xf]
        %v1991 = vld [vmem:[%s1983 + $0x1c] sm:$0xf]
        %s1992 = scalar_lea.vmem %s6, 1
        %v1993 = vld [vmem:[%s1992] sm:$0x1]
        %v1995 = vlaneseq
        %v1996 = vshrl.u32 %v1995, 7
        %v1997 = vsub.s32 0, %v1996
        %v1998 = vrot.slane %v1993, %v1997
        %v2008 = vunpack.c.l.b16 %v1984
        %v2009 = vunpack.c.l.b16 %v1985
        %v2010 = vunpack.c.l.b16 %v1986
        %v2011 = vunpack.c.l.b16 %v1987
        %v2012 = vunpack.c.l.b16 %v1988
        %v2013 = vunpack.c.l.b16 %v1989
        %v2014 = vunpack.c.l.b16 %v1990
        %v2015 = vunpack.c.l.b16 %v1991
        %v2016 = vpack.c.b16 %v2009, %v2008
        %v2017 = vpack.c.b16 %v2011, %v2010
        %v2018 = vpack.c.b16 %v2013, %v2012
        %v2019 = vpack.c.b16 %v2015, %v2014
        %2024 = vmatprep.subr.bf16.mxu0 0
        %2025 = vmatpush1.bf16.msra.mxu0 %v2016
        %2026 = vmatprep.subr.bf16.mxu0 0
        %2027 = vmatpush1.bf16.msra.mxu0 %v2017
        %2028 = vmatprep.subr.bf16.mxu0 0
        %2029 = vmatpush1.bf16.msra.mxu0 %v2018
        %2030 = vmatprep.subr.bf16.mxu0 0
        %2031 = vmatpush1.bf16.msra.mxu0 %v2019
        %2032 = vmatprep.subr.bf16.mxu0 0
        %2033 = vmatpush1.bf16.msra.mxu0 0
        %2034 = vmatprep.subr.bf16.mxu0 0
        %2035 = vmatpush1.bf16.msra.mxu0 0
        %2036 = vmatprep.subr.bf16.mxu0 0
        %2037 = vmatpush1.bf16.msra.mxu0 0
        %2038 = vmatprep.subr.bf16.mxu0 0
        %2039 = vmatpush1.bf16.msra.mxu0 0
        %2040 = vmatprep.subr.bf16.mxu0 0
        %2041 = vmatpush1.bf16.msra.mxu0 0
        %2042 = vmatprep.subr.bf16.mxu0 0
        %2043 = vmatpush1.bf16.msra.mxu0 0
        %2044 = vmatprep.subr.bf16.mxu0 0
        %2045 = vmatpush1.bf16.msra.mxu0 0
        %2046 = vmatprep.subr.bf16.mxu0 0
        %2047 = vmatpush1.bf16.msra.mxu0 0
        %2048 = vmatprep.subr.bf16.mxu0 0
        %2049 = vmatpush1.bf16.msra.mxu0 0
        %2050 = vmatprep.subr.bf16.mxu0 0
        %2051 = vmatpush1.bf16.msra.mxu0 0
        %2052 = vmatprep.subr.bf16.mxu0 0
        %2053 = vmatpush1.bf16.msra.mxu0 0
        %2054 = vmatprep.subr.bf16.mxu0 0
        %2055 = vmatpush1.bf16.msra.mxu0 0
        %2056 = vmatprep.mubr.bf16.mxu0 0
        %2057 = vmatmul.mubr.bf16.gmra.mrb[0].mxu0 %v1940
        %v2058 = vpop.f32.mrb[0].mxu0
        %v2059 = vadd.f32 %v1998, %v2058
        %v2060 = vpop.f32.mrb[0].mxu0
        %v2061 = vpop.f32.mrb[0].mxu0
        %v2062 = vpop.f32.mrb[0].mxu0
        %2063 = vdwg.mxu0
        %s2064 = scalar_lea.vmem %s7, 32
        %v2065 = vld [vmem:[%s2064] sm:$0xf]
        %v2066 = vld [vmem:[%s2064 + $0x4] sm:$0xf]
        %v2067 = vld [vmem:[%s2064 + $0x8] sm:$0xf]
        %v2068 = vld [vmem:[%s2064 + $0xc] sm:$0xf]
        %v2069 = vld [vmem:[%s2064 + $0x10] sm:$0xf]
        %v2070 = vld [vmem:[%s2064 + $0x14] sm:$0xf]
        %v2071 = vld [vmem:[%s2064 + $0x18] sm:$0xf]
        %v2072 = vld [vmem:[%s2064 + $0x1c] sm:$0xf]
        %s2073 = scalar_lea.vmem %s8, 1
        %v2074 = vld [vmem:[%s2073] sm:$0x1]
        %v2076 = vlaneseq
        %v2077 = vshrl.u32 %v2076, 7
        %v2078 = vsub.s32 0, %v2077
        %v2079 = vrot.slane %v2074, %v2078
        %v2089 = vunpack.c.l.b16 %v2065
        %v2090 = vunpack.c.l.b16 %v2066
        %v2091 = vunpack.c.l.b16 %v2067
        %v2092 = vunpack.c.l.b16 %v2068
        %v2093 = vunpack.c.l.b16 %v2069
        %v2094 = vunpack.c.l.b16 %v2070
        %v2095 = vunpack.c.l.b16 %v2071
        %v2096 = vunpack.c.l.b16 %v2072
        %v2097 = vpack.c.b16 %v2090, %v2089
        %v2098 = vpack.c.b16 %v2092, %v2091
        %v2099 = vpack.c.b16 %v2094, %v2093
        %v2100 = vpack.c.b16 %v2096, %v2095
        %2105 = vmatprep.subr.bf16.mxu0 0
        %2106 = vmatpush1.bf16.msra.mxu0 %v2097
        %2107 = vmatprep.subr.bf16.mxu0 0
        %2108 = vmatpush1.bf16.msra.mxu0 %v2098
        %2109 = vmatprep.subr.bf16.mxu0 0
        %2110 = vmatpush1.bf16.msra.mxu0 %v2099
        %2111 = vmatprep.subr.bf16.mxu0 0
        %2112 = vmatpush1.bf16.msra.mxu0 %v2100
        %2113 = vmatprep.subr.bf16.mxu0 0
        %2114 = vmatpush1.bf16.msra.mxu0 0
        %2115 = vmatprep.subr.bf16.mxu0 0
        %2116 = vmatpush1.bf16.msra.mxu0 0
        %2117 = vmatprep.subr.bf16.mxu0 0
        %2118 = vmatpush1.bf16.msra.mxu0 0
        %2119 = vmatprep.subr.bf16.mxu0 0
        %2120 = vmatpush1.bf16.msra.mxu0 0
        %2121 = vmatprep.subr.bf16.mxu0 0
        %2122 = vmatpush1.bf16.msra.mxu0 0
        %2123 = vmatprep.subr.bf16.mxu0 0
        %2124 = vmatpush1.bf16.msra.mxu0 0
        %2125 = vmatprep.subr.bf16.mxu0 0
        %2126 = vmatpush1.bf16.msra.mxu0 0
        %2127 = vmatprep.subr.bf16.mxu0 0
        %2128 = vmatpush1.bf16.msra.mxu0 0
        %2129 = vmatprep.subr.bf16.mxu0 0
        %2130 = vmatpush1.bf16.msra.mxu0 0
        %2131 = vmatprep.subr.bf16.mxu0 0
        %2132 = vmatpush1.bf16.msra.mxu0 0
        %2133 = vmatprep.subr.bf16.mxu0 0
        %2134 = vmatpush1.bf16.msra.mxu0 0
        %2135 = vmatprep.subr.bf16.mxu0 0
        %2136 = vmatpush1.bf16.msra.mxu0 0
        %2137 = vmatprep.mubr.bf16.mxu0 0
        %2138 = vmatmul.mubr.bf16.gmra.mrb[0].mxu0 %v1940
        %v2139 = vpop.f32.mrb[0].mxu0
        %v2140 = vadd.f32 %v2079, %v2139
        %v2141 = vpop.f32.mrb[0].mxu0
        %v2142 = vpop.f32.mrb[0].mxu0
        %v2143 = vpop.f32.mrb[0].mxu0
        %2144 = vdwg.mxu0
        %v2145 = vpack.c.bf16 %v1982, %v1982
        %v2146 = vpack.c.bf16 %v2059, %v2059
        %v2147 = vpack.c.bf16 %v2140, %v2140
        %v2148 = vmul.bf16 %v2145, %v786
        %v2150 = vsel %vm737, %v2148, 0
        %v2153 = vsel %vm737, %v2146, 0
        %2155 = vmatprep.subr.bf16.mxu0 0
        %2156 = vmatpush1.bf16.xpose.msra.mxu0 %v2153
        %2157 = vmatprep.subr.bf16.mxu0 0
        %2158 = vmatpush1.bf16.xpose.msra.mxu0 0
        %2159 = vmatprep.subr.bf16.mxu0 0
        %2160 = vmatpush1.bf16.xpose.msra.mxu0 0
        %2161 = vmatprep.subr.bf16.mxu0 0
        %2162 = vmatpush1.bf16.xpose.msra.mxu0 0
        %2163 = vmatprep.subr.bf16.mxu0 0
        %2164 = vmatpush1.bf16.xpose.msra.mxu0 0
        %2165 = vmatprep.subr.bf16.mxu0 0
        %2166 = vmatpush1.bf16.xpose.msra.mxu0 0
        %2167 = vmatprep.subr.bf16.mxu0 0
        %2168 = vmatpush1.bf16.xpose.msra.mxu0 0
        %2169 = vmatprep.subr.bf16.mxu0 0
        %2170 = vmatpush1.bf16.xpose.msra.mxu0 0
        %2171 = vmatprep.subr.bf16.mxu0 0
        %2172 = vmatpush1.bf16.xpose.msra.mxu0 0
        %2173 = vmatprep.subr.bf16.mxu0 0
        %2174 = vmatpush1.bf16.xpose.msra.mxu0 0
        %2175 = vmatprep.subr.bf16.mxu0 0
        %2176 = vmatpush1.bf16.xpose.msra.mxu0 0
        %2177 = vmatprep.subr.bf16.mxu0 0
        %2178 = vmatpush1.bf16.xpose.msra.mxu0 0
        %2179 = vmatprep.subr.bf16.mxu0 0
        %2180 = vmatpush1.bf16.xpose.msra.mxu0 0
        %2181 = vmatprep.subr.bf16.mxu0 0
        %2182 = vmatpush1.bf16.xpose.msra.mxu0 0
        %2183 = vmatprep.subr.bf16.mxu0 0
        %2184 = vmatpush1.bf16.xpose.msra.mxu0 0
        %2185 = vmatprep.subr.bf16.mxu0 0
        %2186 = vmatpush1.bf16.xpose.msra.mxu0 0
        %2187 = vmatprep.mubr.bf16.mxu0 0
        %2188 = vmatmul.mubr.bf16.gmra.mrb[0].mxu0 %v2150
        %v2189 = vpop.f32.mrb[0].mxu0
        %v2190 = vadd.f32 0.0, %v2189
        %v2191 = vpop.f32.mrb[0].mxu0
        %v2192 = vpop.f32.mrb[0].mxu0
        %v2193 = vpop.f32.mrb[0].mxu0
        %2194 = vdwg.mxu0
        %v2195 = vsel %vm1097, %v2190, -inf
        %2196 = vmax.xlane.f32.xlu0 %v2195
        %v2197 = vpop.xlane.xlu0 %2196
        %v2198 = vsub.f32 %v2190, %v2197
        %v2199 = vmul.f32 %v2198, 1.442695
        %v2200 = vpow.pop %v2199
        %v2201 = vsel %vm1097, %v2200, 0.0
        %2202 = vadd.xlane.f32.xlu0 %v2201
        %v2203 = vpop.xlane.xlu0 %2202
        %v2204 = vrcp.pop %v2203
        %v2205 = vmul.f32 %v2200, %v2204
        %v2206 = vpack.c.bf16 %v2205, %v2205
        %v2207 = vmul.bf16 %v2147, %v786
        %v2208 = vmul.bf16 %v2145, %v792
        %v2210 = vsel %vm737, %v2208, 0
        %2212 = vmatprep.subr.bf16.mxu0 0
        %2213 = vmatpush1.bf16.xpose.msra.mxu0 %v2153
        %2214 = vmatprep.subr.bf16.mxu0 0
        %2215 = vmatpush1.bf16.xpose.msra.mxu0 0
        %2216 = vmatprep.subr.bf16.mxu0 0
        %2217 = vmatpush1.bf16.xpose.msra.mxu0 0
        %2218 = vmatprep.subr.bf16.mxu0 0
        %2219 = vmatpush1.bf16.xpose.msra.mxu0 0
        %2220 = vmatprep.subr.bf16.mxu0 0
        %2221 = vmatpush1.bf16.xpose.msra.mxu0 0
        %2222 = vmatprep.subr.bf16.mxu0 0
        %2223 = vmatpush1.bf16.xpose.msra.mxu0 0
        %2224 = vmatprep.subr.bf16.mxu0 0
        %2225 = vmatpush1.bf16.xpose.msra.mxu0 0
        %2226 = vmatprep.subr.bf16.mxu0 0
        %2227 = vmatpush1.bf16.xpose.msra.mxu0 0
        %2228 = vmatprep.subr.bf16.mxu0 0
        %2229 = vmatpush1.bf16.xpose.msra.mxu0 0
        %2230 = vmatprep.subr.bf16.mxu0 0
        %2231 = vmatpush1.bf16.xpose.msra.mxu0 0
        %2232 = vmatprep.subr.bf16.mxu0 0
        %2233 = vmatpush1.bf16.xpose.msra.mxu0 0
        %2234 = vmatprep.subr.bf16.mxu0 0
        %2235 = vmatpush1.bf16.xpose.msra.mxu0 0
        %2236 = vmatprep.subr.bf16.mxu0 0
        %2237 = vmatpush1.bf16.xpose.msra.mxu0 0
        %2238 = vmatprep.subr.bf16.mxu0 0
        %2239 = vmatpush1.bf16.xpose.msra.mxu0 0
        %2240 = vmatprep.subr.bf16.mxu0 0
        %2241 = vmatpush1.bf16.xpose.msra.mxu0 0
        %2242 = vmatprep.subr.bf16.mxu0 0
        %2243 = vmatpush1.bf16.xpose.msra.mxu0 0
        %2244 = vmatprep.mubr.bf16.mxu0 0
        %2245 = vmatmul.mubr.bf16.gmra.mrb[0].mxu0 %v2210
        %v2246 = vpop.f32.mrb[0].mxu0
        %v2247 = vadd.f32 0.0, %v2246
        %v2248 = vpop.f32.mrb[0].mxu0
        %v2249 = vpop.f32.mrb[0].mxu0
        %v2250 = vpop.f32.mrb[0].mxu0
        %2251 = vdwg.mxu0
        %v2252 = vsel %vm1097, %v2247, -inf
        %2253 = vmax.xlane.f32.xlu0 %v2252
        %v2254 = vpop.xlane.xlu0 %2253
        %v2255 = vsub.f32 %v2247, %v2254
        %v2256 = vmul.f32 %v2255, 1.442695
        %v2257 = vpow.pop %v2256
        %v2258 = vsel %vm1097, %v2257, 0.0
        %2259 = vadd.xlane.f32.xlu0 %v2258
        %v2260 = vpop.xlane.xlu0 %2259
        %v2261 = vrcp.pop %v2260
        %v2262 = vmul.f32 %v2257, %v2261
        %v2263 = vpack.c.bf16 %v2262, %v2262
        %v2264 = vmul.bf16 %v2147, %v792
        %v2266 = vsel %vm1097, %v2263, 0
        %v2269 = vsel %vm1171, %v2264, 0
        %2271 = vmatprep.subr.bf16.mxu0 0
        %2272 = vmatpush1.bf16.msra.mxu0 %v2269
        %2273 = vmatprep.subr.bf16.mxu0 0
        %2274 = vmatpush1.bf16.msra.mxu0 0
        %2275 = vmatprep.subr.bf16.mxu0 0
        %2276 = vmatpush1.bf16.msra.mxu0 0
        %2277 = vmatprep.subr.bf16.mxu0 0
        %2278 = vmatpush1.bf16.msra.mxu0 0
        %2279 = vmatprep.subr.bf16.mxu0 0
        %2280 = vmatpush1.bf16.msra.mxu0 0
        %2281 = vmatprep.subr.bf16.mxu0 0
        %2282 = vmatpush1.bf16.msra.mxu0 0
        %2283 = vmatprep.subr.bf16.mxu0 0
        %2284 = vmatpush1.bf16.msra.mxu0 0
        %2285 = vmatprep.subr.bf16.mxu0 0
        %2286 = vmatpush1.bf16.msra.mxu0 0
        %2287 = vmatprep.subr.bf16.mxu0 0
        %2288 = vmatpush1.bf16.msra.mxu0 0
        %2289 = vmatprep.subr.bf16.mxu0 0
        %2290 = vmatpush1.bf16.msra.mxu0 0
        %2291 = vmatprep.subr.bf16.mxu0 0
        %2292 = vmatpush1.bf16.msra.mxu0 0
        %2293 = vmatprep.subr.bf16.mxu0 0
        %2294 = vmatpush1.bf16.msra.mxu0 0
        %2295 = vmatprep.subr.bf16.mxu0 0
        %2296 = vmatpush1.bf16.msra.mxu0 0
        %2297 = vmatprep.subr.bf16.mxu0 0
        %2298 = vmatpush1.bf16.msra.mxu0 0
        %2299 = vmatprep.subr.bf16.mxu0 0
        %2300 = vmatpush1.bf16.msra.mxu0 0
        %2301 = vmatprep.subr.bf16.mxu0 0
        %2302 = vmatpush1.bf16.msra.mxu0 0
        %2303 = vmatprep.mubr.bf16.mxu0 0
        %2304 = vmatmul.mubr.bf16.gmra.mrb[0].mxu0 %v2266
        %v2305 = vpop.f32.mrb[0].mxu0
        %v2306 = vadd.f32 0.0, %v2305
        %v2307 = vpop.f32.mrb[0].mxu0
        %v2308 = vpop.f32.mrb[0].mxu0
        %v2309 = vpop.f32.mrb[0].mxu0
        %2310 = vdwg.mxu0
        %v2312 = vsel %vm1097, %v2206, 0
        %v2315 = vsel %vm1171, %v2207, 0
        %2317 = vmatprep.subr.bf16.mxu0 0
        %2318 = vmatpush1.bf16.msra.mxu0 %v2315
        %2319 = vmatprep.subr.bf16.mxu0 0
        %2320 = vmatpush1.bf16.msra.mxu0 0
        %2321 = vmatprep.subr.bf16.mxu0 0
        %2322 = vmatpush1.bf16.msra.mxu0 0
        %2323 = vmatprep.subr.bf16.mxu0 0
        %2324 = vmatpush1.bf16.msra.mxu0 0
        %2325 = vmatprep.subr.bf16.mxu0 0
        %2326 = vmatpush1.bf16.msra.mxu0 0
        %2327 = vmatprep.subr.bf16.mxu0 0
        %2328 = vmatpush1.bf16.msra.mxu0 0
        %2329 = vmatprep.subr.bf16.mxu0 0
        %2330 = vmatpush1.bf16.msra.mxu0 0
        %2331 = vmatprep.subr.bf16.mxu0 0
        %2332 = vmatpush1.bf16.msra.mxu0 0
        %2333 = vmatprep.subr.bf16.mxu0 0
        %2334 = vmatpush1.bf16.msra.mxu0 0
        %2335 = vmatprep.subr.bf16.mxu0 0
        %2336 = vmatpush1.bf16.msra.mxu0 0
        %2337 = vmatprep.subr.bf16.mxu0 0
        %2338 = vmatpush1.bf16.msra.mxu0 0
        %2339 = vmatprep.subr.bf16.mxu0 0
        %2340 = vmatpush1.bf16.msra.mxu0 0
        %2341 = vmatprep.subr.bf16.mxu0 0
        %2342 = vmatpush1.bf16.msra.mxu0 0
        %2343 = vmatprep.subr.bf16.mxu0 0
        %2344 = vmatpush1.bf16.msra.mxu0 0
        %2345 = vmatprep.subr.bf16.mxu0 0
        %2346 = vmatpush1.bf16.msra.mxu0 0
        %2347 = vmatprep.subr.bf16.mxu0 0
        %2348 = vmatpush1.bf16.msra.mxu0 0
        %2349 = vmatprep.mubr.bf16.mxu0 0
        %2350 = vmatmul.mubr.bf16.gmra.mrb[0].mxu0 %v2312
        %v2351 = vpop.f32.mrb[0].mxu0
        %v2352 = vadd.f32 %v2306, %v2351
        %v2353 = vpop.f32.mrb[0].mxu0
        %v2354 = vpop.f32.mrb[0].mxu0
        %v2355 = vpop.f32.mrb[0].mxu0
        %2356 = vdwg.mxu0
        %v2357 = vmul.bf16 %v2145, %v798
        %v2359 = vsel %vm737, %v2357, 0
        %2361 = vmatprep.subr.bf16.mxu0 0
        %2362 = vmatpush1.bf16.xpose.msra.mxu0 %v2153
        %2363 = vmatprep.subr.bf16.mxu0 0
        %2364 = vmatpush1.bf16.xpose.msra.mxu0 0
        %2365 = vmatprep.subr.bf16.mxu0 0
        %2366 = vmatpush1.bf16.xpose.msra.mxu0 0
        %2367 = vmatprep.subr.bf16.mxu0 0
        %2368 = vmatpush1.bf16.xpose.msra.mxu0 0
        %2369 = vmatprep.subr.bf16.mxu0 0
        %2370 = vmatpush1.bf16.xpose.msra.mxu0 0
        %2371 = vmatprep.subr.bf16.mxu0 0
        %2372 = vmatpush1.bf16.xpose.msra.mxu0 0
        %2373 = vmatprep.subr.bf16.mxu0 0
        %2374 = vmatpush1.bf16.xpose.msra.mxu0 0
        %2375 = vmatprep.subr.bf16.mxu0 0
        %2376 = vmatpush1.bf16.xpose.msra.mxu0 0
        %2377 = vmatprep.subr.bf16.mxu0 0
        %2378 = vmatpush1.bf16.xpose.msra.mxu0 0
        %2379 = vmatprep.subr.bf16.mxu0 0
        %2380 = vmatpush1.bf16.xpose.msra.mxu0 0
        %2381 = vmatprep.subr.bf16.mxu0 0
        %2382 = vmatpush1.bf16.xpose.msra.mxu0 0
        %2383 = vmatprep.subr.bf16.mxu0 0
        %2384 = vmatpush1.bf16.xpose.msra.mxu0 0
        %2385 = vmatprep.subr.bf16.mxu0 0
        %2386 = vmatpush1.bf16.xpose.msra.mxu0 0
        %2387 = vmatprep.subr.bf16.mxu0 0
        %2388 = vmatpush1.bf16.xpose.msra.mxu0 0
        %2389 = vmatprep.subr.bf16.mxu0 0
        %2390 = vmatpush1.bf16.xpose.msra.mxu0 0
        %2391 = vmatprep.subr.bf16.mxu0 0
        %2392 = vmatpush1.bf16.xpose.msra.mxu0 0
        %2393 = vmatprep.mubr.bf16.mxu0 0
        %2394 = vmatmul.mubr.bf16.gmra.mrb[0].mxu0 %v2359
        %v2395 = vpop.f32.mrb[0].mxu0
        %v2396 = vadd.f32 0.0, %v2395
        %v2397 = vpop.f32.mrb[0].mxu0
        %v2398 = vpop.f32.mrb[0].mxu0
        %v2399 = vpop.f32.mrb[0].mxu0
        %2400 = vdwg.mxu0
        %v2401 = vsel %vm1097, %v2396, -inf
        %2402 = vmax.xlane.f32.xlu0 %v2401
        %v2403 = vpop.xlane.xlu0 %2402
        %v2404 = vsub.f32 %v2396, %v2403
        %v2405 = vmul.f32 %v2404, 1.442695
        %v2406 = vpow.pop %v2405
        %v2407 = vsel %vm1097, %v2406, 0.0
        %2408 = vadd.xlane.f32.xlu0 %v2407
        %v2409 = vpop.xlane.xlu0 %2408
        %v2410 = vrcp.pop %v2409
        %v2411 = vmul.f32 %v2406, %v2410
        %v2412 = vpack.c.bf16 %v2411, %v2411
        %v2413 = vmul.bf16 %v2147, %v798
        %v2415 = vsel %vm1097, %v2412, 0
        %v2418 = vsel %vm1171, %v2413, 0
        %2420 = vmatprep.subr.bf16.mxu0 0
        %2421 = vmatpush1.bf16.msra.mxu0 %v2418
        %2422 = vmatprep.subr.bf16.mxu0 0
        %2423 = vmatpush1.bf16.msra.mxu0 0
        %2424 = vmatprep.subr.bf16.mxu0 0
        %2425 = vmatpush1.bf16.msra.mxu0 0
        %2426 = vmatprep.subr.bf16.mxu0 0
        %2427 = vmatpush1.bf16.msra.mxu0 0
        %2428 = vmatprep.subr.bf16.mxu0 0
        %2429 = vmatpush1.bf16.msra.mxu0 0
        %2430 = vmatprep.subr.bf16.mxu0 0
        %2431 = vmatpush1.bf16.msra.mxu0 0
        %2432 = vmatprep.subr.bf16.mxu0 0
        %2433 = vmatpush1.bf16.msra.mxu0 0
        %2434 = vmatprep.subr.bf16.mxu0 0
        %2435 = vmatpush1.bf16.msra.mxu0 0
        %2436 = vmatprep.subr.bf16.mxu0 0
        %2437 = vmatpush1.bf16.msra.mxu0 0
        %2438 = vmatprep.subr.bf16.mxu0 0
        %2439 = vmatpush1.bf16.msra.mxu0 0
        %2440 = vmatprep.subr.bf16.mxu0 0
        %2441 = vmatpush1.bf16.msra.mxu0 0
        %2442 = vmatprep.subr.bf16.mxu0 0
        %2443 = vmatpush1.bf16.msra.mxu0 0
        %2444 = vmatprep.subr.bf16.mxu0 0
        %2445 = vmatpush1.bf16.msra.mxu0 0
        %2446 = vmatprep.subr.bf16.mxu0 0
        %2447 = vmatpush1.bf16.msra.mxu0 0
        %2448 = vmatprep.subr.bf16.mxu0 0
        %2449 = vmatpush1.bf16.msra.mxu0 0
        %2450 = vmatprep.subr.bf16.mxu0 0
        %2451 = vmatpush1.bf16.msra.mxu0 0
        %2452 = vmatprep.mubr.bf16.mxu0 0
        %2453 = vmatmul.mubr.bf16.gmra.mrb[0].mxu0 %v2415
        %v2454 = vpop.f32.mrb[0].mxu0
        %v2455 = vadd.f32 0.0, %v2454
        %v2456 = vpop.f32.mrb[0].mxu0
        %v2457 = vpop.f32.mrb[0].mxu0
        %v2458 = vpop.f32.mrb[0].mxu0
        %2459 = vdwg.mxu0
        %v2460 = vadd.f32 %v2352, %v2455
        %v2461 = vmul.bf16 %v2145, %v804
        %v2463 = vsel %vm737, %v2461, 0
        %2465 = vmatprep.subr.bf16.mxu0 0
        %2466 = vmatpush1.bf16.xpose.msra.mxu0 %v2153
        %2467 = vmatprep.subr.bf16.mxu0 0
        %2468 = vmatpush1.bf16.xpose.msra.mxu0 0
        %2469 = vmatprep.subr.bf16.mxu0 0
        %2470 = vmatpush1.bf16.xpose.msra.mxu0 0
        %2471 = vmatprep.subr.bf16.mxu0 0
        %2472 = vmatpush1.bf16.xpose.msra.mxu0 0
        %2473 = vmatprep.subr.bf16.mxu0 0
        %2474 = vmatpush1.bf16.xpose.msra.mxu0 0
        %2475 = vmatprep.subr.bf16.mxu0 0
        %2476 = vmatpush1.bf16.xpose.msra.mxu0 0
        %2477 = vmatprep.subr.bf16.mxu0 0
        %2478 = vmatpush1.bf16.xpose.msra.mxu0 0
        %2479 = vmatprep.subr.bf16.mxu0 0
        %2480 = vmatpush1.bf16.xpose.msra.mxu0 0
        %2481 = vmatprep.subr.bf16.mxu0 0
        %2482 = vmatpush1.bf16.xpose.msra.mxu0 0
        %2483 = vmatprep.subr.bf16.mxu0 0
        %2484 = vmatpush1.bf16.xpose.msra.mxu0 0
        %2485 = vmatprep.subr.bf16.mxu0 0
        %2486 = vmatpush1.bf16.xpose.msra.mxu0 0
        %2487 = vmatprep.subr.bf16.mxu0 0
        %2488 = vmatpush1.bf16.xpose.msra.mxu0 0
        %2489 = vmatprep.subr.bf16.mxu0 0
        %2490 = vmatpush1.bf16.xpose.msra.mxu0 0
        %2491 = vmatprep.subr.bf16.mxu0 0
        %2492 = vmatpush1.bf16.xpose.msra.mxu0 0
        %2493 = vmatprep.subr.bf16.mxu0 0
        %2494 = vmatpush1.bf16.xpose.msra.mxu0 0
        %2495 = vmatprep.subr.bf16.mxu0 0
        %2496 = vmatpush1.bf16.xpose.msra.mxu0 0
        %2497 = vmatprep.mubr.bf16.mxu0 0
        %2498 = vmatmul.mubr.bf16.gmra.mrb[0].mxu0 %v2463
        %v2499 = vpop.f32.mrb[0].mxu0
        %v2500 = vadd.f32 0.0, %v2499
        %v2501 = vpop.f32.mrb[0].mxu0
        %v2502 = vpop.f32.mrb[0].mxu0
        %v2503 = vpop.f32.mrb[0].mxu0
        %2504 = vdwg.mxu0
        %v2505 = vsel %vm1097, %v2500, -inf
        %2506 = vmax.xlane.f32.xlu0 %v2505
        %v2507 = vpop.xlane.xlu0 %2506
        %v2508 = vsub.f32 %v2500, %v2507
        %v2509 = vmul.f32 %v2508, 1.442695
        %v2510 = vpow.pop %v2509
        %v2511 = vsel %vm1097, %v2510, 0.0
        %2512 = vadd.xlane.f32.xlu0 %v2511
        %v2513 = vpop.xlane.xlu0 %2512
        %v2514 = vrcp.pop %v2513
        %v2515 = vmul.f32 %v2510, %v2514
        %v2516 = vpack.c.bf16 %v2515, %v2515
        %v2517 = vmul.bf16 %v2147, %v804
        %v2519 = vsel %vm1097, %v2516, 0
        %v2522 = vsel %vm1171, %v2517, 0
        %2524 = vmatprep.subr.bf16.mxu0 0
        %2525 = vmatpush1.bf16.msra.mxu0 %v2522
        %2526 = vmatprep.subr.bf16.mxu0 0
        %2527 = vmatpush1.bf16.msra.mxu0 0
        %2528 = vmatprep.subr.bf16.mxu0 0
        %2529 = vmatpush1.bf16.msra.mxu0 0
        %2530 = vmatprep.subr.bf16.mxu0 0
        %2531 = vmatpush1.bf16.msra.mxu0 0
        %2532 = vmatprep.subr.bf16.mxu0 0
        %2533 = vmatpush1.bf16.msra.mxu0 0
        %2534 = vmatprep.subr.bf16.mxu0 0
        %2535 = vmatpush1.bf16.msra.mxu0 0
        %2536 = vmatprep.subr.bf16.mxu0 0
        %2537 = vmatpush1.bf16.msra.mxu0 0
        %2538 = vmatprep.subr.bf16.mxu0 0
        %2539 = vmatpush1.bf16.msra.mxu0 0
        %2540 = vmatprep.subr.bf16.mxu0 0
        %2541 = vmatpush1.bf16.msra.mxu0 0
        %2542 = vmatprep.subr.bf16.mxu0 0
        %2543 = vmatpush1.bf16.msra.mxu0 0
        %2544 = vmatprep.subr.bf16.mxu0 0
        %2545 = vmatpush1.bf16.msra.mxu0 0
        %2546 = vmatprep.subr.bf16.mxu0 0
        %2547 = vmatpush1.bf16.msra.mxu0 0
        %2548 = vmatprep.subr.bf16.mxu0 0
        %2549 = vmatpush1.bf16.msra.mxu0 0
        %2550 = vmatprep.subr.bf16.mxu0 0
        %2551 = vmatpush1.bf16.msra.mxu0 0
        %2552 = vmatprep.subr.bf16.mxu0 0
        %2553 = vmatpush1.bf16.msra.mxu0 0
        %2554 = vmatprep.subr.bf16.mxu0 0
        %2555 = vmatpush1.bf16.msra.mxu0 0
        %2556 = vmatprep.mubr.bf16.mxu0 0
        %2557 = vmatmul.mubr.bf16.gmra.mrb[0].mxu0 %v2519
        %v2558 = vpop.f32.mrb[0].mxu0
        %v2559 = vadd.f32 0.0, %v2558
        %v2560 = vpop.f32.mrb[0].mxu0
        %v2561 = vpop.f32.mrb[0].mxu0
        %v2562 = vpop.f32.mrb[0].mxu0
        %2563 = vdwg.mxu0
        %v2564 = vadd.f32 %v2460, %v2559
        %v2565 = vpack.c.bf16 %v2564, %v2564
        %s2566 = scalar_lea.vmem %s9, 32
        %v2567 = vld [vmem:[%s2566] sm:$0xf]
        %v2568 = vld [vmem:[%s2566 + $0x4] sm:$0xf]
        %v2569 = vld [vmem:[%s2566 + $0x8] sm:$0xf]
        %v2570 = vld [vmem:[%s2566 + $0xc] sm:$0xf]
        %v2571 = vld [vmem:[%s2566 + $0x10] sm:$0xf]
        %v2572 = vld [vmem:[%s2566 + $0x14] sm:$0xf]
        %v2573 = vld [vmem:[%s2566 + $0x18] sm:$0xf]
        %v2574 = vld [vmem:[%s2566 + $0x1c] sm:$0xf]
        %s2575 = scalar_lea.vmem %s10, 1
        %v2576 = vld [vmem:[%s2575] sm:$0x1]
        %v2578 = vlaneseq
        %v2579 = vshrl.u32 %v2578, 7
        %v2580 = vsub.s32 0, %v2579
        %v2581 = vrot.slane %v2576, %v2580
        %v2591 = vunpack.c.l.b16 %v2567
        %v2592 = vunpack.c.l.b16 %v2568
        %v2593 = vunpack.c.l.b16 %v2569
        %v2594 = vunpack.c.l.b16 %v2570
        %v2595 = vunpack.c.l.b16 %v2571
        %v2596 = vunpack.c.l.b16 %v2572
        %v2597 = vunpack.c.l.b16 %v2573
        %v2598 = vunpack.c.l.b16 %v2574
        %v2599 = vpack.c.b16 %v2592, %v2591
        %v2600 = vpack.c.b16 %v2594, %v2593
        %v2601 = vpack.c.b16 %v2596, %v2595
        %v2602 = vpack.c.b16 %v2598, %v2597
        %v2608 = vsel %vm737, %v2565, 0
        %2610 = vmatprep.subr.bf16.mxu0 0
        %2611 = vmatpush1.bf16.msra.mxu0 %v2599
        %2612 = vmatprep.subr.bf16.mxu0 0
        %2613 = vmatpush1.bf16.msra.mxu0 %v2600
        %2614 = vmatprep.subr.bf16.mxu0 0
        %2615 = vmatpush1.bf16.msra.mxu0 %v2601
        %2616 = vmatprep.subr.bf16.mxu0 0
        %2617 = vmatpush1.bf16.msra.mxu0 %v2602
        %2618 = vmatprep.subr.bf16.mxu0 0
        %2619 = vmatpush1.bf16.msra.mxu0 0
        %2620 = vmatprep.subr.bf16.mxu0 0
        %2621 = vmatpush1.bf16.msra.mxu0 0
        %2622 = vmatprep.subr.bf16.mxu0 0
        %2623 = vmatpush1.bf16.msra.mxu0 0
        %2624 = vmatprep.subr.bf16.mxu0 0
        %2625 = vmatpush1.bf16.msra.mxu0 0
        %2626 = vmatprep.subr.bf16.mxu0 0
        %2627 = vmatpush1.bf16.msra.mxu0 0
        %2628 = vmatprep.subr.bf16.mxu0 0
        %2629 = vmatpush1.bf16.msra.mxu0 0
        %2630 = vmatprep.subr.bf16.mxu0 0
        %2631 = vmatpush1.bf16.msra.mxu0 0
        %2632 = vmatprep.subr.bf16.mxu0 0
        %2633 = vmatpush1.bf16.msra.mxu0 0
        %2634 = vmatprep.subr.bf16.mxu0 0
        %2635 = vmatpush1.bf16.msra.mxu0 0
        %2636 = vmatprep.subr.bf16.mxu0 0
        %2637 = vmatpush1.bf16.msra.mxu0 0
        %2638 = vmatprep.subr.bf16.mxu0 0
        %2639 = vmatpush1.bf16.msra.mxu0 0
        %2640 = vmatprep.subr.bf16.mxu0 0
        %2641 = vmatpush1.bf16.msra.mxu0 0
        %2642 = vmatprep.mubr.bf16.mxu0 0
        %2643 = vmatmul.mubr.bf16.gmra.mrb[0].mxu0 %v2608
        %v2644 = vpop.f32.mrb[0].mxu0
        %v2645 = vadd.f32 %v2581, %v2644
        %v2646 = vpop.f32.mrb[0].mxu0
        %v2647 = vpop.f32.mrb[0].mxu0
        %v2648 = vpop.f32.mrb[0].mxu0
        %2649 = vdwg.mxu0
        %v2650 = vadd.f32 %v1896, %v2645
        %s2651 = scalar_lea.vmem %s15, 1
        %v2652 = vld [vmem:[%s2651] sm:$0x1]
        %s2653 = scalar_lea.vmem %s16, 1
        %v2654 = vld [vmem:[%s2653] sm:$0x1]
        %v2655 = vsel %vm737, %v2650, 0.0
        %2656 = vadd.xlane.f32.xlu0 %v2655
        %v2657 = vpop.xlane.xlu0 %2656
        %v2658 = vmul.f32 %v2657, %v1558
        %v2659 = vsub.f32 %v2650, %v2658
        %v2660 = vmul.f32 %v2659, %v2659
        %v2661 = vsel %vm737, %v2660, 0.0
        %2662 = vadd.xlane.f32.xlu0 %v2661
        %v2663 = vpop.xlane.xlu0 %2662
        %v2664 = vmul.f32 %v2663, %v1558
        %v2665 = vadd.f32 %v2664, 1e-05
        %v2666 = vrsqrt.pop %v2665
        %v2667 = vmul.f32 %v2659, %v2666
        %v2669 = vlaneseq
        %v2670 = vshrl.u32 %v2669, 7
        %v2671 = vsub.s32 0, %v2670
        %v2672 = vrot.slane %v2652, %v2671
        %v2674 = vmul.f32 %v2667, %v2672
        %v2676 = vlaneseq
        %v2677 = vshrl.u32 %v2676, 7
        %v2678 = vsub.s32 0, %v2677
        %v2679 = vrot.slane %v2654, %v2678
        %v2681 = vadd.f32 %v2674, %v2679
        %v2682 = vpack.c.bf16 %v2681, %v2681
        %s2683 = scalar_lea.vmem %s11, 64
        %v2684 = vld [vmem:[%s2683] sm:$0xff]
        %v2685 = vld [vmem:[%s2683 + $0x8] sm:$0xff]
        %v2686 = vld [vmem:[%s2683 + $0x10] sm:$0xff]
        %v2687 = vld [vmem:[%s2683 + $0x18] sm:$0xff]
        %v2688 = vld [vmem:[%s2683 + $0x20] sm:$0xff]
        %v2689 = vld [vmem:[%s2683 + $0x28] sm:$0xff]
        %v2690 = vld [vmem:[%s2683 + $0x30] sm:$0xff]
        %v2691 = vld [vmem:[%s2683 + $0x38] sm:$0xff]
        %s2692 = scalar_lea.vmem %s12, 2
        %v2693 = vld [vmem:[%s2692] sm:$0x3]
        %v2695 = vlaneseq
        %v2696 = vshrl.u32 %v2695, 7
        %v2697 = vsub.s32 0, %v2696
        %v2698 = vrot.slane %v2693, %v2697
        %v2699 = vlaneseq
        %v2700 = vshrl.u32 %v2699, 7
        %v2701 = vsub.s32 1, %v2700
        %v2702 = vrot.slane %v2693, %v2701
        %v2713 = vunpack.c.l.b16 %v2684
        %v2714 = vunpack.c.h.b16 %v2684
        %v2715 = vunpack.c.l.b16 %v2685
        %v2716 = vunpack.c.h.b16 %v2685
        %v2717 = vunpack.c.l.b16 %v2686
        %v2718 = vunpack.c.h.b16 %v2686
        %v2719 = vunpack.c.l.b16 %v2687
        %v2720 = vunpack.c.h.b16 %v2687
        %v2721 = vunpack.c.l.b16 %v2688
        %v2722 = vunpack.c.h.b16 %v2688
        %v2723 = vunpack.c.l.b16 %v2689
        %v2724 = vunpack.c.h.b16 %v2689
        %v2725 = vunpack.c.l.b16 %v2690
        %v2726 = vunpack.c.h.b16 %v2690
        %v2727 = vunpack.c.l.b16 %v2691
        %v2728 = vunpack.c.h.b16 %v2691
        %v2729 = vpack.c.b16 %v2715, %v2713
        %v2730 = vpack.c.b16 %v2716, %v2714
        %v2731 = vpack.c.b16 %v2719, %v2717
        %v2732 = vpack.c.b16 %v2720, %v2718
        %v2733 = vpack.c.b16 %v2723, %v2721
        %v2734 = vpack.c.b16 %v2724, %v2722
        %v2735 = vpack.c.b16 %v2727, %v2725
        %v2736 = vpack.c.b16 %v2728, %v2726
        %v2746 = vsel %vm737, %v2682, 0
        %2748 = vmatprep.subr.bf16.mxu0 %v2730
        %2749 = vmatpush1.bf16.msra.mxu0 %v2729
        %2750 = vmatprep.subr.bf16.mxu0 %v2732
        %2751 = vmatpush1.bf16.msra.mxu0 %v2731
        %2752 = vmatprep.subr.bf16.mxu0 %v2734
        %2753 = vmatpush1.bf16.msra.mxu0 %v2733
        %2754 = vmatprep.subr.bf16.mxu0 %v2736
        %2755 = vmatpush1.bf16.msra.mxu0 %v2735
        %2756 = vmatprep.subr.bf16.mxu0 0
        %2757 = vmatpush1.bf16.msra.mxu0 0
        %2758 = vmatprep.subr.bf16.mxu0 0
        %2759 = vmatpush1.bf16.msra.mxu0 0
        %2760 = vmatprep.subr.bf16.mxu0 0
        %2761 = vmatpush1.bf16.msra.mxu0 0
        %2762 = vmatprep.subr.bf16.mxu0 0
        %2763 = vmatpush1.bf16.msra.mxu0 0
        %2764 = vmatprep.subr.bf16.mxu0 0
        %2765 = vmatpush1.bf16.msra.mxu0 0
        %2766 = vmatprep.subr.bf16.mxu0 0
        %2767 = vmatpush1.bf16.msra.mxu0 0
        %2768 = vmatprep.subr.bf16.mxu0 0
        %2769 = vmatpush1.bf16.msra.mxu0 0
        %2770 = vmatprep.subr.bf16.mxu0 0
        %2771 = vmatpush1.bf16.msra.mxu0 0
        %2772 = vmatprep.subr.bf16.mxu0 0
        %2773 = vmatpush1.bf16.msra.mxu0 0
        %2774 = vmatprep.subr.bf16.mxu0 0
        %2775 = vmatpush1.bf16.msra.mxu0 0
        %2776 = vmatprep.subr.bf16.mxu0 0
        %2777 = vmatpush1.bf16.msra.mxu0 0
        %2778 = vmatprep.subr.bf16.mxu0 0
        %2779 = vmatpush1.bf16.msra.mxu0 0
        %2780 = vmatprep.mubr.bf16.mxu0 0
        %2781 = vmatmul.mubr.bf16.gmra.mrb[0].mxu0 %v2746
        %v2782 = vpop.f32.mrb[0].mxu0
        %v2783 = vadd.f32 %v2698, %v2782
        %v2784 = vpop.f32.mrb[0].mxu0
        %v2785 = vadd.f32 %v2702, %v2784
        %v2786 = vpop.f32.mrb[0].mxu0
        %v2787 = vpop.f32.mrb[0].mxu0
        %2788 = vdwg.mxu0
        %v2789 = vmax.f32 %v2783, 0.0
        %v2790 = vmax.f32 %v2785, 0.0
        %v2791 = vpack.c.bf16 %v2789, %v2789
        %v2792 = vpack.c.bf16 %v2790, %v2790
        %s2793 = scalar_lea.vmem %s13, 128
        %v2794 = vld [vmem:[%s2793] sm:$0xf]
        %v2795 = vld [vmem:[%s2793 + $0x4] sm:$0xf]
        %v2796 = vld [vmem:[%s2793 + $0x8] sm:$0xf]
        %v2797 = vld [vmem:[%s2793 + $0xc] sm:$0xf]
        %v2798 = vld [vmem:[%s2793 + $0x10] sm:$0xf]
        %v2799 = vld [vmem:[%s2793 + $0x14] sm:$0xf]
        %v2800 = vld [vmem:[%s2793 + $0x18] sm:$0xf]
        %v2801 = vld [vmem:[%s2793 + $0x1c] sm:$0xf]
        %v2802 = vld [vmem:[%s2793 + $0x20] sm:$0xf]
        %v2803 = vld [vmem:[%s2793 + $0x24] sm:$0xf]
        %v2804 = vld [vmem:[%s2793 + $0x28] sm:$0xf]
        %v2805 = vld [vmem:[%s2793 + $0x2c] sm:$0xf]
        %v2806 = vld [vmem:[%s2793 + $0x30] sm:$0xf]
        %v2807 = vld [vmem:[%s2793 + $0x34] sm:$0xf]
        %v2808 = vld [vmem:[%s2793 + $0x38] sm:$0xf]
        %v2809 = vld [vmem:[%s2793 + $0x3c] sm:$0xf]
        %v2810 = vld [vmem:[%s2793 + $0x40] sm:$0xf]
        %v2811 = vld [vmem:[%s2793 + $0x44] sm:$0xf]
        %v2812 = vld [vmem:[%s2793 + $0x48] sm:$0xf]
        %v2813 = vld [vmem:[%s2793 + $0x4c] sm:$0xf]
        %v2814 = vld [vmem:[%s2793 + $0x50] sm:$0xf]
        %v2815 = vld [vmem:[%s2793 + $0x54] sm:$0xf]
        %v2816 = vld [vmem:[%s2793 + $0x58] sm:$0xf]
        %v2817 = vld [vmem:[%s2793 + $0x5c] sm:$0xf]
        %v2818 = vld [vmem:[%s2793 + $0x60] sm:$0xf]
        %v2819 = vld [vmem:[%s2793 + $0x64] sm:$0xf]
        %v2820 = vld [vmem:[%s2793 + $0x68] sm:$0xf]
        %v2821 = vld [vmem:[%s2793 + $0x6c] sm:$0xf]
        %v2822 = vld [vmem:[%s2793 + $0x70] sm:$0xf]
        %v2823 = vld [vmem:[%s2793 + $0x74] sm:$0xf]
        %v2824 = vld [vmem:[%s2793 + $0x78] sm:$0xf]
        %v2825 = vld [vmem:[%s2793 + $0x7c] sm:$0xf]
        %s2826 = scalar_lea.vmem %s14, 1
        %v2827 = vld [vmem:[%s2826] sm:$0x1]
        %v2829 = vlaneseq
        %v2830 = vshrl.u32 %v2829, 7
        %v2831 = vsub.s32 0, %v2830
        %v2832 = vrot.slane %v2827, %v2831
        %v2866 = vunpack.c.l.b16 %v2794
        %v2867 = vunpack.c.l.b16 %v2795
        %v2868 = vunpack.c.l.b16 %v2796
        %v2869 = vunpack.c.l.b16 %v2797
        %v2870 = vunpack.c.l.b16 %v2798
        %v2871 = vunpack.c.l.b16 %v2799
        %v2872 = vunpack.c.l.b16 %v2800
        %v2873 = vunpack.c.l.b16 %v2801
        %v2874 = vunpack.c.l.b16 %v2802
        %v2875 = vunpack.c.l.b16 %v2803
        %v2876 = vunpack.c.l.b16 %v2804
        %v2877 = vunpack.c.l.b16 %v2805
        %v2878 = vunpack.c.l.b16 %v2806
        %v2879 = vunpack.c.l.b16 %v2807
        %v2880 = vunpack.c.l.b16 %v2808
        %v2881 = vunpack.c.l.b16 %v2809
        %v2882 = vunpack.c.l.b16 %v2810
        %v2883 = vunpack.c.l.b16 %v2811
        %v2884 = vunpack.c.l.b16 %v2812
        %v2885 = vunpack.c.l.b16 %v2813
        %v2886 = vunpack.c.l.b16 %v2814
        %v2887 = vunpack.c.l.b16 %v2815
        %v2888 = vunpack.c.l.b16 %v2816
        %v2889 = vunpack.c.l.b16 %v2817
        %v2890 = vunpack.c.l.b16 %v2818
        %v2891 = vunpack.c.l.b16 %v2819
        %v2892 = vunpack.c.l.b16 %v2820
        %v2893 = vunpack.c.l.b16 %v2821
        %v2894 = vunpack.c.l.b16 %v2822
        %v2895 = vunpack.c.l.b16 %v2823
        %v2896 = vunpack.c.l.b16 %v2824
        %v2897 = vunpack.c.l.b16 %v2825
        %v2898 = vpack.c.b16 %v2867, %v2866
        %v2899 = vpack.c.b16 %v2869, %v2868
        %v2900 = vpack.c.b16 %v2871, %v2870
        %v2901 = vpack.c.b16 %v2873, %v2872
        %v2902 = vpack.c.b16 %v2875, %v2874
        %v2903 = vpack.c.b16 %v2877, %v2876
        %v2904 = vpack.c.b16 %v2879, %v2878
        %v2905 = vpack.c.b16 %v2881, %v2880
        %v2906 = vpack.c.b16 %v2883, %v2882
        %v2907 = vpack.c.b16 %v2885, %v2884
        %v2908 = vpack.c.b16 %v2887, %v2886
        %v2909 = vpack.c.b16 %v2889, %v2888
        %v2910 = vpack.c.b16 %v2891, %v2890
        %v2911 = vpack.c.b16 %v2893, %v2892
        %v2912 = vpack.c.b16 %v2895, %v2894
        %v2913 = vpack.c.b16 %v2897, %v2896
        %2930 = vmatprep.subr.bf16.mxu0 0
        %2931 = vmatpush1.bf16.msra.mxu0 %v2898
        %2932 = vmatprep.subr.bf16.mxu0 0
        %2933 = vmatpush1.bf16.msra.mxu0 %v2899
        %2934 = vmatprep.subr.bf16.mxu0 0
        %2935 = vmatpush1.bf16.msra.mxu0 %v2900
        %2936 = vmatprep.subr.bf16.mxu0 0
        %2937 = vmatpush1.bf16.msra.mxu0 %v2901
        %2938 = vmatprep.subr.bf16.mxu0 0
        %2939 = vmatpush1.bf16.msra.mxu0 %v2902
        %2940 = vmatprep.subr.bf16.mxu0 0
        %2941 = vmatpush1.bf16.msra.mxu0 %v2903
        %2942 = vmatprep.subr.bf16.mxu0 0
        %2943 = vmatpush1.bf16.msra.mxu0 %v2904
        %2944 = vmatprep.subr.bf16.mxu0 0
        %2945 = vmatpush1.bf16.msra.mxu0 %v2905
        %2946 = vmatprep.subr.bf16.mxu0 0
        %2947 = vmatpush1.bf16.msra.mxu0 %v2906
        %2948 = vmatprep.subr.bf16.mxu0 0
        %2949 = vmatpush1.bf16.msra.mxu0 %v2907
        %2950 = vmatprep.subr.bf16.mxu0 0
        %2951 = vmatpush1.bf16.msra.mxu0 %v2908
        %2952 = vmatprep.subr.bf16.mxu0 0
        %2953 = vmatpush1.bf16.msra.mxu0 %v2909
        %2954 = vmatprep.subr.bf16.mxu0 0
        %2955 = vmatpush1.bf16.msra.mxu0 %v2910
        %2956 = vmatprep.subr.bf16.mxu0 0
        %2957 = vmatpush1.bf16.msra.mxu0 %v2911
        %2958 = vmatprep.subr.bf16.mxu0 0
        %2959 = vmatpush1.bf16.msra.mxu0 %v2912
        %2960 = vmatprep.subr.bf16.mxu0 0
        %2961 = vmatpush1.bf16.msra.mxu0 %v2913
        %2962 = vmatprep.mubr.bf16.mxu0 %v2792
        %2963 = vmatmul.mubr.bf16.gmra.mrb[0].mxu0 %v2791
        %v2964 = vpop.f32.mrb[0].mxu0
        %v2965 = vadd.f32 %v2832, %v2964
        %v2966 = vpop.f32.mrb[0].mxu0
        %v2967 = vpop.f32.mrb[0].mxu0
        %v2968 = vpop.f32.mrb[0].mxu0
        %2969 = vdwg.mxu0
        %v2970 = vadd.f32 %v2681, %v2965
        %s2971 = scalar_lea.vmem %s17, 1
        %v2972 = vld [vmem:[%s2971] sm:$0x1]
        %s2973 = scalar_lea.vmem %s18, 1
        %v2974 = vld [vmem:[%s2973] sm:$0x1]
        %v2975 = vsel %vm737, %v2970, 0.0
        %2976 = vadd.xlane.f32.xlu0 %v2975
        %v2977 = vpop.xlane.xlu0 %2976
        %v2978 = vmul.f32 %v2977, %v1558
        %v2979 = vsub.f32 %v2970, %v2978
        %v2980 = vmul.f32 %v2979, %v2979
        %v2981 = vsel %vm737, %v2980, 0.0
        %2982 = vadd.xlane.f32.xlu0 %v2981
        %v2983 = vpop.xlane.xlu0 %2982
        %v2984 = vmul.f32 %v2983, %v1558
        %v2985 = vadd.f32 %v2984, 1e-05
        %v2986 = vrsqrt.pop %v2985
        %v2987 = vmul.f32 %v2979, %v2986
        %v2989 = vlaneseq
        %v2990 = vshrl.u32 %v2989, 7
        %v2991 = vsub.s32 0, %v2990
        %v2992 = vrot.slane %v2972, %v2991
        %v2994 = vmul.f32 %v2987, %v2992
        %v2996 = vlaneseq
        %v2997 = vshrl.u32 %v2996, 7
        %v2998 = vsub.s32 0, %v2997
        %v2999 = vrot.slane %v2974, %v2998
        %v3001 = vadd.f32 %v2994, %v2999
        %v3002 = vsel %vm737, %v3001, 0.0
        %v3003 = vrot.slane %v3002, 4
        %v3004 = vadd.f32 %v3002, %v3003
        %v3005 = vrot.slane %v3004, 2
        %v3006 = vadd.f32 %v3004, %v3005
        %v3007 = vrot.slane %v3006, 1
        %v3008 = vadd.f32 %v3006, %v3007
        %v3009 = vrcp.pop 8.0
        %v3010 = vmul.f32 %v3008, %v3009
        %v3011 = vpack.c.bf16 %v3010, %v3010
        %v3012 = vld [vmem:[%s19] sm:$0xf]
        %v3013 = vld [vmem:[%s19 + $0x4] sm:$0xf]
        %v3014 = vld [vmem:[%s19 + $0x8] sm:$0xf]
        %v3015 = vld [vmem:[%s19 + $0xc] sm:$0xf]
        %v3016 = vld [vmem:[%s19 + $0x10] sm:$0xf]
        %v3017 = vld [vmem:[%s19 + $0x14] sm:$0xf]
        %v3018 = vld [vmem:[%s19 + $0x18] sm:$0xf]
        %v3019 = vld [vmem:[%s19 + $0x1c] sm:$0xf]
        %v3020 = vld [vmem:[%s20] sm:$0x1]
        %v3029 = vunpack.c.l.b16 %v3012
        %v3030 = vunpack.c.l.b16 %v3013
        %v3031 = vunpack.c.l.b16 %v3014
        %v3032 = vunpack.c.l.b16 %v3015
        %v3033 = vunpack.c.l.b16 %v3016
        %v3034 = vunpack.c.l.b16 %v3017
        %v3035 = vunpack.c.l.b16 %v3018
        %v3036 = vunpack.c.l.b16 %v3019
        %v3037 = vpack.c.b16 %v3030, %v3029
        %v3038 = vpack.c.b16 %v3032, %v3031
        %v3039 = vpack.c.b16 %v3034, %v3033
        %v3040 = vpack.c.b16 %v3036, %v3035
        %v3046 = vsel %vm737, %v3011, 0
        %3048 = vmatprep.subr.bf16.mxu0 0
        %3049 = vmatpush1.bf16.msra.mxu0 %v3037
        %3050 = vmatprep.subr.bf16.mxu0 0
        %3051 = vmatpush1.bf16.msra.mxu0 %v3038
        %3052 = vmatprep.subr.bf16.mxu0 0
        %3053 = vmatpush1.bf16.msra.mxu0 %v3039
        %3054 = vmatprep.subr.bf16.mxu0 0
        %3055 = vmatpush1.bf16.msra.mxu0 %v3040
        %3056 = vmatprep.subr.bf16.mxu0 0
        %3057 = vmatpush1.bf16.msra.mxu0 0
        %3058 = vmatprep.subr.bf16.mxu0 0
        %3059 = vmatpush1.bf16.msra.mxu0 0
        %3060 = vmatprep.subr.bf16.mxu0 0
        %3061 = vmatpush1.bf16.msra.mxu0 0
        %3062 = vmatprep.subr.bf16.mxu0 0
        %3063 = vmatpush1.bf16.msra.mxu0 0
        %3064 = vmatprep.subr.bf16.mxu0 0
        %3065 = vmatpush1.bf16.msra.mxu0 0
        %3066 = vmatprep.subr.bf16.mxu0 0
        %3067 = vmatpush1.bf16.msra.mxu0 0
        %3068 = vmatprep.subr.bf16.mxu0 0
        %3069 = vmatpush1.bf16.msra.mxu0 0
        %3070 = vmatprep.subr.bf16.mxu0 0
        %3071 = vmatpush1.bf16.msra.mxu0 0
        %3072 = vmatprep.subr.bf16.mxu0 0
        %3073 = vmatpush1.bf16.msra.mxu0 0
        %3074 = vmatprep.subr.bf16.mxu0 0
        %3075 = vmatpush1.bf16.msra.mxu0 0
        %3076 = vmatprep.subr.bf16.mxu0 0
        %3077 = vmatpush1.bf16.msra.mxu0 0
        %3078 = vmatprep.subr.bf16.mxu0 0
        %3079 = vmatpush1.bf16.msra.mxu0 0
        %3080 = vmatprep.mubr.bf16.mxu0 0
        %3081 = vmatmul.mubr.bf16.gmra.mrb[0].mxu0 %v3046
        %v3082 = vpop.f32.mrb[0].mxu0
        %v3083 = vadd.f32 %v3020, %v3082
        %v3084 = vpop.f32.mrb[0].mxu0
        %v3085 = vpop.f32.mrb[0].mxu0
        %v3086 = vpop.f32.mrb[0].mxu0
        %3087 = vdwg.mxu0
        %3088 = vst [vmem:[%s688] sm:$0x1] %v3083
        %s3089 = sand.u32 %s491, 1
        %s3090 = scalar_lea.sflag [#allocation4], %s3089
        %s3091 = sand.u32 %s491, 1
        %s3092 = scalar_lea.vmem [#allocation8], %s3091
        // Predicated region
        $region117: #{tpu_custom_call.1} parent=103 // pred_check
          %p3093 = pneg %p501
        $region118: #{tpu_custom_call.1} parent=103 // pred_check_branch
          %3095 = sbr.rel (%p3093) target = $region120
        $region119: #{tpu_custom_call.1} parent=103 // pred_region
          %s3097 = ssub.s32 16, 16
          %3098 = vsyncadd %s3090, %s3097
          %s3099 = smul.addr %s37, 16
          %s3100 = scalar_lea.hbm %s21, %s3099
          %s3102 = sshll.u32 %s3092, 4
          %s3103 = int_to_ptr.vmem [resolvable:$true] %s3102
          %3105 = dma.vmem_to_hbm [thread:$0]  %s3103, 16, %s3100, %s3090
        $region120: #{tpu_custom_call.1} parent=103 // pred_fallthru
          _
      $region104: #{tpu_custom_call.1} parent=5 // pred_fallthru
        _
      %p3106 = scmp.le.s32.totalorder 2, %s32
      // Predicated region
      $region121: #{tpu_custom_call.1} parent=5 // pred_check
        %p3107 = pneg %p3106
      $region122: #{tpu_custom_call.1} parent=5 // pred_check_branch
        %3109 = sbr.rel (%p3107) target = $region124
      $region123: #{tpu_custom_call.1} parent=5 // pred_region
        %s3110 = ssub.s32 %s32, 2
        // Predicated region
        $region125: #{tpu_custom_call.1} parent=123 // pred_check
          %p3111 = pneg %p507
        $region126: #{tpu_custom_call.1} parent=123 // pred_check_branch
          %3113 = sbr.rel (%p3111) target = $region128
        $region127: #{tpu_custom_call.1} parent=123 // pred_region
          %s3114 = sand.u32 %s492, 1
          %s3115 = scalar_lea.sflag [#allocation4], %s3114
          %s3116 = sand.u32 %s492, 1
          %s3117 = scalar_lea.vmem [#allocation8], %s3116
          %3118 = dma.done %s3115, 16
        $region128: #{tpu_custom_call.1} parent=123 // pred_fallthru
          _
      $region124: #{tpu_custom_call.1} parent=5 // pred_fallthru
        _
    $region6: #{tpu_custom_call.1} parent=1 // loop_footer
      %s36 = sadd.s32 1, %s32
    $region7: #{tpu_custom_call.1} parent=1 // loop_footer_branch
      %31 = sbr.rel target = $region3
    $region8: #{tpu_custom_call.1} parent=1 // loop_exit
      _
    %3119 = vsyncpa [#allocation3], 1
    %s3120 = scalar_lea.sflag [#allocation3], 1
    %3121 = vsyncpa %s3120, 1
    %3122 = vsyncpa [#allocation6], 1
    %3123 = vsyncpa [#allocation4], 1
    %s3124 = scalar_lea.sflag [#allocation4], 1
    %3125 = vsyncpa %s3124, 1

</llo_original>
